<compile_context>
chip_gen: v6e
topology: v6e:2x2x1
jax: 0.10.0
libtpu: 0.0.40
codegen_flags: <defaults>
</compile_context>

<pallas_src>
import jax
import jax.numpy as jnp
from jax.experimental import pallas as pl
from jax.experimental.pallas import tpu as pltpu

# ----------------------------------------------------------------------------
# Config (mirrors TransformerBlockLM defaults, with sa_head_size == embed_size
# so the six sequential residual blocks compose).
# ----------------------------------------------------------------------------
BATCH = 4            # batch_size
SEQ = 8              # input_length
EMBED = 16           # embed_size
SA_HEAD = 16         # sa_head_size (== embed_size; required for residual)
N_HEADS = 4          # sa_multihead_count
HEAD_DIM = SA_HEAD // N_HEADS
N_LAYERS = 6         # six TransformerBlocks in nn.Sequential
VOCAB = 32           # synthetic vocab size
BT = BATCH * SEQ     # flattened (batch, time) rows = 32
LOGIT_LANES = 128    # lane-dense padded vocab width

assert SA_HEAD == EMBED, "stacked blocks only compose if sa_head_size == embed_size"

NEG_INF = jnp.float32(-1e30)


# ----------------------------------------------------------------------------
# Pallas kernel: 6 transformer blocks + vocab projection.
# Every matmul is 2-D; all heads of a layer share one score/softmax slab.
# ----------------------------------------------------------------------------
def transformer_lm_kernel(x_ref, mask_ref, wa_ref, wv_ref, head_ind_ref,
                          rep_ref, wvocab_ref, bvocab_ref, logits_ref,
                          xblk_ref, vstack_ref):
    x = x_ref[...]                  # [BT, E]      flat (batch, time) activations
    mask = mask_ref[...]            # [BT, H*BT]   additive causal + batch-block mask
    head_ind = head_ind_ref[...]    # [H*BT, H]    per-head key-column indicator
    rep = rep_ref[...]              # [H, SA_HEAD] head -> 4-wide column broadcast

    # Zero the block-structured scratches once; per-layer stores only ever
    # touch the (block-)diagonal positions, so the zeros persist across layers.
    xblk_ref[...] = jnp.zeros_like(xblk_ref)        # [H*BT, H*E] = [128, 64]
    vstack_ref[...] = jnp.zeros_like(vstack_ref)    # [H*BT, SA_HEAD] = [128, 16]

    for layer in range(N_LAYERS):                   # static unroll (6)
        # Fused Q.K^T bilinear projection: xa[:, h*E:(h+1)*E] = x @ A_h
        xa = jnp.dot(x, wa_ref[layer],
                     preferred_element_type=jnp.float32)               # [32, 64]

        # Block-diagonal x replica: rows h*BT:(h+1)*BT, cols h*E:(h+1)*E get x.
        for h in range(N_HEADS):
            xblk_ref[h * BT:(h + 1) * BT, h * EMBED:(h + 1) * EMBED] = x

        # All heads' scores in ONE MXU op: s[i, h*BT+j] = (x_i A_h) . x_j
        s = jnp.einsum('ke,le->kl', xa, xblk_ref[...],
                       preferred_element_type=jnp.float32)             # [32, 128]
        s = s + mask                                 # future / cross-batch -> -1e30
        s = s - jnp.max(s, axis=-1, keepdims=True)   # one shared per-row stabilizer
        p = jnp.exp(s)                               # unnormalized probs   [32, 128]

        # Dense value projection for all heads: v_all[:, h*D:(h+1)*D] = x @ Wv_h
        v_all = jnp.dot(x, wv_ref[layer],
                        preferred_element_type=jnp.float32)            # [32, 16]
        # V-stack: rows h*BT:(h+1)*BT carry head h's values in its own 4 columns
        # (rep[h] zeros the other heads' columns -> the PV matmul does the concat).
        for h in range(N_HEADS):
            vstack_ref[h * BT:(h + 1) * BT, :] = v_all * rep[h:h + 1, :]

        # One PV matmul = per-head attention + head concat.   [32,128]x[128,16]
        pv = jnp.dot(p, vstack_ref[...], preferred_element_type=jnp.float32)

        # Per-head softmax denominators; exact reciprocal (per review).
        den = jnp.dot(p, head_ind, preferred_element_type=jnp.float32)  # [32, 4]
        scale16 = jnp.dot(1.0 / den, rep,
                          preferred_element_type=jnp.float32)           # [32, 16]

        x = x + pv * scale16                          # residual add

    # Lane-dense vocab head (unmasked 128-lane store).
    logits = jnp.dot(x, wvocab_ref[...], preferred_element_type=jnp.float32)
    logits_ref[...] = logits + bvocab_ref[...]        # (1, 128) bias broadcast


# ----------------------------------------------------------------------------
# Wrapper helpers: mask, weight packing, pallas_call, CE loss.
# ----------------------------------------------------------------------------
def make_causal_block_mask():
    """Additive [BT, BT] mask: 0 where key is in the same batch element and at
    a position <= the query, -1e30 elsewhere (blocks future & cross-batch)."""
    idx = jnp.arange(BT)
    same_batch = (idx[:, None] // SEQ) == (idx[None, :] // SEQ)
    causal = idx[None, :] <= idx[:, None]
    return jnp.where(same_batch & causal, jnp.float32(0.0), NEG_INF)


def pack_params(params):
    """Precompute the fused kernel operands from raw per-head weights."""
    scale = jnp.float32(HEAD_DIM) ** -0.5
    wq, wk, wv = params['wq'], params['wk'], params['wv']

    # Per-head bilinear score matrices A_h = scale * Wq_h Wk_h^T, stacked along
    # columns -> wa[L, E, H*E].
    a = jnp.einsum('lhed,lhfd->lhef', wq, wk) * scale            # [L, H, E, E]
    wa = jnp.transpose(a, (0, 2, 1, 3)).reshape(N_LAYERS, EMBED, N_HEADS * EMBED)

    # Dense V weights, heads stacked along columns -> [L, E, H*D].
    wv_all = jnp.transpose(wv, (0, 2, 1, 3)).reshape(
        N_LAYERS, EMBED, N_HEADS * HEAD_DIM)

    # Additive mask tiled per head -> [BT, H*BT] = [32, 128].
    mask = jnp.tile(make_causal_block_mask(), (1, N_HEADS))

    # Per-head key-column indicator [H*BT, H] and head->column broadcast [H, 16].
    head_ind = (jnp.arange(N_HEADS * BT)[:, None] // BT
                == jnp.arange(N_HEADS)[None, :]).astype(jnp.float32)
    rep = (jnp.arange(SA_HEAD)[None, :] // HEAD_DIM
           == jnp.arange(N_HEADS)[:, None]).astype(jnp.float32)

    # Lane-dense (128-wide) vocab head.
    w_vocab_pad = jnp.zeros((EMBED, LOGIT_LANES), jnp.float32
                            ).at[:, :VOCAB].set(params['w_vocab'])
    b_vocab_pad = jnp.zeros((1, LOGIT_LANES), jnp.float32
                            ).at[:, :VOCAB].set(params['b_vocab'])

    return {
        'tok_emb': params['tok_emb'],
        'wa': wa, 'wv_all': wv_all, 'mask': mask,
        'head_ind': head_ind, 'rep': rep,
        'w_vocab_pad': w_vocab_pad, 'b_vocab_pad': b_vocab_pad,
    }


def transformer_lm_forward(token_ids, packed, target=None):
    """Mirrors TransformerBlockLM.forward: returns (logits, ce_loss)."""
    # Glue: nn.Embedding lookup (gather) done in plain JAX; flatten (B, T).
    # TODO(synk): the embedding gather and the CE loss stay outside the kernel.
    emb = jnp.take(packed['tok_emb'], token_ids[:, -SEQ:], axis=0)   # [B, T, E]
    x0 = emb.reshape(BT, EMBED)

    kernel = pl.pallas_call(
        transformer_lm_kernel,
        out_shape=jax.ShapeDtypeStruct((BT, LOGIT_LANES), jnp.float32),
        in_specs=[pl.BlockSpec(memory_space=pltpu.MemorySpace.VMEM)] * 8,
        out_specs=pl.BlockSpec(memory_space=pltpu.MemorySpace.VMEM),
        scratch_shapes=[
            pltpu.VMEM((N_HEADS * BT, N_HEADS * EMBED), jnp.float32),  # x block-diag
            pltpu.VMEM((N_HEADS * BT, SA_HEAD), jnp.float32),          # V stack
        ],
    )
    logits_pad = kernel(x0, packed['mask'], packed['wa'], packed['wv_all'],
                        packed['head_ind'], packed['rep'],
                        packed['w_vocab_pad'], packed['b_vocab_pad'])
    logits2d = logits_pad[:, :VOCAB]
    logits = logits2d.reshape(BATCH, SEQ, VOCAB)

    if target is None:
        ce_loss = None
    else:
        flat_tgt = target.reshape(BT)
        logp = jax.nn.log_softmax(logits2d, axis=-1)
        ce_loss = -jnp.mean(jnp.take_along_axis(logp, flat_tgt[:, None], axis=-1))
    return logits, ce_loss


# ----------------------------------------------------------------------------
# Pure-JAX reference (uses the raw, un-fused parameters).
# ----------------------------------------------------------------------------
def reference_forward(token_ids, params):
    x = jnp.take(params['tok_emb'], token_ids[:, -SEQ:], axis=0)
    t = x.shape[1]
    causal = jnp.tril(jnp.ones((t, t), dtype=bool))
    scale = jnp.float32(HEAD_DIM) ** -0.5
    for layer in range(N_LAYERS):
        outs = []
        for h in range(N_HEADS):
            q = x @ params['wq'][layer, h]
            k = x @ params['wk'][layer, h]
            v = x @ params['wv'][layer, h]
            s = jnp.einsum('bqh,bkh->bqk', q, k) * scale
            s = jnp.where(causal[None], s, -jnp.inf)
            p = jax.nn.softmax(s, axis=-1)
            outs.append(jnp.einsum('bqk,bkh->bqh', p, v))
        x = x + jnp.concatenate(outs, axis=-1)
    return jnp.einsum('bte,ev->btv', x, params['w_vocab']) + params['b_vocab']


# ----------------------------------------------------------------------------
# Deterministic parameter initialization (synthetic, no checkpoint).
# Q/K/V std kept small so scores stay O(1) across 6 residual layers.
# ----------------------------------------------------------------------------
def init_params(key):
    ks = jax.random.split(key, 6)
    return {
        'tok_emb': jax.random.normal(ks[0], (VOCAB, EMBED), jnp.float32),
        'wq': 0.15 * jax.random.normal(ks[1], (N_LAYERS, N_HEADS, EMBED, HEAD_DIM),
                                       jnp.float32),
        'wk': 0.15 * jax.random.normal(ks[2], (N_LAYERS, N_HEADS, EMBED, HEAD_DIM),
                                       jnp.float32),
        'wv': 0.15 * jax.random.normal(ks[3], (N_LAYERS, N_HEADS, EMBED, HEAD_DIM),
                                       jnp.float32),
        'w_vocab': 0.3 * jax.random.normal(ks[4], (EMBED, VOCAB), jnp.float32),
        'b_vocab': 0.1 * jax.random.normal(ks[5], (1, VOCAB), jnp.float32),
    }


if __name__ == "__main__":
    key = jax.random.PRNGKey(0)
    pkey, dkey, tkey = jax.random.split(key, 3)

    params = init_params(pkey)
    packed = pack_params(params)
    token_ids = jax.random.randint(dkey, (BATCH, SEQ), 0, VOCAB, dtype=jnp.int32)
    targets = jax.random.randint(tkey, (BATCH, SEQ), 0, VOCAB, dtype=jnp.int32)

    logits, ce_loss = transformer_lm_forward(token_ids, packed, target=targets)
    logits = jax.block_until_ready(logits)
    ce_loss = jax.block_until_ready(ce_loss)

    ref_logits = reference_forward(token_ids, params)
    assert logits.shape == (BATCH, SEQ, VOCAB)
    # Exact softmax reciprocal + O(1) scores -> only f32 association noise;
    # 5e-3 is a wide margin for that while catching any real algorithmic bug.
    max_err = jnp.max(jnp.abs(logits - ref_logits))
    assert jnp.allclose(logits, ref_logits, rtol=5e-3, atol=5e-3), \
        f"Pallas kernel output does not match JAX reference (max abs err {max_err})"
    assert jnp.isfinite(ce_loss)

    print("KERNEL_OK")
</pallas_src>

<mosaic_0001>
module attributes {stable_mosaic.version = 11 : i64} {
  func.func @transformer_lm_kernel(%arg0: memref<32x16xf32, #tpu.memory_space<vmem>>, %arg1: memref<32x128xf32, #tpu.memory_space<vmem>>, %arg2: memref<6x16x64xf32, #tpu.memory_space<vmem>>, %arg3: memref<6x16x16xf32, #tpu.memory_space<vmem>>, %arg4: memref<128x4xf32, #tpu.memory_space<vmem>>, %arg5: memref<4x16xf32, #tpu.memory_space<vmem>>, %arg6: memref<16x128xf32, #tpu.memory_space<vmem>>, %arg7: memref<1x128xf32, #tpu.memory_space<vmem>>, %arg8: memref<32x128xf32, #tpu.memory_space<vmem>>, %arg9: memref<128x64xf32, #tpu.memory_space<vmem>>, %arg10: memref<128x16xf32, #tpu.memory_space<vmem>>) attributes {dimension_semantics = [], scalar_prefetch = 0 : i64, scratch_operands = 2 : i64, tpu.core_type = #tpu.core_type<tc>} {
    %c0 = arith.constant 0 : index
    %c0_0 = arith.constant 0 : index
    %0 = vector.load %arg0[%c0, %c0_0] : memref<32x16xf32, #tpu.memory_space<vmem>>, vector<32x16xf32>
    %c0_1 = arith.constant 0 : index
    %c0_2 = arith.constant 0 : index
    %1 = vector.load %arg1[%c0_1, %c0_2] : memref<32x128xf32, #tpu.memory_space<vmem>>, vector<32x128xf32>
    %c0_3 = arith.constant 0 : index
    %c0_4 = arith.constant 0 : index
    %2 = vector.load %arg4[%c0_3, %c0_4] : memref<128x4xf32, #tpu.memory_space<vmem>>, vector<128x4xf32>
    %c0_5 = arith.constant 0 : index
    %c0_6 = arith.constant 0 : index
    %3 = vector.load %arg5[%c0_5, %c0_6] : memref<4x16xf32, #tpu.memory_space<vmem>>, vector<4x16xf32>
    %cst = arith.constant 0.000000e+00 : f32
    %4 = vector.broadcast %cst : f32 to vector<128x64xf32>
    %c0_7 = arith.constant 0 : index
    %c0_8 = arith.constant 0 : index
    %5 = vector.load %arg9[%c0_7, %c0_8] : memref<128x64xf32, #tpu.memory_space<vmem>>, vector<128x64xf32>
    tpu.vector_store %arg9[%c0_7, %c0_8], %4 {strides = array<i32>} : memref<128x64xf32, #tpu.memory_space<vmem>>, vector<128x64xf32>,
    %cst_9 = arith.constant 0.000000e+00 : f32
    %6 = vector.broadcast %cst_9 : f32 to vector<128x16xf32>
    %c0_10 = arith.constant 0 : index
    %c0_11 = arith.constant 0 : index
    %7 = vector.load %arg10[%c0_10, %c0_11] : memref<128x16xf32, #tpu.memory_space<vmem>>, vector<128x16xf32>
    tpu.vector_store %arg10[%c0_10, %c0_11], %6 {strides = array<i32>} : memref<128x16xf32, #tpu.memory_space<vmem>>, vector<128x16xf32>,
    %c0_12 = arith.constant 0 : index
    %c0_13 = arith.constant 0 : index
    %c0_14 = arith.constant 0 : index
    %8 = vector.load %arg2[%c0_12, %c0_13, %c0_14] : memref<6x16x64xf32, #tpu.memory_space<vmem>>, vector<1x16x64xf32>
    %9 = vector.shape_cast %8 : vector<1x16x64xf32> to vector<16x64xf32>
    %cst_15 = arith.constant dense<0.000000e+00> : vector<32x64xf32>
    %10 = tpu.matmul %0, %9, %cst_15 {dimension_numbers = #tpu.dot_dimension_numbers<[1], [0], [0], [1], [0, 0, 1, 1], [], []>} : vector<32x16xf32>, vector<16x64xf32>, vector<32x64xf32> -> vector<32x64xf32>
    %c0_16 = arith.constant 0 : index
    %c0_17 = arith.constant 0 : index
    %11 = vector.load %arg9[%c0_16, %c0_17] : memref<128x64xf32, #tpu.memory_space<vmem>>, vector<32x16xf32>
    tpu.vector_store %arg9[%c0_16, %c0_17], %0 {strides = array<i32>} : memref<128x64xf32, #tpu.memory_space<vmem>>, vector<32x16xf32>,
    %c32 = arith.constant 32 : index
    %c16 = arith.constant 16 : index
    %12 = vector.load %arg9[%c32, %c16] : memref<128x64xf32, #tpu.memory_space<vmem>>, vector<32x16xf32>
    tpu.vector_store %arg9[%c32, %c16], %0 {strides = array<i32>} : memref<128x64xf32, #tpu.memory_space<vmem>>, vector<32x16xf32>,
    %c64 = arith.constant 64 : index
    %c32_18 = arith.constant 32 : index
    %13 = vector.load %arg9[%c64, %c32_18] : memref<128x64xf32, #tpu.memory_space<vmem>>, vector<32x16xf32>
    tpu.vector_store %arg9[%c64, %c32_18], %0 {strides = array<i32>} : memref<128x64xf32, #tpu.memory_space<vmem>>, vector<32x16xf32>,
    %c96 = arith.constant 96 : index
    %c48 = arith.constant 48 : index
    %14 = vector.load %arg9[%c96, %c48] : memref<128x64xf32, #tpu.memory_space<vmem>>, vector<32x16xf32>
    tpu.vector_store %arg9[%c96, %c48], %0 {strides = array<i32>} : memref<128x64xf32, #tpu.memory_space<vmem>>, vector<32x16xf32>,
    %c0_19 = arith.constant 0 : index
    %c0_20 = arith.constant 0 : index
    %15 = vector.load %arg9[%c0_19, %c0_20] : memref<128x64xf32, #tpu.memory_space<vmem>>, vector<128x64xf32>
    "tpu.trace_start"() <{level = 10 : i32, message = "ke,le->kl"}> : () -> ()
    %cst_21 = arith.constant dense<0.000000e+00> : vector<32x128xf32>
    %16 = tpu.matmul %10, %15, %cst_21 {dimension_numbers = #tpu.dot_dimension_numbers<[1], [1], [0], [0], [0, 0, 1, 0], [], []>} : vector<32x64xf32>, vector<128x64xf32>, vector<32x128xf32> -> vector<32x128xf32>
    "tpu.trace_stop"() : () -> ()
    %17 = arith.addf %16, %1 : vector<32x128xf32>
    %cst_22 = arith.constant dense<0xFF800000> : vector<32xf32>
    %18 = vector.multi_reduction <maximumf>, %17, %cst_22 [1] : vector<32x128xf32> to vector<32xf32>
    %19 = vector.shape_cast %18 : vector<32xf32> to vector<32x1xf32>
    %20 = vector.broadcast %19 : vector<32x1xf32> to vector<32x128xf32>
    %21 = arith.subf %17, %20 : vector<32x128xf32>
    %22 = math.exp %21 : vector<32x128xf32>
    %c0_23 = arith.constant 0 : index
    %c0_24 = arith.constant 0 : index
    %c0_25 = arith.constant 0 : index
    %23 = vector.load %arg3[%c0_23, %c0_24, %c0_25] : memref<6x16x16xf32, #tpu.memory_space<vmem>>, vector<1x16x16xf32>
    %24 = vector.shape_cast %23 : vector<1x16x16xf32> to vector<16x16xf32>
    %cst_26 = arith.constant dense<0.000000e+00> : vector<32x16xf32>
    %25 = tpu.matmul %0, %24, %cst_26 {dimension_numbers = #tpu.dot_dimension_numbers<[1], [0], [0], [1], [0, 0, 1, 1], [], []>} : vector<32x16xf32>, vector<16x16xf32>, vector<32x16xf32> -> vector<32x16xf32>
    %26 = vector.extract_strided_slice %3 {offsets = [0, 0], sizes = [1, 16], strides = [1, 1]} : vector<4x16xf32> to vector<1x16xf32>
    %27 = vector.broadcast %26 : vector<1x16xf32> to vector<32x16xf32>
    %28 = arith.mulf %25, %27 : vector<32x16xf32>
    %c0_27 = arith.constant 0 : index
    %c0_28 = arith.constant 0 : index
    %29 = vector.load %arg10[%c0_27, %c0_28] : memref<128x16xf32, #tpu.memory_space<vmem>>, vector<32x16xf32>
    tpu.vector_store %arg10[%c0_27, %c0_28], %28 {strides = array<i32>} : memref<128x16xf32, #tpu.memory_space<vmem>>, vector<32x16xf32>,
    %30 = vector.extract_strided_slice %3 {offsets = [1, 0], sizes = [1, 16], strides = [1, 1]} : vector<4x16xf32> to vector<1x16xf32>
    %31 = vector.broadcast %30 : vector<1x16xf32> to vector<32x16xf32>
    %32 = arith.mulf %25, %31 : vector<32x16xf32>
    %c32_29 = arith.constant 32 : index
    %c0_30 = arith.constant 0 : index
    %33 = vector.load %arg10[%c32_29, %c0_30] : memref<128x16xf32, #tpu.memory_space<vmem>>, vector<32x16xf32>
    tpu.vector_store %arg10[%c32_29, %c0_30], %32 {strides = array<i32>} : memref<128x16xf32, #tpu.memory_space<vmem>>, vector<32x16xf32>,
    %34 = vector.extract_strided_slice %3 {offsets = [2, 0], sizes = [1, 16], strides = [1, 1]} : vector<4x16xf32> to vector<1x16xf32>
    %35 = vector.broadcast %34 : vector<1x16xf32> to vector<32x16xf32>
    %36 = arith.mulf %25, %35 : vector<32x16xf32>
    %c64_31 = arith.constant 64 : index
    %c0_32 = arith.constant 0 : index
    %37 = vector.load %arg10[%c64_31, %c0_32] : memref<128x16xf32, #tpu.memory_space<vmem>>, vector<32x16xf32>
    tpu.vector_store %arg10[%c64_31, %c0_32], %36 {strides = array<i32>} : memref<128x16xf32, #tpu.memory_space<vmem>>, vector<32x16xf32>,
    %38 = vector.extract_strided_slice %3 {offsets = [3, 0], sizes = [1, 16], strides = [1, 1]} : vector<4x16xf32> to vector<1x16xf32>
    %39 = vector.broadcast %38 : vector<1x16xf32> to vector<32x16xf32>
    %40 = arith.mulf %25, %39 : vector<32x16xf32>
    %c96_33 = arith.constant 96 : index
    %c0_34 = arith.constant 0 : index
    %41 = vector.load %arg10[%c96_33, %c0_34] : memref<128x16xf32, #tpu.memory_space<vmem>>, vector<32x16xf32>
    tpu.vector_store %arg10[%c96_33, %c0_34], %40 {strides = array<i32>} : memref<128x16xf32, #tpu.memory_space<vmem>>, vector<32x16xf32>,
    %c0_35 = arith.constant 0 : index
    %c0_36 = arith.constant 0 : index
    %42 = vector.load %arg10[%c0_35, %c0_36] : memref<128x16xf32, #tpu.memory_space<vmem>>, vector<128x16xf32>
    %cst_37 = arith.constant dense<0.000000e+00> : vector<32x16xf32>
    %43 = tpu.matmul %22, %42, %cst_37 {dimension_numbers = #tpu.dot_dimension_numbers<[1], [0], [0], [1], [0, 0, 1, 1], [], []>} : vector<32x128xf32>, vector<128x16xf32>, vector<32x16xf32> -> vector<32x16xf32>
    %cst_38 = arith.constant dense<0.000000e+00> : vector<32x4xf32>
    %44 = tpu.matmul %22, %2, %cst_38 {dimension_numbers = #tpu.dot_dimension_numbers<[1], [0], [0], [1], [0, 0, 1, 1], [], []>} : vector<32x128xf32>, vector<128x4xf32>, vector<32x4xf32> -> vector<32x4xf32>
    %cst_39 = arith.constant 1.000000e+00 : f32
    %45 = vector.broadcast %cst_39 : f32 to vector<32x4xf32>
    %46 = arith.divf %45, %44 : vector<32x4xf32>
    %cst_40 = arith.constant dense<0.000000e+00> : vector<32x16xf32>
    %47 = tpu.matmul %46, %3, %cst_40 {dimension_numbers = #tpu.dot_dimension_numbers<[1], [0], [0], [1], [0, 0, 1, 1], [], []>} : vector<32x4xf32>, vector<4x16xf32>, vector<32x16xf32> -> vector<32x16xf32>
    %48 = arith.mulf %43, %47 : vector<32x16xf32>
    %49 = arith.addf %0, %48 : vector<32x16xf32>
    %c1 = arith.constant 1 : index
    %c0_41 = arith.constant 0 : index
    %c0_42 = arith.constant 0 : index
    %50 = vector.load %arg2[%c1, %c0_41, %c0_42] : memref<6x16x64xf32, #tpu.memory_space<vmem>>, vector<1x16x64xf32>
    %51 = vector.shape_cast %50 : vector<1x16x64xf32> to vector<16x64xf32>
    %cst_43 = arith.constant dense<0.000000e+00> : vector<32x64xf32>
    %52 = tpu.matmul %49, %51, %cst_43 {dimension_numbers = #tpu.dot_dimension_numbers<[1], [0], [0], [1], [0, 0, 1, 1], [], []>} : vector<32x16xf32>, vector<16x64xf32>, vector<32x64xf32> -> vector<32x64xf32>
    %c0_44 = arith.constant 0 : index
    %c0_45 = arith.constant 0 : index
    %53 = vector.load %arg9[%c0_44, %c0_45] : memref<128x64xf32, #tpu.memory_space<vmem>>, vector<32x16xf32>
    tpu.vector_store %arg9[%c0_44, %c0_45], %49 {strides = array<i32>} : memref<128x64xf32, #tpu.memory_space<vmem>>, vector<32x16xf32>,
    %c32_46 = arith.constant 32 : index
    %c16_47 = arith.constant 16 : index
    %54 = vector.load %arg9[%c32_46, %c16_47] : memref<128x64xf32, #tpu.memory_space<vmem>>, vector<32x16xf32>
    tpu.vector_store %arg9[%c32_46, %c16_47], %49 {strides = array<i32>} : memref<128x64xf32, #tpu.memory_space<vmem>>, vector<32x16xf32>,
    %c64_48 = arith.constant 64 : index
    %c32_49 = arith.constant 32 : index
    %55 = vector.load %arg9[%c64_48, %c32_49] : memref<128x64xf32, #tpu.memory_space<vmem>>, vector<32x16xf32>
    tpu.vector_store %arg9[%c64_48, %c32_49], %49 {strides = array<i32>} : memref<128x64xf32, #tpu.memory_space<vmem>>, vector<32x16xf32>,
    %c96_50 = arith.constant 96 : index
    %c48_51 = arith.constant 48 : index
    %56 = vector.load %arg9[%c96_50, %c48_51] : memref<128x64xf32, #tpu.memory_space<vmem>>, vector<32x16xf32>
    tpu.vector_store %arg9[%c96_50, %c48_51], %49 {strides = array<i32>} : memref<128x64xf32, #tpu.memory_space<vmem>>, vector<32x16xf32>,
    %c0_52 = arith.constant 0 : index
    %c0_53 = arith.constant 0 : index
    %57 = vector.load %arg9[%c0_52, %c0_53] : memref<128x64xf32, #tpu.memory_space<vmem>>, vector<128x64xf32>
    "tpu.trace_start"() <{level = 10 : i32, message = "ke,le->kl"}> : () -> ()
    %cst_54 = arith.constant dense<0.000000e+00> : vector<32x128xf32>
    %58 = tpu.matmul %52, %57, %cst_54 {dimension_numbers = #tpu.dot_dimension_numbers<[1], [1], [0], [0], [0, 0, 1, 0], [], []>} : vector<32x64xf32>, vector<128x64xf32>, vector<32x128xf32> -> vector<32x128xf32>
    "tpu.trace_stop"() : () -> ()
    %59 = arith.addf %58, %1 : vector<32x128xf32>
    %cst_55 = arith.constant dense<0xFF800000> : vector<32xf32>
    %60 = vector.multi_reduction <maximumf>, %59, %cst_55 [1] : vector<32x128xf32> to vector<32xf32>
    %61 = vector.shape_cast %60 : vector<32xf32> to vector<32x1xf32>
    %62 = vector.broadcast %61 : vector<32x1xf32> to vector<32x128xf32>
    %63 = arith.subf %59, %62 : vector<32x128xf32>
    %64 = math.exp %63 : vector<32x128xf32>
    %c1_56 = arith.constant 1 : index
    %c0_57 = arith.constant 0 : index
    %c0_58 = arith.constant 0 : index
    %65 = vector.load %arg3[%c1_56, %c0_57, %c0_58] : memref<6x16x16xf32, #tpu.memory_space<vmem>>, vector<1x16x16xf32>
    %66 = vector.shape_cast %65 : vector<1x16x16xf32> to vector<16x16xf32>
    %cst_59 = arith.constant dense<0.000000e+00> : vector<32x16xf32>
    %67 = tpu.matmul %49, %66, %cst_59 {dimension_numbers = #tpu.dot_dimension_numbers<[1], [0], [0], [1], [0, 0, 1, 1], [], []>} : vector<32x16xf32>, vector<16x16xf32>, vector<32x16xf32> -> vector<32x16xf32>
    %68 = vector.extract_strided_slice %3 {offsets = [0, 0], sizes = [1, 16], strides = [1, 1]} : vector<4x16xf32> to vector<1x16xf32>
    %69 = vector.broadcast %68 : vector<1x16xf32> to vector<32x16xf32>
    %70 = arith.mulf %67, %69 : vector<32x16xf32>
    %c0_60 = arith.constant 0 : index
    %c0_61 = arith.constant 0 : index
    %71 = vector.load %arg10[%c0_60, %c0_61] : memref<128x16xf32, #tpu.memory_space<vmem>>, vector<32x16xf32>
    tpu.vector_store %arg10[%c0_60, %c0_61], %70 {strides = array<i32>} : memref<128x16xf32, #tpu.memory_space<vmem>>, vector<32x16xf32>,
    %72 = vector.extract_strided_slice %3 {offsets = [1, 0], sizes = [1, 16], strides = [1, 1]} : vector<4x16xf32> to vector<1x16xf32>
    %73 = vector.broadcast %72 : vector<1x16xf32> to vector<32x16xf32>
    %74 = arith.mulf %67, %73 : vector<32x16xf32>
    %c32_62 = arith.constant 32 : index
    %c0_63 = arith.constant 0 : index
    %75 = vector.load %arg10[%c32_62, %c0_63] : memref<128x16xf32, #tpu.memory_space<vmem>>, vector<32x16xf32>
    tpu.vector_store %arg10[%c32_62, %c0_63], %74 {strides = array<i32>} : memref<128x16xf32, #tpu.memory_space<vmem>>, vector<32x16xf32>,
    %76 = vector.extract_strided_slice %3 {offsets = [2, 0], sizes = [1, 16], strides = [1, 1]} : vector<4x16xf32> to vector<1x16xf32>
    %77 = vector.broadcast %76 : vector<1x16xf32> to vector<32x16xf32>
    %78 = arith.mulf %67, %77 : vector<32x16xf32>
    %c64_64 = arith.constant 64 : index
    %c0_65 = arith.constant 0 : index
    %79 = vector.load %arg10[%c64_64, %c0_65] : memref<128x16xf32, #tpu.memory_space<vmem>>, vector<32x16xf32>
    tpu.vector_store %arg10[%c64_64, %c0_65], %78 {strides = array<i32>} : memref<128x16xf32, #tpu.memory_space<vmem>>, vector<32x16xf32>,
    %80 = vector.extract_strided_slice %3 {offsets = [3, 0], sizes = [1, 16], strides = [1, 1]} : vector<4x16xf32> to vector<1x16xf32>
    %81 = vector.broadcast %80 : vector<1x16xf32> to vector<32x16xf32>
    %82 = arith.mulf %67, %81 : vector<32x16xf32>
    %c96_66 = arith.constant 96 : index
    %c0_67 = arith.constant 0 : index
    %83 = vector.load %arg10[%c96_66, %c0_67] : memref<128x16xf32, #tpu.memory_space<vmem>>, vector<32x16xf32>
    tpu.vector_store %arg10[%c96_66, %c0_67], %82 {strides = array<i32>} : memref<128x16xf32, #tpu.memory_space<vmem>>, vector<32x16xf32>,
    %c0_68 = arith.constant 0 : index
    %c0_69 = arith.constant 0 : index
    %84 = vector.load %arg10[%c0_68, %c0_69] : memref<128x16xf32, #tpu.memory_space<vmem>>, vector<128x16xf32>
    %cst_70 = arith.constant dense<0.000000e+00> : vector<32x16xf32>
    %85 = tpu.matmul %64, %84, %cst_70 {dimension_numbers = #tpu.dot_dimension_numbers<[1], [0], [0], [1], [0, 0, 1, 1], [], []>} : vector<32x128xf32>, vector<128x16xf32>, vector<32x16xf32> -> vector<32x16xf32>
    %cst_71 = arith.constant dense<0.000000e+00> : vector<32x4xf32>
    %86 = tpu.matmul %64, %2, %cst_71 {dimension_numbers = #tpu.dot_dimension_numbers<[1], [0], [0], [1], [0, 0, 1, 1], [], []>} : vector<32x128xf32>, vector<128x4xf32>, vector<32x4xf32> -> vector<32x4xf32>
    %cst_72 = arith.constant 1.000000e+00 : f32
    %87 = vector.broadcast %cst_72 : f32 to vector<32x4xf32>
    %88 = arith.divf %87, %86 : vector<32x4xf32>
    %cst_73 = arith.constant dense<0.000000e+00> : vector<32x16xf32>
    %89 = tpu.matmul %88, %3, %cst_73 {dimension_numbers = #tpu.dot_dimension_numbers<[1], [0], [0], [1], [0, 0, 1, 1], [], []>} : vector<32x4xf32>, vector<4x16xf32>, vector<32x16xf32> -> vector<32x16xf32>
    %90 = arith.mulf %85, %89 : vector<32x16xf32>
    %91 = arith.addf %49, %90 : vector<32x16xf32>
    %c2 = arith.constant 2 : index
    %c0_74 = arith.constant 0 : index
    %c0_75 = arith.constant 0 : index
    %92 = vector.load %arg2[%c2, %c0_74, %c0_75] : memref<6x16x64xf32, #tpu.memory_space<vmem>>, vector<1x16x64xf32>
    %93 = vector.shape_cast %92 : vector<1x16x64xf32> to vector<16x64xf32>
    %cst_76 = arith.constant dense<0.000000e+00> : vector<32x64xf32>
    %94 = tpu.matmul %91, %93, %cst_76 {dimension_numbers = #tpu.dot_dimension_numbers<[1], [0], [0], [1], [0, 0, 1, 1], [], []>} : vector<32x16xf32>, vector<16x64xf32>, vector<32x64xf32> -> vector<32x64xf32>
    %c0_77 = arith.constant 0 : index
    %c0_78 = arith.constant 0 : index
    %95 = vector.load %arg9[%c0_77, %c0_78] : memref<128x64xf32, #tpu.memory_space<vmem>>, vector<32x16xf32>
    tpu.vector_store %arg9[%c0_77, %c0_78], %91 {strides = array<i32>} : memref<128x64xf32, #tpu.memory_space<vmem>>, vector<32x16xf32>,
    %c32_79 = arith.constant 32 : index
    %c16_80 = arith.constant 16 : index
    %96 = vector.load %arg9[%c32_79, %c16_80] : memref<128x64xf32, #tpu.memory_space<vmem>>, vector<32x16xf32>
    tpu.vector_store %arg9[%c32_79, %c16_80], %91 {strides = array<i32>} : memref<128x64xf32, #tpu.memory_space<vmem>>, vector<32x16xf32>,
    %c64_81 = arith.constant 64 : index
    %c32_82 = arith.constant 32 : index
    %97 = vector.load %arg9[%c64_81, %c32_82] : memref<128x64xf32, #tpu.memory_space<vmem>>, vector<32x16xf32>
    tpu.vector_store %arg9[%c64_81, %c32_82], %91 {strides = array<i32>} : memref<128x64xf32, #tpu.memory_space<vmem>>, vector<32x16xf32>,
    %c96_83 = arith.constant 96 : index
    %c48_84 = arith.constant 48 : index
    %98 = vector.load %arg9[%c96_83, %c48_84] : memref<128x64xf32, #tpu.memory_space<vmem>>, vector<32x16xf32>
    tpu.vector_store %arg9[%c96_83, %c48_84], %91 {strides = array<i32>} : memref<128x64xf32, #tpu.memory_space<vmem>>, vector<32x16xf32>,
    %c0_85 = arith.constant 0 : index
    %c0_86 = arith.constant 0 : index
    %99 = vector.load %arg9[%c0_85, %c0_86] : memref<128x64xf32, #tpu.memory_space<vmem>>, vector<128x64xf32>
    "tpu.trace_start"() <{level = 10 : i32, message = "ke,le->kl"}> : () -> ()
    %cst_87 = arith.constant dense<0.000000e+00> : vector<32x128xf32>
    %100 = tpu.matmul %94, %99, %cst_87 {dimension_numbers = #tpu.dot_dimension_numbers<[1], [1], [0], [0], [0, 0, 1, 0], [], []>} : vector<32x64xf32>, vector<128x64xf32>, vector<32x128xf32> -> vector<32x128xf32>
    "tpu.trace_stop"() : () -> ()
    %101 = arith.addf %100, %1 : vector<32x128xf32>
    %cst_88 = arith.constant dense<0xFF800000> : vector<32xf32>
    %102 = vector.multi_reduction <maximumf>, %101, %cst_88 [1] : vector<32x128xf32> to vector<32xf32>
    %103 = vector.shape_cast %102 : vector<32xf32> to vector<32x1xf32>
    %104 = vector.broadcast %103 : vector<32x1xf32> to vector<32x128xf32>
    %105 = arith.subf %101, %104 : vector<32x128xf32>
    %106 = math.exp %105 : vector<32x128xf32>
    %c2_89 = arith.constant 2 : index
    %c0_90 = arith.constant 0 : index
    %c0_91 = arith.constant 0 : index
    %107 = vector.load %arg3[%c2_89, %c0_90, %c0_91] : memref<6x16x16xf32, #tpu.memory_space<vmem>>, vector<1x16x16xf32>
    %108 = vector.shape_cast %107 : vector<1x16x16xf32> to vector<16x16xf32>
    %cst_92 = arith.constant dense<0.000000e+00> : vector<32x16xf32>
    %109 = tpu.matmul %91, %108, %cst_92 {dimension_numbers = #tpu.dot_dimension_numbers<[1], [0], [0], [1], [0, 0, 1, 1], [], []>} : vector<32x16xf32>, vector<16x16xf32>, vector<32x16xf32> -> vector<32x16xf32>
    %110 = vector.extract_strided_slice %3 {offsets = [0, 0], sizes = [1, 16], strides = [1, 1]} : vector<4x16xf32> to vector<1x16xf32>
    %111 = vector.broadcast %110 : vector<1x16xf32> to vector<32x16xf32>
    %112 = arith.mulf %109, %111 : vector<32x16xf32>
    %c0_93 = arith.constant 0 : index
    %c0_94 = arith.constant 0 : index
    %113 = vector.load %arg10[%c0_93, %c0_94] : memref<128x16xf32, #tpu.memory_space<vmem>>, vector<32x16xf32>
    tpu.vector_store %arg10[%c0_93, %c0_94], %112 {strides = array<i32>} : memref<128x16xf32, #tpu.memory_space<vmem>>, vector<32x16xf32>,
    %114 = vector.extract_strided_slice %3 {offsets = [1, 0], sizes = [1, 16], strides = [1, 1]} : vector<4x16xf32> to vector<1x16xf32>
    %115 = vector.broadcast %114 : vector<1x16xf32> to vector<32x16xf32>
    %116 = arith.mulf %109, %115 : vector<32x16xf32>
    %c32_95 = arith.constant 32 : index
    %c0_96 = arith.constant 0 : index
    %117 = vector.load %arg10[%c32_95, %c0_96] : memref<128x16xf32, #tpu.memory_space<vmem>>, vector<32x16xf32>
    tpu.vector_store %arg10[%c32_95, %c0_96], %116 {strides = array<i32>} : memref<128x16xf32, #tpu.memory_space<vmem>>, vector<32x16xf32>,
    %118 = vector.extract_strided_slice %3 {offsets = [2, 0], sizes = [1, 16], strides = [1, 1]} : vector<4x16xf32> to vector<1x16xf32>
    %119 = vector.broadcast %118 : vector<1x16xf32> to vector<32x16xf32>
    %120 = arith.mulf %109, %119 : vector<32x16xf32>
    %c64_97 = arith.constant 64 : index
    %c0_98 = arith.constant 0 : index
    %121 = vector.load %arg10[%c64_97, %c0_98] : memref<128x16xf32, #tpu.memory_space<vmem>>, vector<32x16xf32>
    tpu.vector_store %arg10[%c64_97, %c0_98], %120 {strides = array<i32>} : memref<128x16xf32, #tpu.memory_space<vmem>>, vector<32x16xf32>,
    %122 = vector.extract_strided_slice %3 {offsets = [3, 0], sizes = [1, 16], strides = [1, 1]} : vector<4x16xf32> to vector<1x16xf32>
    %123 = vector.broadcast %122 : vector<1x16xf32> to vector<32x16xf32>
    %124 = arith.mulf %109, %123 : vector<32x16xf32>
    %c96_99 = arith.constant 96 : index
    %c0_100 = arith.constant 0 : index
    %125 = vector.load %arg10[%c96_99, %c0_100] : memref<128x16xf32, #tpu.memory_space<vmem>>, vector<32x16xf32>
    tpu.vector_store %arg10[%c96_99, %c0_100], %124 {strides = array<i32>} : memref<128x16xf32, #tpu.memory_space<vmem>>, vector<32x16xf32>,
    %c0_101 = arith.constant 0 : index
    %c0_102 = arith.constant 0 : index
    %126 = vector.load %arg10[%c0_101, %c0_102] : memref<128x16xf32, #tpu.memory_space<vmem>>, vector<128x16xf32>
    %cst_103 = arith.constant dense<0.000000e+00> : vector<32x16xf32>
    %127 = tpu.matmul %106, %126, %cst_103 {dimension_numbers = #tpu.dot_dimension_numbers<[1], [0], [0], [1], [0, 0, 1, 1], [], []>} : vector<32x128xf32>, vector<128x16xf32>, vector<32x16xf32> -> vector<32x16xf32>
    %cst_104 = arith.constant dense<0.000000e+00> : vector<32x4xf32>
    %128 = tpu.matmul %106, %2, %cst_104 {dimension_numbers = #tpu.dot_dimension_numbers<[1], [0], [0], [1], [0, 0, 1, 1], [], []>} : vector<32x128xf32>, vector<128x4xf32>, vector<32x4xf32> -> vector<32x4xf32>
    %cst_105 = arith.constant 1.000000e+00 : f32
    %129 = vector.broadcast %cst_105 : f32 to vector<32x4xf32>
    %130 = arith.divf %129, %128 : vector<32x4xf32>
    %cst_106 = arith.constant dense<0.000000e+00> : vector<32x16xf32>
    %131 = tpu.matmul %130, %3, %cst_106 {dimension_numbers = #tpu.dot_dimension_numbers<[1], [0], [0], [1], [0, 0, 1, 1], [], []>} : vector<32x4xf32>, vector<4x16xf32>, vector<32x16xf32> -> vector<32x16xf32>
    %132 = arith.mulf %127, %131 : vector<32x16xf32>
    %133 = arith.addf %91, %132 : vector<32x16xf32>
    %c3 = arith.constant 3 : index
    %c0_107 = arith.constant 0 : index
    %c0_108 = arith.constant 0 : index
    %134 = vector.load %arg2[%c3, %c0_107, %c0_108] : memref<6x16x64xf32, #tpu.memory_space<vmem>>, vector<1x16x64xf32>
    %135 = vector.shape_cast %134 : vector<1x16x64xf32> to vector<16x64xf32>
    %cst_109 = arith.constant dense<0.000000e+00> : vector<32x64xf32>
    %136 = tpu.matmul %133, %135, %cst_109 {dimension_numbers = #tpu.dot_dimension_numbers<[1], [0], [0], [1], [0, 0, 1, 1], [], []>} : vector<32x16xf32>, vector<16x64xf32>, vector<32x64xf32> -> vector<32x64xf32>
    %c0_110 = arith.constant 0 : index
    %c0_111 = arith.constant 0 : index
    %137 = vector.load %arg9[%c0_110, %c0_111] : memref<128x64xf32, #tpu.memory_space<vmem>>, vector<32x16xf32>
    tpu.vector_store %arg9[%c0_110, %c0_111], %133 {strides = array<i32>} : memref<128x64xf32, #tpu.memory_space<vmem>>, vector<32x16xf32>,
    %c32_112 = arith.constant 32 : index
    %c16_113 = arith.constant 16 : index
    %138 = vector.load %arg9[%c32_112, %c16_113] : memref<128x64xf32, #tpu.memory_space<vmem>>, vector<32x16xf32>
    tpu.vector_store %arg9[%c32_112, %c16_113], %133 {strides = array<i32>} : memref<128x64xf32, #tpu.memory_space<vmem>>, vector<32x16xf32>,
    %c64_114 = arith.constant 64 : index
    %c32_115 = arith.constant 32 : index
    %139 = vector.load %arg9[%c64_114, %c32_115] : memref<128x64xf32, #tpu.memory_space<vmem>>, vector<32x16xf32>
    tpu.vector_store %arg9[%c64_114, %c32_115], %133 {strides = array<i32>} : memref<128x64xf32, #tpu.memory_space<vmem>>, vector<32x16xf32>,
    %c96_116 = arith.constant 96 : index
    %c48_117 = arith.constant 48 : index
    %140 = vector.load %arg9[%c96_116, %c48_117] : memref<128x64xf32, #tpu.memory_space<vmem>>, vector<32x16xf32>
    tpu.vector_store %arg9[%c96_116, %c48_117], %133 {strides = array<i32>} : memref<128x64xf32, #tpu.memory_space<vmem>>, vector<32x16xf32>,
    %c0_118 = arith.constant 0 : index
    %c0_119 = arith.constant 0 : index
    %141 = vector.load %arg9[%c0_118, %c0_119] : memref<128x64xf32, #tpu.memory_space<vmem>>, vector<128x64xf32>
    "tpu.trace_start"() <{level = 10 : i32, message = "ke,le->kl"}> : () -> ()
    %cst_120 = arith.constant dense<0.000000e+00> : vector<32x128xf32>
    %142 = tpu.matmul %136, %141, %cst_120 {dimension_numbers = #tpu.dot_dimension_numbers<[1], [1], [0], [0], [0, 0, 1, 0], [], []>} : vector<32x64xf32>, vector<128x64xf32>, vector<32x128xf32> -> vector<32x128xf32>
    "tpu.trace_stop"() : () -> ()
    %143 = arith.addf %142, %1 : vector<32x128xf32>
    %cst_121 = arith.constant dense<0xFF800000> : vector<32xf32>
    %144 = vector.multi_reduction <maximumf>, %143, %cst_121 [1] : vector<32x128xf32> to vector<32xf32>
    %145 = vector.shape_cast %144 : vector<32xf32> to vector<32x1xf32>
    %146 = vector.broadcast %145 : vector<32x1xf32> to vector<32x128xf32>
    %147 = arith.subf %143, %146 : vector<32x128xf32>
    %148 = math.exp %147 : vector<32x128xf32>
    %c3_122 = arith.constant 3 : index
    %c0_123 = arith.constant 0 : index
    %c0_124 = arith.constant 0 : index
    %149 = vector.load %arg3[%c3_122, %c0_123, %c0_124] : memref<6x16x16xf32, #tpu.memory_space<vmem>>, vector<1x16x16xf32>
    %150 = vector.shape_cast %149 : vector<1x16x16xf32> to vector<16x16xf32>
    %cst_125 = arith.constant dense<0.000000e+00> : vector<32x16xf32>
    %151 = tpu.matmul %133, %150, %cst_125 {dimension_numbers = #tpu.dot_dimension_numbers<[1], [0], [0], [1], [0, 0, 1, 1], [], []>} : vector<32x16xf32>, vector<16x16xf32>, vector<32x16xf32> -> vector<32x16xf32>
    %152 = vector.extract_strided_slice %3 {offsets = [0, 0], sizes = [1, 16], strides = [1, 1]} : vector<4x16xf32> to vector<1x16xf32>
    %153 = vector.broadcast %152 : vector<1x16xf32> to vector<32x16xf32>
    %154 = arith.mulf %151, %153 : vector<32x16xf32>
    %c0_126 = arith.constant 0 : index
    %c0_127 = arith.constant 0 : index
    %155 = vector.load %arg10[%c0_126, %c0_127] : memref<128x16xf32, #tpu.memory_space<vmem>>, vector<32x16xf32>
    tpu.vector_store %arg10[%c0_126, %c0_127], %154 {strides = array<i32>} : memref<128x16xf32, #tpu.memory_space<vmem>>, vector<32x16xf32>,
    %156 = vector.extract_strided_slice %3 {offsets = [1, 0], sizes = [1, 16], strides = [1, 1]} : vector<4x16xf32> to vector<1x16xf32>
    %157 = vector.broadcast %156 : vector<1x16xf32> to vector<32x16xf32>
    %158 = arith.mulf %151, %157 : vector<32x16xf32>
    %c32_128 = arith.constant 32 : index
    %c0_129 = arith.constant 0 : index
    %159 = vector.load %arg10[%c32_128, %c0_129] : memref<128x16xf32, #tpu.memory_space<vmem>>, vector<32x16xf32>
    tpu.vector_store %arg10[%c32_128, %c0_129], %158 {strides = array<i32>} : memref<128x16xf32, #tpu.memory_space<vmem>>, vector<32x16xf32>,
    %160 = vector.extract_strided_slice %3 {offsets = [2, 0], sizes = [1, 16], strides = [1, 1]} : vector<4x16xf32> to vector<1x16xf32>
    %161 = vector.broadcast %160 : vector<1x16xf32> to vector<32x16xf32>
    %162 = arith.mulf %151, %161 : vector<32x16xf32>
    %c64_130 = arith.constant 64 : index
    %c0_131 = arith.constant 0 : index
    %163 = vector.load %arg10[%c64_130, %c0_131] : memref<128x16xf32, #tpu.memory_space<vmem>>, vector<32x16xf32>
    tpu.vector_store %arg10[%c64_130, %c0_131], %162 {strides = array<i32>} : memref<128x16xf32, #tpu.memory_space<vmem>>, vector<32x16xf32>,
    %164 = vector.extract_strided_slice %3 {offsets = [3, 0], sizes = [1, 16], strides = [1, 1]} : vector<4x16xf32> to vector<1x16xf32>
    %165 = vector.broadcast %164 : vector<1x16xf32> to vector<32x16xf32>
    %166 = arith.mulf %151, %165 : vector<32x16xf32>
    %c96_132 = arith.constant 96 : index
    %c0_133 = arith.constant 0 : index
    %167 = vector.load %arg10[%c96_132, %c0_133] : memref<128x16xf32, #tpu.memory_space<vmem>>, vector<32x16xf32>
    tpu.vector_store %arg10[%c96_132, %c0_133], %166 {strides = array<i32>} : memref<128x16xf32, #tpu.memory_space<vmem>>, vector<32x16xf32>,
    %c0_134 = arith.constant 0 : index
    %c0_135 = arith.constant 0 : index
    %168 = vector.load %arg10[%c0_134, %c0_135] : memref<128x16xf32, #tpu.memory_space<vmem>>, vector<128x16xf32>
    %cst_136 = arith.constant dense<0.000000e+00> : vector<32x16xf32>
    %169 = tpu.matmul %148, %168, %cst_136 {dimension_numbers = #tpu.dot_dimension_numbers<[1], [0], [0], [1], [0, 0, 1, 1], [], []>} : vector<32x128xf32>, vector<128x16xf32>, vector<32x16xf32> -> vector<32x16xf32>
    %cst_137 = arith.constant dense<0.000000e+00> : vector<32x4xf32>
    %170 = tpu.matmul %148, %2, %cst_137 {dimension_numbers = #tpu.dot_dimension_numbers<[1], [0], [0], [1], [0, 0, 1, 1], [], []>} : vector<32x128xf32>, vector<128x4xf32>, vector<32x4xf32> -> vector<32x4xf32>
    %cst_138 = arith.constant 1.000000e+00 : f32
    %171 = vector.broadcast %cst_138 : f32 to vector<32x4xf32>
    %172 = arith.divf %171, %170 : vector<32x4xf32>
    %cst_139 = arith.constant dense<0.000000e+00> : vector<32x16xf32>
    %173 = tpu.matmul %172, %3, %cst_139 {dimension_numbers = #tpu.dot_dimension_numbers<[1], [0], [0], [1], [0, 0, 1, 1], [], []>} : vector<32x4xf32>, vector<4x16xf32>, vector<32x16xf32> -> vector<32x16xf32>
    %174 = arith.mulf %169, %173 : vector<32x16xf32>
    %175 = arith.addf %133, %174 : vector<32x16xf32>
    %c4 = arith.constant 4 : index
    %c0_140 = arith.constant 0 : index
    %c0_141 = arith.constant 0 : index
    %176 = vector.load %arg2[%c4, %c0_140, %c0_141] : memref<6x16x64xf32, #tpu.memory_space<vmem>>, vector<1x16x64xf32>
    %177 = vector.shape_cast %176 : vector<1x16x64xf32> to vector<16x64xf32>
    %cst_142 = arith.constant dense<0.000000e+00> : vector<32x64xf32>
    %178 = tpu.matmul %175, %177, %cst_142 {dimension_numbers = #tpu.dot_dimension_numbers<[1], [0], [0], [1], [0, 0, 1, 1], [], []>} : vector<32x16xf32>, vector<16x64xf32>, vector<32x64xf32> -> vector<32x64xf32>
    %c0_143 = arith.constant 0 : index
    %c0_144 = arith.constant 0 : index
    %179 = vector.load %arg9[%c0_143, %c0_144] : memref<128x64xf32, #tpu.memory_space<vmem>>, vector<32x16xf32>
    tpu.vector_store %arg9[%c0_143, %c0_144], %175 {strides = array<i32>} : memref<128x64xf32, #tpu.memory_space<vmem>>, vector<32x16xf32>,
    %c32_145 = arith.constant 32 : index
    %c16_146 = arith.constant 16 : index
    %180 = vector.load %arg9[%c32_145, %c16_146] : memref<128x64xf32, #tpu.memory_space<vmem>>, vector<32x16xf32>
    tpu.vector_store %arg9[%c32_145, %c16_146], %175 {strides = array<i32>} : memref<128x64xf32, #tpu.memory_space<vmem>>, vector<32x16xf32>,
    %c64_147 = arith.constant 64 : index
    %c32_148 = arith.constant 32 : index
    %181 = vector.load %arg9[%c64_147, %c32_148] : memref<128x64xf32, #tpu.memory_space<vmem>>, vector<32x16xf32>
    tpu.vector_store %arg9[%c64_147, %c32_148], %175 {strides = array<i32>} : memref<128x64xf32, #tpu.memory_space<vmem>>, vector<32x16xf32>,
    %c96_149 = arith.constant 96 : index
    %c48_150 = arith.constant 48 : index
    %182 = vector.load %arg9[%c96_149, %c48_150] : memref<128x64xf32, #tpu.memory_space<vmem>>, vector<32x16xf32>
    tpu.vector_store %arg9[%c96_149, %c48_150], %175 {strides = array<i32>} : memref<128x64xf32, #tpu.memory_space<vmem>>, vector<32x16xf32>,
    %c0_151 = arith.constant 0 : index
    %c0_152 = arith.constant 0 : index
    %183 = vector.load %arg9[%c0_151, %c0_152] : memref<128x64xf32, #tpu.memory_space<vmem>>, vector<128x64xf32>
    "tpu.trace_start"() <{level = 10 : i32, message = "ke,le->kl"}> : () -> ()
    %cst_153 = arith.constant dense<0.000000e+00> : vector<32x128xf32>
    %184 = tpu.matmul %178, %183, %cst_153 {dimension_numbers = #tpu.dot_dimension_numbers<[1], [1], [0], [0], [0, 0, 1, 0], [], []>} : vector<32x64xf32>, vector<128x64xf32>, vector<32x128xf32> -> vector<32x128xf32>
    "tpu.trace_stop"() : () -> ()
    %185 = arith.addf %184, %1 : vector<32x128xf32>
    %cst_154 = arith.constant dense<0xFF800000> : vector<32xf32>
    %186 = vector.multi_reduction <maximumf>, %185, %cst_154 [1] : vector<32x128xf32> to vector<32xf32>
    %187 = vector.shape_cast %186 : vector<32xf32> to vector<32x1xf32>
    %188 = vector.broadcast %187 : vector<32x1xf32> to vector<32x128xf32>
    %189 = arith.subf %185, %188 : vector<32x128xf32>
    %190 = math.exp %189 : vector<32x128xf32>
    %c4_155 = arith.constant 4 : index
    %c0_156 = arith.constant 0 : index
    %c0_157 = arith.constant 0 : index
    %191 = vector.load %arg3[%c4_155, %c0_156, %c0_157] : memref<6x16x16xf32, #tpu.memory_space<vmem>>, vector<1x16x16xf32>
    %192 = vector.shape_cast %191 : vector<1x16x16xf32> to vector<16x16xf32>
    %cst_158 = arith.constant dense<0.000000e+00> : vector<32x16xf32>
    %193 = tpu.matmul %175, %192, %cst_158 {dimension_numbers = #tpu.dot_dimension_numbers<[1], [0], [0], [1], [0, 0, 1, 1], [], []>} : vector<32x16xf32>, vector<16x16xf32>, vector<32x16xf32> -> vector<32x16xf32>
    %194 = vector.extract_strided_slice %3 {offsets = [0, 0], sizes = [1, 16], strides = [1, 1]} : vector<4x16xf32> to vector<1x16xf32>
    %195 = vector.broadcast %194 : vector<1x16xf32> to vector<32x16xf32>
    %196 = arith.mulf %193, %195 : vector<32x16xf32>
    %c0_159 = arith.constant 0 : index
    %c0_160 = arith.constant 0 : index
    %197 = vector.load %arg10[%c0_159, %c0_160] : memref<128x16xf32, #tpu.memory_space<vmem>>, vector<32x16xf32>
    tpu.vector_store %arg10[%c0_159, %c0_160], %196 {strides = array<i32>} : memref<128x16xf32, #tpu.memory_space<vmem>>, vector<32x16xf32>,
    %198 = vector.extract_strided_slice %3 {offsets = [1, 0], sizes = [1, 16], strides = [1, 1]} : vector<4x16xf32> to vector<1x16xf32>
    %199 = vector.broadcast %198 : vector<1x16xf32> to vector<32x16xf32>
    %200 = arith.mulf %193, %199 : vector<32x16xf32>
    %c32_161 = arith.constant 32 : index
    %c0_162 = arith.constant 0 : index
    %201 = vector.load %arg10[%c32_161, %c0_162] : memref<128x16xf32, #tpu.memory_space<vmem>>, vector<32x16xf32>
    tpu.vector_store %arg10[%c32_161, %c0_162], %200 {strides = array<i32>} : memref<128x16xf32, #tpu.memory_space<vmem>>, vector<32x16xf32>,
    %202 = vector.extract_strided_slice %3 {offsets = [2, 0], sizes = [1, 16], strides = [1, 1]} : vector<4x16xf32> to vector<1x16xf32>
    %203 = vector.broadcast %202 : vector<1x16xf32> to vector<32x16xf32>
    %204 = arith.mulf %193, %203 : vector<32x16xf32>
    %c64_163 = arith.constant 64 : index
    %c0_164 = arith.constant 0 : index
    %205 = vector.load %arg10[%c64_163, %c0_164] : memref<128x16xf32, #tpu.memory_space<vmem>>, vector<32x16xf32>
    tpu.vector_store %arg10[%c64_163, %c0_164], %204 {strides = array<i32>} : memref<128x16xf32, #tpu.memory_space<vmem>>, vector<32x16xf32>,
    %206 = vector.extract_strided_slice %3 {offsets = [3, 0], sizes = [1, 16], strides = [1, 1]} : vector<4x16xf32> to vector<1x16xf32>
    %207 = vector.broadcast %206 : vector<1x16xf32> to vector<32x16xf32>
    %208 = arith.mulf %193, %207 : vector<32x16xf32>
    %c96_165 = arith.constant 96 : index
    %c0_166 = arith.constant 0 : index
    %209 = vector.load %arg10[%c96_165, %c0_166] : memref<128x16xf32, #tpu.memory_space<vmem>>, vector<32x16xf32>
    tpu.vector_store %arg10[%c96_165, %c0_166], %208 {strides = array<i32>} : memref<128x16xf32, #tpu.memory_space<vmem>>, vector<32x16xf32>,
    %c0_167 = arith.constant 0 : index
    %c0_168 = arith.constant 0 : index
    %210 = vector.load %arg10[%c0_167, %c0_168] : memref<128x16xf32, #tpu.memory_space<vmem>>, vector<128x16xf32>
    %cst_169 = arith.constant dense<0.000000e+00> : vector<32x16xf32>
    %211 = tpu.matmul %190, %210, %cst_169 {dimension_numbers = #tpu.dot_dimension_numbers<[1], [0], [0], [1], [0, 0, 1, 1], [], []>} : vector<32x128xf32>, vector<128x16xf32>, vector<32x16xf32> -> vector<32x16xf32>
    %cst_170 = arith.constant dense<0.000000e+00> : vector<32x4xf32>
    %212 = tpu.matmul %190, %2, %cst_170 {dimension_numbers = #tpu.dot_dimension_numbers<[1], [0], [0], [1], [0, 0, 1, 1], [], []>} : vector<32x128xf32>, vector<128x4xf32>, vector<32x4xf32> -> vector<32x4xf32>
    %cst_171 = arith.constant 1.000000e+00 : f32
    %213 = vector.broadcast %cst_171 : f32 to vector<32x4xf32>
    %214 = arith.divf %213, %212 : vector<32x4xf32>
    %cst_172 = arith.constant dense<0.000000e+00> : vector<32x16xf32>
    %215 = tpu.matmul %214, %3, %cst_172 {dimension_numbers = #tpu.dot_dimension_numbers<[1], [0], [0], [1], [0, 0, 1, 1], [], []>} : vector<32x4xf32>, vector<4x16xf32>, vector<32x16xf32> -> vector<32x16xf32>
    %216 = arith.mulf %211, %215 : vector<32x16xf32>
    %217 = arith.addf %175, %216 : vector<32x16xf32>
    %c5 = arith.constant 5 : index
    %c0_173 = arith.constant 0 : index
    %c0_174 = arith.constant 0 : index
    %218 = vector.load %arg2[%c5, %c0_173, %c0_174] : memref<6x16x64xf32, #tpu.memory_space<vmem>>, vector<1x16x64xf32>
    %219 = vector.shape_cast %218 : vector<1x16x64xf32> to vector<16x64xf32>
    %cst_175 = arith.constant dense<0.000000e+00> : vector<32x64xf32>
    %220 = tpu.matmul %217, %219, %cst_175 {dimension_numbers = #tpu.dot_dimension_numbers<[1], [0], [0], [1], [0, 0, 1, 1], [], []>} : vector<32x16xf32>, vector<16x64xf32>, vector<32x64xf32> -> vector<32x64xf32>
    %c0_176 = arith.constant 0 : index
    %c0_177 = arith.constant 0 : index
    %221 = vector.load %arg9[%c0_176, %c0_177] : memref<128x64xf32, #tpu.memory_space<vmem>>, vector<32x16xf32>
    tpu.vector_store %arg9[%c0_176, %c0_177], %217 {strides = array<i32>} : memref<128x64xf32, #tpu.memory_space<vmem>>, vector<32x16xf32>,
    %c32_178 = arith.constant 32 : index
    %c16_179 = arith.constant 16 : index
    %222 = vector.load %arg9[%c32_178, %c16_179] : memref<128x64xf32, #tpu.memory_space<vmem>>, vector<32x16xf32>
    tpu.vector_store %arg9[%c32_178, %c16_179], %217 {strides = array<i32>} : memref<128x64xf32, #tpu.memory_space<vmem>>, vector<32x16xf32>,
    %c64_180 = arith.constant 64 : index
    %c32_181 = arith.constant 32 : index
    %223 = vector.load %arg9[%c64_180, %c32_181] : memref<128x64xf32, #tpu.memory_space<vmem>>, vector<32x16xf32>
    tpu.vector_store %arg9[%c64_180, %c32_181], %217 {strides = array<i32>} : memref<128x64xf32, #tpu.memory_space<vmem>>, vector<32x16xf32>,
    %c96_182 = arith.constant 96 : index
    %c48_183 = arith.constant 48 : index
    %224 = vector.load %arg9[%c96_182, %c48_183] : memref<128x64xf32, #tpu.memory_space<vmem>>, vector<32x16xf32>
    tpu.vector_store %arg9[%c96_182, %c48_183], %217 {strides = array<i32>} : memref<128x64xf32, #tpu.memory_space<vmem>>, vector<32x16xf32>,
    %c0_184 = arith.constant 0 : index
    %c0_185 = arith.constant 0 : index
    %225 = vector.load %arg9[%c0_184, %c0_185] : memref<128x64xf32, #tpu.memory_space<vmem>>, vector<128x64xf32>
    "tpu.trace_start"() <{level = 10 : i32, message = "ke,le->kl"}> : () -> ()
    %cst_186 = arith.constant dense<0.000000e+00> : vector<32x128xf32>
    %226 = tpu.matmul %220, %225, %cst_186 {dimension_numbers = #tpu.dot_dimension_numbers<[1], [1], [0], [0], [0, 0, 1, 0], [], []>} : vector<32x64xf32>, vector<128x64xf32>, vector<32x128xf32> -> vector<32x128xf32>
    "tpu.trace_stop"() : () -> ()
    %227 = arith.addf %226, %1 : vector<32x128xf32>
    %cst_187 = arith.constant dense<0xFF800000> : vector<32xf32>
    %228 = vector.multi_reduction <maximumf>, %227, %cst_187 [1] : vector<32x128xf32> to vector<32xf32>
    %229 = vector.shape_cast %228 : vector<32xf32> to vector<32x1xf32>
    %230 = vector.broadcast %229 : vector<32x1xf32> to vector<32x128xf32>
    %231 = arith.subf %227, %230 : vector<32x128xf32>
    %232 = math.exp %231 : vector<32x128xf32>
    %c5_188 = arith.constant 5 : index
    %c0_189 = arith.constant 0 : index
    %c0_190 = arith.constant 0 : index
    %233 = vector.load %arg3[%c5_188, %c0_189, %c0_190] : memref<6x16x16xf32, #tpu.memory_space<vmem>>, vector<1x16x16xf32>
    %234 = vector.shape_cast %233 : vector<1x16x16xf32> to vector<16x16xf32>
    %cst_191 = arith.constant dense<0.000000e+00> : vector<32x16xf32>
    %235 = tpu.matmul %217, %234, %cst_191 {dimension_numbers = #tpu.dot_dimension_numbers<[1], [0], [0], [1], [0, 0, 1, 1], [], []>} : vector<32x16xf32>, vector<16x16xf32>, vector<32x16xf32> -> vector<32x16xf32>
    %236 = vector.extract_strided_slice %3 {offsets = [0, 0], sizes = [1, 16], strides = [1, 1]} : vector<4x16xf32> to vector<1x16xf32>
    %237 = vector.broadcast %236 : vector<1x16xf32> to vector<32x16xf32>
    %238 = arith.mulf %235, %237 : vector<32x16xf32>
    %c0_192 = arith.constant 0 : index
    %c0_193 = arith.constant 0 : index
    %239 = vector.load %arg10[%c0_192, %c0_193] : memref<128x16xf32, #tpu.memory_space<vmem>>, vector<32x16xf32>
    tpu.vector_store %arg10[%c0_192, %c0_193], %238 {strides = array<i32>} : memref<128x16xf32, #tpu.memory_space<vmem>>, vector<32x16xf32>,
    %240 = vector.extract_strided_slice %3 {offsets = [1, 0], sizes = [1, 16], strides = [1, 1]} : vector<4x16xf32> to vector<1x16xf32>
    %241 = vector.broadcast %240 : vector<1x16xf32> to vector<32x16xf32>
    %242 = arith.mulf %235, %241 : vector<32x16xf32>
    %c32_194 = arith.constant 32 : index
    %c0_195 = arith.constant 0 : index
    %243 = vector.load %arg10[%c32_194, %c0_195] : memref<128x16xf32, #tpu.memory_space<vmem>>, vector<32x16xf32>
    tpu.vector_store %arg10[%c32_194, %c0_195], %242 {strides = array<i32>} : memref<128x16xf32, #tpu.memory_space<vmem>>, vector<32x16xf32>,
    %244 = vector.extract_strided_slice %3 {offsets = [2, 0], sizes = [1, 16], strides = [1, 1]} : vector<4x16xf32> to vector<1x16xf32>
    %245 = vector.broadcast %244 : vector<1x16xf32> to vector<32x16xf32>
    %246 = arith.mulf %235, %245 : vector<32x16xf32>
    %c64_196 = arith.constant 64 : index
    %c0_197 = arith.constant 0 : index
    %247 = vector.load %arg10[%c64_196, %c0_197] : memref<128x16xf32, #tpu.memory_space<vmem>>, vector<32x16xf32>
    tpu.vector_store %arg10[%c64_196, %c0_197], %246 {strides = array<i32>} : memref<128x16xf32, #tpu.memory_space<vmem>>, vector<32x16xf32>,
    %248 = vector.extract_strided_slice %3 {offsets = [3, 0], sizes = [1, 16], strides = [1, 1]} : vector<4x16xf32> to vector<1x16xf32>
    %249 = vector.broadcast %248 : vector<1x16xf32> to vector<32x16xf32>
    %250 = arith.mulf %235, %249 : vector<32x16xf32>
    %c96_198 = arith.constant 96 : index
    %c0_199 = arith.constant 0 : index
    %251 = vector.load %arg10[%c96_198, %c0_199] : memref<128x16xf32, #tpu.memory_space<vmem>>, vector<32x16xf32>
    tpu.vector_store %arg10[%c96_198, %c0_199], %250 {strides = array<i32>} : memref<128x16xf32, #tpu.memory_space<vmem>>, vector<32x16xf32>,
    %c0_200 = arith.constant 0 : index
    %c0_201 = arith.constant 0 : index
    %252 = vector.load %arg10[%c0_200, %c0_201] : memref<128x16xf32, #tpu.memory_space<vmem>>, vector<128x16xf32>
    %cst_202 = arith.constant dense<0.000000e+00> : vector<32x16xf32>
    %253 = tpu.matmul %232, %252, %cst_202 {dimension_numbers = #tpu.dot_dimension_numbers<[1], [0], [0], [1], [0, 0, 1, 1], [], []>} : vector<32x128xf32>, vector<128x16xf32>, vector<32x16xf32> -> vector<32x16xf32>
    %cst_203 = arith.constant dense<0.000000e+00> : vector<32x4xf32>
    %254 = tpu.matmul %232, %2, %cst_203 {dimension_numbers = #tpu.dot_dimension_numbers<[1], [0], [0], [1], [0, 0, 1, 1], [], []>} : vector<32x128xf32>, vector<128x4xf32>, vector<32x4xf32> -> vector<32x4xf32>
    %cst_204 = arith.constant 1.000000e+00 : f32
    %255 = vector.broadcast %cst_204 : f32 to vector<32x4xf32>
    %256 = arith.divf %255, %254 : vector<32x4xf32>
    %cst_205 = arith.constant dense<0.000000e+00> : vector<32x16xf32>
    %257 = tpu.matmul %256, %3, %cst_205 {dimension_numbers = #tpu.dot_dimension_numbers<[1], [0], [0], [1], [0, 0, 1, 1], [], []>} : vector<32x4xf32>, vector<4x16xf32>, vector<32x16xf32> -> vector<32x16xf32>
    %258 = arith.mulf %253, %257 : vector<32x16xf32>
    %259 = arith.addf %217, %258 : vector<32x16xf32>
    %c0_206 = arith.constant 0 : index
    %c0_207 = arith.constant 0 : index
    %260 = vector.load %arg6[%c0_206, %c0_207] : memref<16x128xf32, #tpu.memory_space<vmem>>, vector<16x128xf32>
    %cst_208 = arith.constant dense<0.000000e+00> : vector<32x128xf32>
    %261 = tpu.matmul %259, %260, %cst_208 {dimension_numbers = #tpu.dot_dimension_numbers<[1], [0], [0], [1], [0, 0, 1, 1], [], []>} : vector<32x16xf32>, vector<16x128xf32>, vector<32x128xf32> -> vector<32x128xf32>
    %c0_209 = arith.constant 0 : index
    %c0_210 = arith.constant 0 : index
    %262 = vector.load %arg7[%c0_209, %c0_210] : memref<1x128xf32, #tpu.memory_space<vmem>>, vector<1x128xf32>
    %263 = vector.broadcast %262 : vector<1x128xf32> to vector<32x128xf32>
    %264 = arith.addf %261, %263 : vector<32x128xf32>
    %c0_211 = arith.constant 0 : index
    %c0_212 = arith.constant 0 : index
    %265 = vector.load %arg8[%c0_211, %c0_212] : memref<32x128xf32, #tpu.memory_space<vmem>>, vector<32x128xf32>
    tpu.vector_store %arg8[%c0_211, %c0_212], %264 {strides = array<i32>} : memref<32x128xf32, #tpu.memory_space<vmem>>, vector<32x128xf32>,
    return
  }
}

</mosaic_0001>

<llo_original>
// kernel: tpu_custom_call.1
$region0: #{tpu_custom_call.1}
  #allocation0 [shape = 'u32[]', space=smem, size = 0x4, offset = 0x4, fixed_abs, tag = 'smem constant byte address 0x4 - core index']
  #allocation1 [shape = 'u32[144,128]{1,0:T(1,128)}', space=vmem, size = 0x12000, scoped, tag = 'internal scratch']
  #allocation2 [shape = 'f32[128,64]{1,0:T(8,128)}', space=vmem, size = 0x10000, scoped, tag = 'scratch operand']
  #allocation3 [shape = 'f32[128,16]{1,0:T(8,128)}', space=vmem, size = 0x10000, scoped, tag = 'scratch operand']
  %s0 = inlined_call_operand.vmem [shape: f32[32,16], index: 0, kind: input, shape index: {}]
  %s1 = inlined_call_operand.vmem [shape: f32[32,128], index: 1, kind: input, shape index: {}]
  %s2 = inlined_call_operand.vmem [shape: f32[6,16,64], index: 2, kind: input, shape index: {}]
  %s3 = inlined_call_operand.hbm [shape: f32[6,16,16], index: 3, kind: input, shape index: {}]
  %s4 = inlined_call_operand.vmem [shape: f32[128,4], index: 4, kind: input, shape index: {}]
  %s5 = inlined_call_operand.vmem [shape: f32[4,16], index: 5, kind: input, shape index: {}]
  %s6 = inlined_call_operand.vmem [shape: f32[16,128], index: 6, kind: input, shape index: {}]
  %s7 = inlined_call_operand.vmem [shape: f32[1,128], index: 7, kind: input, shape index: {}]
  %s8 = inlined_call_operand.hbm [shape: f32[32,128], index: 8, kind: output, shape index: {}]
  %s9 = sld [smem:[#allocation0]]
  $region46: #{tpu_custom_call.1} parent=0
    _
  %s11 = ssub.s32 1, %s9
  %s12 = scalar_select 0, %s11, %s9
  $region1: #{tpu_custom_call.1} parent=0
    #allocation4 [shape = 'u8[49152]{0}', space=vmem, size = 0xc000, scoped, tag = 'input window, operand 3, single buffered']
    #allocation5 [shape = 's32[1]{0}', space=sflag, size = 0x4, scoped, tag = 'scoped memory for tpu_custom_call.1']
    #allocation6 [shape = 's32[1]{0}', space=sflag, size = 0x4, scoped, tag = 'scoped memory for tpu_custom_call.1']
    #allocation7 [shape = 'u8[16384]{0}', space=vmem, size = 0x4000, scoped, tag = 'output window, operand 0, single buffered']
    %13 = vsyncpa [#allocation5], 0
    %14 = vsyncpa [#allocation6], 0
    // Predicated region
    $region2: #{tpu_custom_call.1} parent=1 // pred_check
      _
    $region3: #{tpu_custom_call.1} parent=1 // pred_check_branch
      %16 = sbr.rel (0) target = $region5
    $region4: #{tpu_custom_call.1} parent=1 // pred_region
      _
    $region5: #{tpu_custom_call.1} parent=1 // pred_fallthru
      _
    // Predicated region
    $region6: #{tpu_custom_call.1} parent=1 // pred_check
      _
    $region7: #{tpu_custom_call.1} parent=1 // pred_check_branch
      %18 = sbr.rel (0) target = $region9
    $region8: #{tpu_custom_call.1} parent=1 // pred_region
      _
    $region9: #{tpu_custom_call.1} parent=1 // pred_fallthru
      _
    // Predicated region
    $region10: #{tpu_custom_call.1} parent=1 // pred_check
      _
    $region11: #{tpu_custom_call.1} parent=1 // pred_check_branch
      %20 = sbr.rel (0) target = $region13
    $region12: #{tpu_custom_call.1} parent=1 // pred_region
      _
    $region13: #{tpu_custom_call.1} parent=1 // pred_fallthru
      _
    // Predicated region
    $region14: #{tpu_custom_call.1} parent=1 // pred_check
      _
    $region15: #{tpu_custom_call.1} parent=1 // pred_check_branch
      %22 = sbr.rel (0) target = $region17
    $region16: #{tpu_custom_call.1} parent=1 // pred_region
      %s24 = ssub.s32 1536, 1536
      %25 = vsyncadd [#allocation5], %s24
      %s26 = sshll.u32 [#allocation4], 4
      %s27 = int_to_ptr.vmem [resolvable:$true] %s26
      %32 = dma.hbm_to_vmem [thread:$0]  %s3, 1536, %s27, [#allocation5], 128, 128, 8
    $region17: #{tpu_custom_call.1} parent=1 // pred_fallthru
      _
    // Predicated region
    $region18: #{tpu_custom_call.1} parent=1 // pred_check
      _
    $region19: #{tpu_custom_call.1} parent=1 // pred_check_branch
      %34 = sbr.rel (0) target = $region21
    $region20: #{tpu_custom_call.1} parent=1 // pred_region
      _
    $region21: #{tpu_custom_call.1} parent=1 // pred_fallthru
      _
    // Predicated region
    $region22: #{tpu_custom_call.1} parent=1 // pred_check
      _
    $region23: #{tpu_custom_call.1} parent=1 // pred_check_branch
      %36 = sbr.rel (0) target = $region25
    $region24: #{tpu_custom_call.1} parent=1 // pred_region
      _
    $region25: #{tpu_custom_call.1} parent=1 // pred_fallthru
      _
    // Predicated region
    $region26: #{tpu_custom_call.1} parent=1 // pred_check
      _
    $region27: #{tpu_custom_call.1} parent=1 // pred_check_branch
      %38 = sbr.rel (0) target = $region29
    $region28: #{tpu_custom_call.1} parent=1 // pred_region
      _
    $region29: #{tpu_custom_call.1} parent=1 // pred_fallthru
      _
    // Predicated region
    $region30: #{tpu_custom_call.1} parent=1 // pred_check
      _
    $region31: #{tpu_custom_call.1} parent=1 // pred_check_branch
      %40 = sbr.rel (0) target = $region33
    $region32: #{tpu_custom_call.1} parent=1 // pred_region
      _
    $region33: #{tpu_custom_call.1} parent=1 // pred_fallthru
      _
    // Predicated region
    $region34: #{tpu_custom_call.1} parent=1 // pred_check
      _
    $region35: #{tpu_custom_call.1} parent=1 // pred_check_branch
      %42 = sbr.rel (0) target = $region37
    $region36: #{tpu_custom_call.1} parent=1 // pred_region
      %43 = dma.done [#allocation5], 1536
    $region37: #{tpu_custom_call.1} parent=1 // pred_fallthru
      _
    %v44 = vld [vmem:[%s0] sm:$0xff]
    %v45 = vld [vmem:[%s0 + $0x8] sm:$0xff]
    %v46 = vld [vmem:[%s0 + $0x10] sm:$0xff]
    %v47 = vld [vmem:[%s0 + $0x18] sm:$0xff]
    %v48 = vld [vmem:[%s1] sm:$0xff]
    %v49 = vld [vmem:[%s1 + $0x8] sm:$0xff]
    %v50 = vld [vmem:[%s1 + $0x10] sm:$0xff]
    %v51 = vld [vmem:[%s1 + $0x18] sm:$0xff]
    %v52 = vld [vmem:[%s4] sm:$0xff]
    %v53 = vld [vmem:[%s4 + $0x8] sm:$0xff]
    %v54 = vld [vmem:[%s4 + $0x10] sm:$0xff]
    %v55 = vld [vmem:[%s4 + $0x18] sm:$0xff]
    %v56 = vld [vmem:[%s4 + $0x20] sm:$0xff]
    %v57 = vld [vmem:[%s4 + $0x28] sm:$0xff]
    %v58 = vld [vmem:[%s4 + $0x30] sm:$0xff]
    %v59 = vld [vmem:[%s4 + $0x38] sm:$0xff]
    %v60 = vld [vmem:[%s4 + $0x40] sm:$0xff]
    %v61 = vld [vmem:[%s4 + $0x48] sm:$0xff]
    %v62 = vld [vmem:[%s4 + $0x50] sm:$0xff]
    %v63 = vld [vmem:[%s4 + $0x58] sm:$0xff]
    %v64 = vld [vmem:[%s4 + $0x60] sm:$0xff]
    %v65 = vld [vmem:[%s4 + $0x68] sm:$0xff]
    %v66 = vld [vmem:[%s4 + $0x70] sm:$0xff]
    %v67 = vld [vmem:[%s4 + $0x78] sm:$0xff]
    %v68 = vld [vmem:[%s5] sm:$0xf]
    %vm69 = vcmask 523264
    %70 = vst.msk [vmem:[#allocation2] sm:$0xff] %vm69, 0.0
    %71 = vst.msk [vmem:[#allocation2 + $0x8] sm:$0xff] %vm69, 0.0
    %72 = vst.msk [vmem:[#allocation2 + $0x10] sm:$0xff] %vm69, 0.0
    %73 = vst.msk [vmem:[#allocation2 + $0x18] sm:$0xff] %vm69, 0.0
    %74 = vst.msk [vmem:[#allocation2 + $0x20] sm:$0xff] %vm69, 0.0
    %75 = vst.msk [vmem:[#allocation2 + $0x28] sm:$0xff] %vm69, 0.0
    %76 = vst.msk [vmem:[#allocation2 + $0x30] sm:$0xff] %vm69, 0.0
    %77 = vst.msk [vmem:[#allocation2 + $0x38] sm:$0xff] %vm69, 0.0
    %78 = vst.msk [vmem:[#allocation2 + $0x40] sm:$0xff] %vm69, 0.0
    %79 = vst.msk [vmem:[#allocation2 + $0x48] sm:$0xff] %vm69, 0.0
    %80 = vst.msk [vmem:[#allocation2 + $0x50] sm:$0xff] %vm69, 0.0
    %81 = vst.msk [vmem:[#allocation2 + $0x58] sm:$0xff] %vm69, 0.0
    %82 = vst.msk [vmem:[#allocation2 + $0x60] sm:$0xff] %vm69, 0.0
    %83 = vst.msk [vmem:[#allocation2 + $0x68] sm:$0xff] %vm69, 0.0
    %84 = vst.msk [vmem:[#allocation2 + $0x70] sm:$0xff] %vm69, 0.0
    %85 = vst.msk [vmem:[#allocation2 + $0x78] sm:$0xff] %vm69, 0.0
    %vm86 = vcmask 130048
    %87 = vst.msk [vmem:[#allocation3] sm:$0xff] %vm86, 0.0
    %88 = vst.msk [vmem:[#allocation3 + $0x8] sm:$0xff] %vm86, 0.0
    %89 = vst.msk [vmem:[#allocation3 + $0x10] sm:$0xff] %vm86, 0.0
    %90 = vst.msk [vmem:[#allocation3 + $0x18] sm:$0xff] %vm86, 0.0
    %91 = vst.msk [vmem:[#allocation3 + $0x20] sm:$0xff] %vm86, 0.0
    %92 = vst.msk [vmem:[#allocation3 + $0x28] sm:$0xff] %vm86, 0.0
    %93 = vst.msk [vmem:[#allocation3 + $0x30] sm:$0xff] %vm86, 0.0
    %94 = vst.msk [vmem:[#allocation3 + $0x38] sm:$0xff] %vm86, 0.0
    %95 = vst.msk [vmem:[#allocation3 + $0x40] sm:$0xff] %vm86, 0.0
    %96 = vst.msk [vmem:[#allocation3 + $0x48] sm:$0xff] %vm86, 0.0
    %97 = vst.msk [vmem:[#allocation3 + $0x50] sm:$0xff] %vm86, 0.0
    %98 = vst.msk [vmem:[#allocation3 + $0x58] sm:$0xff] %vm86, 0.0
    %99 = vst.msk [vmem:[#allocation3 + $0x60] sm:$0xff] %vm86, 0.0
    %100 = vst.msk [vmem:[#allocation3 + $0x68] sm:$0xff] %vm86, 0.0
    %101 = vst.msk [vmem:[#allocation3 + $0x70] sm:$0xff] %vm86, 0.0
    %102 = vst.msk [vmem:[#allocation3 + $0x78] sm:$0xff] %vm86, 0.0
    %v103 = vld [vmem:[%s2] sm:$0xff]
    %v104 = vld [vmem:[%s2 + $0x8] sm:$0xff]
    %v106 = vsel %vm86, %v44, 0
    %v109 = vsel %vm86, %v45, 0
    %v112 = vsel %vm86, %v46, 0
    %v115 = vsel %vm86, %v47, 0
    %117 = vmatprep.subr.mxu0 0.0
    %118 = vmatpush1.msra.mxu0 0.0
    %119 = vmatprep.subr.mxu0 0.0
    %120 = vmatpush1.msra.mxu0 0.0
    %121 = vmatprep.subr.mxu0 0.0
    %122 = vmatpush1.msra.mxu0 0.0
    %123 = vmatprep.subr.mxu0 0.0
    %124 = vmatpush1.msra.mxu0 0.0
    %125 = vmatprep.subr.mxu0 0.0
    %126 = vmatpush1.msra.mxu0 0.0
    %127 = vmatprep.subr.mxu0 0.0
    %128 = vmatpush1.msra.mxu0 0.0
    %129 = vmatprep.subr.mxu0 0.0
    %130 = vmatpush1.msra.mxu0 0.0
    %131 = vmatprep.subr.mxu0 0.0
    %132 = vmatpush1.msra.mxu0 0.0
    %133 = vmatprep.subr.mxu0 0.0
    %134 = vmatpush1.msra.mxu0 0.0
    %135 = vmatprep.subr.mxu0 0.0
    %136 = vmatpush1.msra.mxu0 0.0
    %137 = vmatprep.subr.mxu0 0.0
    %138 = vmatpush1.msra.mxu0 0.0
    %139 = vmatprep.subr.mxu0 0.0
    %140 = vmatpush1.msra.mxu0 0.0
    %141 = vmatprep.subr.mxu0 0.0
    %142 = vmatpush1.msra.mxu0 0.0
    %143 = vmatprep.subr.mxu0 0.0
    %144 = vmatpush1.msra.mxu0 0.0
    %145 = vmatprep.subr.mxu0 0.0
    %146 = vmatpush1.msra.mxu0 %v104
    %147 = vmatprep.subr.mxu0 0.0
    %148 = vmatpush1.msra.mxu0 %v103
    %149 = vmatprep.subr.mxu0 0.0
    %150 = vmatpush2.msra.mxu0 0.0
    %151 = vmatprep.subr.mxu0 0.0
    %152 = vmatpush2.msra.mxu0 0.0
    %153 = vmatprep.subr.mxu0 0.0
    %154 = vmatpush2.msra.mxu0 0.0
    %155 = vmatprep.subr.mxu0 0.0
    %156 = vmatpush2.msra.mxu0 0.0
    %157 = vmatprep.subr.mxu0 0.0
    %158 = vmatpush2.msra.mxu0 0.0
    %159 = vmatprep.subr.mxu0 0.0
    %160 = vmatpush2.msra.mxu0 0.0
    %161 = vmatprep.subr.mxu0 0.0
    %162 = vmatpush2.msra.mxu0 0.0
    %163 = vmatprep.subr.mxu0 0.0
    %164 = vmatpush2.msra.mxu0 0.0
    %165 = vmatprep.subr.mxu0 0.0
    %166 = vmatpush2.msra.mxu0 0.0
    %167 = vmatprep.subr.mxu0 0.0
    %168 = vmatpush2.msra.mxu0 0.0
    %169 = vmatprep.subr.mxu0 0.0
    %170 = vmatpush2.msra.mxu0 0.0
    %171 = vmatprep.subr.mxu0 0.0
    %172 = vmatpush2.msra.mxu0 0.0
    %173 = vmatprep.subr.mxu0 0.0
    %174 = vmatpush2.msra.mxu0 0.0
    %175 = vmatprep.subr.mxu0 0.0
    %176 = vmatpush2.msra.mxu0 0.0
    %177 = vmatprep.subr.mxu0 0.0
    %178 = vmatpush2.msra.mxu0 0.0
    %179 = vmatprep.subr.mxu0 0.0
    %180 = vmatpush2.msra.mxu0 0.0
    %181 = vmatprep.mubr.f32.mxu0 0.0
    %182 = vmatmul.mubr.f32.gmra.mxu0 %v106
    %v183 = vpop.f32.mrf.mxu0
    %v184 = vadd.f32 0.0, %v183
    %v185 = vpop.f32.mrf.mxu0
    %186 = vmatprep.mubr.f32.mxu0 0.0
    %187 = vmatmul.mubr.f32.gmra.mxu0 %v109
    %v188 = vpop.f32.mrf.mxu0
    %v189 = vadd.f32 0.0, %v188
    %v190 = vpop.f32.mrf.mxu0
    %191 = vmatprep.mubr.f32.mxu0 0.0
    %192 = vmatmul.mubr.f32.gmra.mxu0 %v112
    %v193 = vpop.f32.mrf.mxu0
    %v194 = vadd.f32 0.0, %v193
    %v195 = vpop.f32.mrf.mxu0
    %196 = vmatprep.mubr.f32.mxu0 0.0
    %197 = vmatmul.mubr.f32.gmra.mxu0 %v115
    %v198 = vpop.f32.mrf.mxu0
    %v199 = vadd.f32 0.0, %v198
    %v200 = vpop.f32.mrf.mxu0
    %201 = vdwg.mxu0
    %202 = vst.msk [vmem:[#allocation2] sm:$0xff] %vm86, %v44
    %203 = vst.msk [vmem:[#allocation2 + $0x8] sm:$0xff] %vm86, %v45
    %204 = vst.msk [vmem:[#allocation2 + $0x10] sm:$0xff] %vm86, %v46
    %205 = vst.msk [vmem:[#allocation2 + $0x18] sm:$0xff] %vm86, %v47
    %206 = vrot.lane.b32.xlu0 %v44, 16
    %v207 = vpop.permute.xlu0 %206
    %208 = vrot.lane.b32.xlu0 %v45, 16
    %v209 = vpop.permute.xlu0 %208
    %210 = vrot.lane.b32.xlu0 %v46, 16
    %v211 = vpop.permute.xlu0 %210
    %212 = vrot.lane.b32.xlu0 %v47, 16
    %v213 = vpop.permute.xlu0 %212
    %vm218 = vcmask 261248
    %219 = vst.msk [vmem:[#allocation2 + $0x20] sm:$0xff] %vm218, %v207
    %220 = vst.msk [vmem:[#allocation2 + $0x28] sm:$0xff] %vm218, %v209
    %221 = vst.msk [vmem:[#allocation2 + $0x30] sm:$0xff] %vm218, %v211
    %222 = vst.msk [vmem:[#allocation2 + $0x38] sm:$0xff] %vm218, %v213
    %223 = vrot.lane.b32.xlu0 %v44, 32
    %v224 = vpop.permute.xlu0 %223
    %225 = vrot.lane.b32.xlu0 %v45, 32
    %v226 = vpop.permute.xlu0 %225
    %227 = vrot.lane.b32.xlu0 %v46, 32
    %v228 = vpop.permute.xlu0 %227
    %229 = vrot.lane.b32.xlu0 %v47, 32
    %v230 = vpop.permute.xlu0 %229
    %vm235 = vcmask 392448
    %236 = vst.msk [vmem:[#allocation2 + $0x40] sm:$0xff] %vm235, %v224
    %237 = vst.msk [vmem:[#allocation2 + $0x48] sm:$0xff] %vm235, %v226
    %238 = vst.msk [vmem:[#allocation2 + $0x50] sm:$0xff] %vm235, %v228
    %239 = vst.msk [vmem:[#allocation2 + $0x58] sm:$0xff] %vm235, %v230
    %240 = vrot.lane.b32.xlu0 %v44, 48
    %v241 = vpop.permute.xlu0 %240
    %242 = vrot.lane.b32.xlu0 %v45, 48
    %v243 = vpop.permute.xlu0 %242
    %244 = vrot.lane.b32.xlu0 %v46, 48
    %v245 = vpop.permute.xlu0 %244
    %246 = vrot.lane.b32.xlu0 %v47, 48
    %v247 = vpop.permute.xlu0 %246
    %vm252 = vcmask 523648
    %253 = vst.msk [vmem:[#allocation2 + $0x60] sm:$0xff] %vm252, %v241
    %254 = vst.msk [vmem:[#allocation2 + $0x68] sm:$0xff] %vm252, %v243
    %255 = vst.msk [vmem:[#allocation2 + $0x70] sm:$0xff] %vm252, %v245
    %256 = vst.msk [vmem:[#allocation2 + $0x78] sm:$0xff] %vm252, %v247
    %v257 = vld [vmem:[#allocation2] sm:$0xff]
    %v258 = vld [vmem:[#allocation2 + $0x8] sm:$0xff]
    %v259 = vld [vmem:[#allocation2 + $0x10] sm:$0xff]
    %v260 = vld [vmem:[#allocation2 + $0x18] sm:$0xff]
    %v261 = vld [vmem:[#allocation2 + $0x20] sm:$0xff]
    %v262 = vld [vmem:[#allocation2 + $0x28] sm:$0xff]
    %v263 = vld [vmem:[#allocation2 + $0x30] sm:$0xff]
    %v264 = vld [vmem:[#allocation2 + $0x38] sm:$0xff]
    %v265 = vld [vmem:[#allocation2 + $0x40] sm:$0xff]
    %v266 = vld [vmem:[#allocation2 + $0x48] sm:$0xff]
    %v267 = vld [vmem:[#allocation2 + $0x50] sm:$0xff]
    %v268 = vld [vmem:[#allocation2 + $0x58] sm:$0xff]
    %v269 = vld [vmem:[#allocation2 + $0x60] sm:$0xff]
    %v270 = vld [vmem:[#allocation2 + $0x68] sm:$0xff]
    %v271 = vld [vmem:[#allocation2 + $0x70] sm:$0xff]
    %v272 = vld [vmem:[#allocation2 + $0x78] sm:$0xff]
    %v274 = vsel %vm69, %v184, 0
    %v277 = vsel %vm69, %v189, 0
    %v280 = vsel %vm69, %v194, 0
    %v283 = vsel %vm69, %v199, 0
    %v286 = vsel %vm69, %v257, 0
    %v289 = vsel %vm69, %v258, 0
    %v292 = vsel %vm69, %v259, 0
    %v295 = vsel %vm69, %v260, 0
    %v298 = vsel %vm69, %v261, 0
    %v301 = vsel %vm69, %v262, 0
    %v304 = vsel %vm69, %v263, 0
    %v307 = vsel %vm69, %v264, 0
    %v310 = vsel %vm69, %v265, 0
    %v313 = vsel %vm69, %v266, 0
    %v316 = vsel %vm69, %v267, 0
    %v319 = vsel %vm69, %v268, 0
    %v322 = vsel %vm69, %v269, 0
    %v325 = vsel %vm69, %v270, 0
    %v328 = vsel %vm69, %v271, 0
    %v331 = vsel %vm69, %v272, 0
    %333 = vmatprep.subr.mxu0 0.0
    %334 = vmatpush1.xpose.msra.mxu0 %v331
    %335 = vmatprep.subr.mxu0 0.0
    %336 = vmatpush1.xpose.msra.mxu0 %v328
    %337 = vmatprep.subr.mxu0 0.0
    %338 = vmatpush1.xpose.msra.mxu0 %v325
    %339 = vmatprep.subr.mxu0 0.0
    %340 = vmatpush1.xpose.msra.mxu0 %v322
    %341 = vmatprep.subr.mxu0 0.0
    %342 = vmatpush1.xpose.msra.mxu0 %v319
    %343 = vmatprep.subr.mxu0 0.0
    %344 = vmatpush1.xpose.msra.mxu0 %v316
    %345 = vmatprep.subr.mxu0 0.0
    %346 = vmatpush1.xpose.msra.mxu0 %v313
    %347 = vmatprep.subr.mxu0 0.0
    %348 = vmatpush1.xpose.msra.mxu0 %v310
    %349 = vmatprep.subr.mxu0 0.0
    %350 = vmatpush1.xpose.msra.mxu0 %v307
    %351 = vmatprep.subr.mxu0 0.0
    %352 = vmatpush1.xpose.msra.mxu0 %v304
    %353 = vmatprep.subr.mxu0 0.0
    %354 = vmatpush1.xpose.msra.mxu0 %v301
    %355 = vmatprep.subr.mxu0 0.0
    %356 = vmatpush1.xpose.msra.mxu0 %v298
    %357 = vmatprep.subr.mxu0 0.0
    %358 = vmatpush1.xpose.msra.mxu0 %v295
    %359 = vmatprep.subr.mxu0 0.0
    %360 = vmatpush1.xpose.msra.mxu0 %v292
    %361 = vmatprep.subr.mxu0 0.0
    %362 = vmatpush1.xpose.msra.mxu0 %v289
    %363 = vmatprep.subr.mxu0 0.0
    %364 = vmatpush1.xpose.msra.mxu0 %v286
    %365 = vmatprep.subr.mxu0 0.0
    %366 = vmatpush2.xpose.msra.mxu0 0.0
    %367 = vmatprep.subr.mxu0 0.0
    %368 = vmatpush2.xpose.msra.mxu0 0.0
    %369 = vmatprep.subr.mxu0 0.0
    %370 = vmatpush2.xpose.msra.mxu0 0.0
    %371 = vmatprep.subr.mxu0 0.0
    %372 = vmatpush2.xpose.msra.mxu0 0.0
    %373 = vmatprep.subr.mxu0 0.0
    %374 = vmatpush2.xpose.msra.mxu0 0.0
    %375 = vmatprep.subr.mxu0 0.0
    %376 = vmatpush2.xpose.msra.mxu0 0.0
    %377 = vmatprep.subr.mxu0 0.0
    %378 = vmatpush2.xpose.msra.mxu0 0.0
    %379 = vmatprep.subr.mxu0 0.0
    %380 = vmatpush2.xpose.msra.mxu0 0.0
    %381 = vmatprep.subr.mxu0 0.0
    %382 = vmatpush2.xpose.msra.mxu0 0.0
    %383 = vmatprep.subr.mxu0 0.0
    %384 = vmatpush2.xpose.msra.mxu0 0.0
    %385 = vmatprep.subr.mxu0 0.0
    %386 = vmatpush2.xpose.msra.mxu0 0.0
    %387 = vmatprep.subr.mxu0 0.0
    %388 = vmatpush2.xpose.msra.mxu0 0.0
    %389 = vmatprep.subr.mxu0 0.0
    %390 = vmatpush2.xpose.msra.mxu0 0.0
    %391 = vmatprep.subr.mxu0 0.0
    %392 = vmatpush2.xpose.msra.mxu0 0.0
    %393 = vmatprep.subr.mxu0 0.0
    %394 = vmatpush2.xpose.msra.mxu0 0.0
    %395 = vmatprep.subr.mxu0 0.0
    %396 = vmatpush2.xpose.msra.mxu0 0.0
    %397 = vmatprep.mubr.f32.mxu0 0.0
    %398 = vmatmul.mubr.f32.gmra.mxu0 %v274
    %v399 = vpop.f32.mrf.mxu0
    %v400 = vadd.f32 %v48, %v399
    %v401 = vpop.f32.mrf.mxu0
    %402 = vmatprep.mubr.f32.mxu0 0.0
    %403 = vmatmul.mubr.f32.gmra.mxu0 %v277
    %v404 = vpop.f32.mrf.mxu0
    %v405 = vadd.f32 %v49, %v404
    %v406 = vpop.f32.mrf.mxu0
    %407 = vmatprep.mubr.f32.mxu0 0.0
    %408 = vmatmul.mubr.f32.gmra.mxu0 %v280
    %v409 = vpop.f32.mrf.mxu0
    %v410 = vadd.f32 %v50, %v409
    %v411 = vpop.f32.mrf.mxu0
    %412 = vmatprep.mubr.f32.mxu0 0.0
    %413 = vmatmul.mubr.f32.gmra.mxu0 %v283
    %v414 = vpop.f32.mrf.mxu0
    %v415 = vadd.f32 %v51, %v414
    %v416 = vpop.f32.mrf.mxu0
    %417 = vdwg.mxu0
    %418 = vmax.xlane.f32.xlu0 %v400
    %v419 = vpop.xlane.xlu0 %418
    %420 = vmax.xlane.f32.xlu0 %v405
    %v421 = vpop.xlane.xlu0 %420
    %422 = vmax.xlane.f32.xlu0 %v410
    %v423 = vpop.xlane.xlu0 %422
    %424 = vmax.xlane.f32.xlu0 %v415
    %v425 = vpop.xlane.xlu0 %424
    %v426 = vsub.f32 %v400, %v419
    %v427 = vsub.f32 %v405, %v421
    %v428 = vsub.f32 %v410, %v423
    %v429 = vsub.f32 %v415, %v425
    %v430 = vmul.f32 %v426, 1.442695
    %v431 = vpow.pop %v430
    %v432 = vmul.f32 %v427, 1.442695
    %v433 = vpow.pop %v432
    %v434 = vmul.f32 %v428, 1.442695
    %v435 = vpow.pop %v434
    %v436 = vmul.f32 %v429, 1.442695
    %v437 = vpow.pop %v436
    %v438 = vld [vmem:[#allocation4] sm:$0xff]
    %v439 = vld [vmem:[#allocation4 + $0x8] sm:$0xff]
    %440 = vmatprep.subr.mxu0 0.0
    %441 = vmatpush1.msra.mxu0 0.0
    %442 = vmatprep.subr.mxu0 0.0
    %443 = vmatpush1.msra.mxu0 0.0
    %444 = vmatprep.subr.mxu0 0.0
    %445 = vmatpush1.msra.mxu0 0.0
    %446 = vmatprep.subr.mxu0 0.0
    %447 = vmatpush1.msra.mxu0 0.0
    %448 = vmatprep.subr.mxu0 0.0
    %449 = vmatpush1.msra.mxu0 0.0
    %450 = vmatprep.subr.mxu0 0.0
    %451 = vmatpush1.msra.mxu0 0.0
    %452 = vmatprep.subr.mxu0 0.0
    %453 = vmatpush1.msra.mxu0 0.0
    %454 = vmatprep.subr.mxu0 0.0
    %455 = vmatpush1.msra.mxu0 0.0
    %456 = vmatprep.subr.mxu0 0.0
    %457 = vmatpush1.msra.mxu0 0.0
    %458 = vmatprep.subr.mxu0 0.0
    %459 = vmatpush1.msra.mxu0 0.0
    %460 = vmatprep.subr.mxu0 0.0
    %461 = vmatpush1.msra.mxu0 0.0
    %462 = vmatprep.subr.mxu0 0.0
    %463 = vmatpush1.msra.mxu0 0.0
    %464 = vmatprep.subr.mxu0 0.0
    %465 = vmatpush1.msra.mxu0 0.0
    %466 = vmatprep.subr.mxu0 0.0
    %467 = vmatpush1.msra.mxu0 0.0
    %468 = vmatprep.subr.mxu0 0.0
    %469 = vmatpush1.msra.mxu0 %v439
    %470 = vmatprep.subr.mxu0 0.0
    %471 = vmatpush1.msra.mxu0 %v438
    %472 = vmatprep.subr.mxu0 0.0
    %473 = vmatpush2.msra.mxu0 0.0
    %474 = vmatprep.subr.mxu0 0.0
    %475 = vmatpush2.msra.mxu0 0.0
    %476 = vmatprep.subr.mxu0 0.0
    %477 = vmatpush2.msra.mxu0 0.0
    %478 = vmatprep.subr.mxu0 0.0
    %479 = vmatpush2.msra.mxu0 0.0
    %480 = vmatprep.subr.mxu0 0.0
    %481 = vmatpush2.msra.mxu0 0.0
    %482 = vmatprep.subr.mxu0 0.0
    %483 = vmatpush2.msra.mxu0 0.0
    %484 = vmatprep.subr.mxu0 0.0
    %485 = vmatpush2.msra.mxu0 0.0
    %486 = vmatprep.subr.mxu0 0.0
    %487 = vmatpush2.msra.mxu0 0.0
    %488 = vmatprep.subr.mxu0 0.0
    %489 = vmatpush2.msra.mxu0 0.0
    %490 = vmatprep.subr.mxu0 0.0
    %491 = vmatpush2.msra.mxu0 0.0
    %492 = vmatprep.subr.mxu0 0.0
    %493 = vmatpush2.msra.mxu0 0.0
    %494 = vmatprep.subr.mxu0 0.0
    %495 = vmatpush2.msra.mxu0 0.0
    %496 = vmatprep.subr.mxu0 0.0
    %497 = vmatpush2.msra.mxu0 0.0
    %498 = vmatprep.subr.mxu0 0.0
    %499 = vmatpush2.msra.mxu0 0.0
    %500 = vmatprep.subr.mxu0 0.0
    %501 = vmatpush2.msra.mxu0 0.0
    %502 = vmatprep.subr.mxu0 0.0
    %503 = vmatpush2.msra.mxu0 0.0
    %504 = vmatprep.mubr.f32.mxu0 0.0
    %505 = vmatmul.mubr.f32.gmra.mxu0 %v106
    %v506 = vpop.f32.mrf.mxu0
    %v507 = vadd.f32 0.0, %v506
    %v508 = vpop.f32.mrf.mxu0
    %509 = vmatprep.mubr.f32.mxu0 0.0
    %510 = vmatmul.mubr.f32.gmra.mxu0 %v109
    %v511 = vpop.f32.mrf.mxu0
    %v512 = vadd.f32 0.0, %v511
    %v513 = vpop.f32.mrf.mxu0
    %514 = vmatprep.mubr.f32.mxu0 0.0
    %515 = vmatmul.mubr.f32.gmra.mxu0 %v112
    %v516 = vpop.f32.mrf.mxu0
    %v517 = vadd.f32 0.0, %v516
    %v518 = vpop.f32.mrf.mxu0
    %519 = vmatprep.mubr.f32.mxu0 0.0
    %520 = vmatmul.mubr.f32.gmra.mxu0 %v115
    %v521 = vpop.f32.mrf.mxu0
    %v522 = vadd.f32 0.0, %v521
    %v523 = vpop.f32.mrf.mxu0
    %524 = vdwg.mxu0
    %v525 = vlaneseq
    %v526 = vshrl.u32 %v525, 7
    %v527 = vsub.s32 0, %v526
    %v528 = vrot.slane %v68, %v527
    %v529 = vmul.f32 %v507, %v528
    %v530 = vmul.f32 %v512, %v528
    %v531 = vmul.f32 %v517, %v528
    %v532 = vmul.f32 %v522, %v528
    %533 = vst.msk [vmem:[#allocation3] sm:$0xff] %vm86, %v529
    %534 = vst.msk [vmem:[#allocation3 + $0x8] sm:$0xff] %vm86, %v530
    %535 = vst.msk [vmem:[#allocation3 + $0x10] sm:$0xff] %vm86, %v531
    %536 = vst.msk [vmem:[#allocation3 + $0x18] sm:$0xff] %vm86, %v532
    %v537 = vlaneseq
    %v538 = vshrl.u32 %v537, 7
    %v539 = vsub.s32 1, %v538
    %v540 = vrot.slane %v68, %v539
    %v541 = vmul.f32 %v507, %v540
    %v542 = vmul.f32 %v512, %v540
    %v543 = vmul.f32 %v517, %v540
    %v544 = vmul.f32 %v522, %v540
    %545 = vst.msk [vmem:[#allocation3 + $0x20] sm:$0xff] %vm86, %v541
    %546 = vst.msk [vmem:[#allocation3 + $0x28] sm:$0xff] %vm86, %v542
    %547 = vst.msk [vmem:[#allocation3 + $0x30] sm:$0xff] %vm86, %v543
    %548 = vst.msk [vmem:[#allocation3 + $0x38] sm:$0xff] %vm86, %v544
    %v549 = vlaneseq
    %v550 = vshrl.u32 %v549, 7
    %v551 = vsub.s32 2, %v550
    %v552 = vrot.slane %v68, %v551
    %v553 = vmul.f32 %v507, %v552
    %v554 = vmul.f32 %v512, %v552
    %v555 = vmul.f32 %v517, %v552
    %v556 = vmul.f32 %v522, %v552
    %557 = vst.msk [vmem:[#allocation3 + $0x40] sm:$0xff] %vm86, %v553
    %558 = vst.msk [vmem:[#allocation3 + $0x48] sm:$0xff] %vm86, %v554
    %559 = vst.msk [vmem:[#allocation3 + $0x50] sm:$0xff] %vm86, %v555
    %560 = vst.msk [vmem:[#allocation3 + $0x58] sm:$0xff] %vm86, %v556
    %v561 = vlaneseq
    %v562 = vshrl.u32 %v561, 7
    %v563 = vsub.s32 3, %v562
    %v564 = vrot.slane %v68, %v563
    %v565 = vmul.f32 %v507, %v564
    %v566 = vmul.f32 %v512, %v564
    %v567 = vmul.f32 %v517, %v564
    %v568 = vmul.f32 %v522, %v564
    %569 = vst.msk [vmem:[#allocation3 + $0x60] sm:$0xff] %vm86, %v565
    %570 = vst.msk [vmem:[#allocation3 + $0x68] sm:$0xff] %vm86, %v566
    %571 = vst.msk [vmem:[#allocation3 + $0x70] sm:$0xff] %vm86, %v567
    %572 = vst.msk [vmem:[#allocation3 + $0x78] sm:$0xff] %vm86, %v568
    %v573 = vld [vmem:[#allocation3] sm:$0xff]
    %v574 = vld [vmem:[#allocation3 + $0x8] sm:$0xff]
    %v575 = vld [vmem:[#allocation3 + $0x10] sm:$0xff]
    %v576 = vld [vmem:[#allocation3 + $0x18] sm:$0xff]
    %v577 = vld [vmem:[#allocation3 + $0x20] sm:$0xff]
    %v578 = vld [vmem:[#allocation3 + $0x28] sm:$0xff]
    %v579 = vld [vmem:[#allocation3 + $0x30] sm:$0xff]
    %v580 = vld [vmem:[#allocation3 + $0x38] sm:$0xff]
    %v581 = vld [vmem:[#allocation3 + $0x40] sm:$0xff]
    %v582 = vld [vmem:[#allocation3 + $0x48] sm:$0xff]
    %v583 = vld [vmem:[#allocation3 + $0x50] sm:$0xff]
    %v584 = vld [vmem:[#allocation3 + $0x58] sm:$0xff]
    %v585 = vld [vmem:[#allocation3 + $0x60] sm:$0xff]
    %v586 = vld [vmem:[#allocation3 + $0x68] sm:$0xff]
    %v587 = vld [vmem:[#allocation3 + $0x70] sm:$0xff]
    %v588 = vld [vmem:[#allocation3 + $0x78] sm:$0xff]
    %589 = vmatprep.subr.mxu0 0.0
    %590 = vmatpush1.msra.mxu0 %v588
    %591 = vmatprep.subr.mxu0 0.0
    %592 = vmatpush1.msra.mxu0 %v587
    %593 = vmatprep.subr.mxu0 0.0
    %594 = vmatpush1.msra.mxu0 %v586
    %595 = vmatprep.subr.mxu0 0.0
    %596 = vmatpush1.msra.mxu0 %v585
    %597 = vmatprep.subr.mxu0 0.0
    %598 = vmatpush1.msra.mxu0 %v584
    %599 = vmatprep.subr.mxu0 0.0
    %600 = vmatpush1.msra.mxu0 %v583
    %601 = vmatprep.subr.mxu0 0.0
    %602 = vmatpush1.msra.mxu0 %v582
    %603 = vmatprep.subr.mxu0 0.0
    %604 = vmatpush1.msra.mxu0 %v581
    %605 = vmatprep.subr.mxu0 0.0
    %606 = vmatpush1.msra.mxu0 %v580
    %607 = vmatprep.subr.mxu0 0.0
    %608 = vmatpush1.msra.mxu0 %v579
    %609 = vmatprep.subr.mxu0 0.0
    %610 = vmatpush1.msra.mxu0 %v578
    %611 = vmatprep.subr.mxu0 0.0
    %612 = vmatpush1.msra.mxu0 %v577
    %613 = vmatprep.subr.mxu0 0.0
    %614 = vmatpush1.msra.mxu0 %v576
    %615 = vmatprep.subr.mxu0 0.0
    %616 = vmatpush1.msra.mxu0 %v575
    %617 = vmatprep.subr.mxu0 0.0
    %618 = vmatpush1.msra.mxu0 %v574
    %619 = vmatprep.subr.mxu0 0.0
    %620 = vmatpush1.msra.mxu0 %v573
    %621 = vmatprep.subr.mxu0 0.0
    %622 = vmatpush2.msra.mxu0 0.0
    %623 = vmatprep.subr.mxu0 0.0
    %624 = vmatpush2.msra.mxu0 0.0
    %625 = vmatprep.subr.mxu0 0.0
    %626 = vmatpush2.msra.mxu0 0.0
    %627 = vmatprep.subr.mxu0 0.0
    %628 = vmatpush2.msra.mxu0 0.0
    %629 = vmatprep.subr.mxu0 0.0
    %630 = vmatpush2.msra.mxu0 0.0
    %631 = vmatprep.subr.mxu0 0.0
    %632 = vmatpush2.msra.mxu0 0.0
    %633 = vmatprep.subr.mxu0 0.0
    %634 = vmatpush2.msra.mxu0 0.0
    %635 = vmatprep.subr.mxu0 0.0
    %636 = vmatpush2.msra.mxu0 0.0
    %637 = vmatprep.subr.mxu0 0.0
    %638 = vmatpush2.msra.mxu0 0.0
    %639 = vmatprep.subr.mxu0 0.0
    %640 = vmatpush2.msra.mxu0 0.0
    %641 = vmatprep.subr.mxu0 0.0
    %642 = vmatpush2.msra.mxu0 0.0
    %643 = vmatprep.subr.mxu0 0.0
    %644 = vmatpush2.msra.mxu0 0.0
    %645 = vmatprep.subr.mxu0 0.0
    %646 = vmatpush2.msra.mxu0 0.0
    %647 = vmatprep.subr.mxu0 0.0
    %648 = vmatpush2.msra.mxu0 0.0
    %649 = vmatprep.subr.mxu0 0.0
    %650 = vmatpush2.msra.mxu0 0.0
    %651 = vmatprep.subr.mxu0 0.0
    %652 = vmatpush2.msra.mxu0 0.0
    %653 = vmatprep.mubr.f32.mxu0 0.0
    %654 = vmatmul.mubr.f32.gmra.mxu0 %v431
    %v655 = vpop.f32.mrf.mxu0
    %v656 = vadd.f32 0.0, %v655
    %v657 = vpop.f32.mrf.mxu0
    %658 = vmatprep.mubr.f32.mxu0 0.0
    %659 = vmatmul.mubr.f32.gmra.mxu0 %v433
    %v660 = vpop.f32.mrf.mxu0
    %v661 = vadd.f32 0.0, %v660
    %v662 = vpop.f32.mrf.mxu0
    %663 = vmatprep.mubr.f32.mxu0 0.0
    %664 = vmatmul.mubr.f32.gmra.mxu0 %v435
    %v665 = vpop.f32.mrf.mxu0
    %v666 = vadd.f32 0.0, %v665
    %v667 = vpop.f32.mrf.mxu0
    %668 = vmatprep.mubr.f32.mxu0 0.0
    %669 = vmatmul.mubr.f32.gmra.mxu0 %v437
    %v670 = vpop.f32.mrf.mxu0
    %v671 = vadd.f32 0.0, %v670
    %v672 = vpop.f32.mrf.mxu0
    %673 = vdwg.mxu0
    %674 = vmatprep.subr.mxu0 0.0
    %675 = vmatpush1.msra.mxu0 %v67
    %676 = vmatprep.subr.mxu0 0.0
    %677 = vmatpush1.msra.mxu0 %v66
    %678 = vmatprep.subr.mxu0 0.0
    %679 = vmatpush1.msra.mxu0 %v65
    %680 = vmatprep.subr.mxu0 0.0
    %681 = vmatpush1.msra.mxu0 %v64
    %682 = vmatprep.subr.mxu0 0.0
    %683 = vmatpush1.msra.mxu0 %v63
    %684 = vmatprep.subr.mxu0 0.0
    %685 = vmatpush1.msra.mxu0 %v62
    %686 = vmatprep.subr.mxu0 0.0
    %687 = vmatpush1.msra.mxu0 %v61
    %688 = vmatprep.subr.mxu0 0.0
    %689 = vmatpush1.msra.mxu0 %v60
    %690 = vmatprep.subr.mxu0 0.0
    %691 = vmatpush1.msra.mxu0 %v59
    %692 = vmatprep.subr.mxu0 0.0
    %693 = vmatpush1.msra.mxu0 %v58
    %694 = vmatprep.subr.mxu0 0.0
    %695 = vmatpush1.msra.mxu0 %v57
    %696 = vmatprep.subr.mxu0 0.0
    %697 = vmatpush1.msra.mxu0 %v56
    %698 = vmatprep.subr.mxu0 0.0
    %699 = vmatpush1.msra.mxu0 %v55
    %700 = vmatprep.subr.mxu0 0.0
    %701 = vmatpush1.msra.mxu0 %v54
    %702 = vmatprep.subr.mxu0 0.0
    %703 = vmatpush1.msra.mxu0 %v53
    %704 = vmatprep.subr.mxu0 0.0
    %705 = vmatpush1.msra.mxu0 %v52
    %706 = vmatprep.subr.mxu0 0.0
    %707 = vmatpush2.msra.mxu0 0.0
    %708 = vmatprep.subr.mxu0 0.0
    %709 = vmatpush2.msra.mxu0 0.0
    %710 = vmatprep.subr.mxu0 0.0
    %711 = vmatpush2.msra.mxu0 0.0
    %712 = vmatprep.subr.mxu0 0.0
    %713 = vmatpush2.msra.mxu0 0.0
    %714 = vmatprep.subr.mxu0 0.0
    %715 = vmatpush2.msra.mxu0 0.0
    %716 = vmatprep.subr.mxu0 0.0
    %717 = vmatpush2.msra.mxu0 0.0
    %718 = vmatprep.subr.mxu0 0.0
    %719 = vmatpush2.msra.mxu0 0.0
    %720 = vmatprep.subr.mxu0 0.0
    %721 = vmatpush2.msra.mxu0 0.0
    %722 = vmatprep.subr.mxu0 0.0
    %723 = vmatpush2.msra.mxu0 0.0
    %724 = vmatprep.subr.mxu0 0.0
    %725 = vmatpush2.msra.mxu0 0.0
    %726 = vmatprep.subr.mxu0 0.0
    %727 = vmatpush2.msra.mxu0 0.0
    %728 = vmatprep.subr.mxu0 0.0
    %729 = vmatpush2.msra.mxu0 0.0
    %730 = vmatprep.subr.mxu0 0.0
    %731 = vmatpush2.msra.mxu0 0.0
    %732 = vmatprep.subr.mxu0 0.0
    %733 = vmatpush2.msra.mxu0 0.0
    %734 = vmatprep.subr.mxu0 0.0
    %735 = vmatpush2.msra.mxu0 0.0
    %736 = vmatprep.subr.mxu0 0.0
    %737 = vmatpush2.msra.mxu0 0.0
    %738 = vmatprep.mubr.f32.mxu0 0.0
    %739 = vmatmul.mubr.f32.gmra.mxu0 %v431
    %v740 = vpop.f32.mrf.mxu0
    %v741 = vadd.f32 0.0, %v740
    %v742 = vpop.f32.mrf.mxu0
    %743 = vmatprep.mubr.f32.mxu0 0.0
    %744 = vmatmul.mubr.f32.gmra.mxu0 %v433
    %v745 = vpop.f32.mrf.mxu0
    %v746 = vadd.f32 0.0, %v745
    %v747 = vpop.f32.mrf.mxu0
    %748 = vmatprep.mubr.f32.mxu0 0.0
    %749 = vmatmul.mubr.f32.gmra.mxu0 %v435
    %v750 = vpop.f32.mrf.mxu0
    %v751 = vadd.f32 0.0, %v750
    %v752 = vpop.f32.mrf.mxu0
    %753 = vmatprep.mubr.f32.mxu0 0.0
    %754 = vmatmul.mubr.f32.gmra.mxu0 %v437
    %v755 = vpop.f32.mrf.mxu0
    %v756 = vadd.f32 0.0, %v755
    %v757 = vpop.f32.mrf.mxu0
    %758 = vdwg.mxu0
    %v759 = vrcp.pop %v741
    %v760 = vmul.f32 1.0, %v759
    %v761 = vrcp.pop %v746
    %v762 = vmul.f32 1.0, %v761
    %v763 = vrcp.pop %v751
    %v764 = vmul.f32 1.0, %v763
    %v765 = vrcp.pop %v756
    %v766 = vmul.f32 1.0, %v765
    %vm767 = vcmask 31744
    %v769 = vsel %vm767, %v760, 0
    %v772 = vsel %vm767, %v762, 0
    %v775 = vsel %vm767, %v764, 0
    %v778 = vsel %vm767, %v766, 0
    %vm780 = vcmask 1043456
    %v782 = vsel %vm780, %v68, 0
    %784 = vmatprep.subr.mxu0 0.0
    %785 = vmatpush1.msra.mxu0 0.0
    %786 = vmatprep.subr.mxu0 0.0
    %787 = vmatpush1.msra.mxu0 0.0
    %788 = vmatprep.subr.mxu0 0.0
    %789 = vmatpush1.msra.mxu0 0.0
    %790 = vmatprep.subr.mxu0 0.0
    %791 = vmatpush1.msra.mxu0 0.0
    %792 = vmatprep.subr.mxu0 0.0
    %793 = vmatpush1.msra.mxu0 0.0
    %794 = vmatprep.subr.mxu0 0.0
    %795 = vmatpush1.msra.mxu0 0.0
    %796 = vmatprep.subr.mxu0 0.0
    %797 = vmatpush1.msra.mxu0 0.0
    %798 = vmatprep.subr.mxu0 0.0
    %799 = vmatpush1.msra.mxu0 0.0
    %800 = vmatprep.subr.mxu0 0.0
    %801 = vmatpush1.msra.mxu0 0.0
    %802 = vmatprep.subr.mxu0 0.0
    %803 = vmatpush1.msra.mxu0 0.0
    %804 = vmatprep.subr.mxu0 0.0
    %805 = vmatpush1.msra.mxu0 0.0
    %806 = vmatprep.subr.mxu0 0.0
    %807 = vmatpush1.msra.mxu0 0.0
    %808 = vmatprep.subr.mxu0 0.0
    %809 = vmatpush1.msra.mxu0 0.0
    %810 = vmatprep.subr.mxu0 0.0
    %811 = vmatpush1.msra.mxu0 0.0
    %812 = vmatprep.subr.mxu0 0.0
    %813 = vmatpush1.msra.mxu0 0.0
    %814 = vmatprep.subr.mxu0 0.0
    %815 = vmatpush1.msra.mxu0 %v782
    %816 = vmatprep.subr.mxu0 0.0
    %817 = vmatpush2.msra.mxu0 0.0
    %818 = vmatprep.subr.mxu0 0.0
    %819 = vmatpush2.msra.mxu0 0.0
    %820 = vmatprep.subr.mxu0 0.0
    %821 = vmatpush2.msra.mxu0 0.0
    %822 = vmatprep.subr.mxu0 0.0
    %823 = vmatpush2.msra.mxu0 0.0
    %824 = vmatprep.subr.mxu0 0.0
    %825 = vmatpush2.msra.mxu0 0.0
    %826 = vmatprep.subr.mxu0 0.0
    %827 = vmatpush2.msra.mxu0 0.0
    %828 = vmatprep.subr.mxu0 0.0
    %829 = vmatpush2.msra.mxu0 0.0
    %830 = vmatprep.subr.mxu0 0.0
    %831 = vmatpush2.msra.mxu0 0.0
    %832 = vmatprep.subr.mxu0 0.0
    %833 = vmatpush2.msra.mxu0 0.0
    %834 = vmatprep.subr.mxu0 0.0
    %835 = vmatpush2.msra.mxu0 0.0
    %836 = vmatprep.subr.mxu0 0.0
    %837 = vmatpush2.msra.mxu0 0.0
    %838 = vmatprep.subr.mxu0 0.0
    %839 = vmatpush2.msra.mxu0 0.0
    %840 = vmatprep.subr.mxu0 0.0
    %841 = vmatpush2.msra.mxu0 0.0
    %842 = vmatprep.subr.mxu0 0.0
    %843 = vmatpush2.msra.mxu0 0.0
    %844 = vmatprep.subr.mxu0 0.0
    %845 = vmatpush2.msra.mxu0 0.0
    %846 = vmatprep.subr.mxu0 0.0
    %847 = vmatpush2.msra.mxu0 0.0
    %848 = vmatprep.mubr.f32.mxu0 0.0
    %849 = vmatmul.mubr.f32.gmra.mxu0 %v769
    %v850 = vpop.f32.mrf.mxu0
    %v851 = vadd.f32 0.0, %v850
    %v852 = vpop.f32.mrf.mxu0
    %853 = vmatprep.mubr.f32.mxu0 0.0
    %854 = vmatmul.mubr.f32.gmra.mxu0 %v772
    %v855 = vpop.f32.mrf.mxu0
    %v856 = vadd.f32 0.0, %v855
    %v857 = vpop.f32.mrf.mxu0
    %858 = vmatprep.mubr.f32.mxu0 0.0
    %859 = vmatmul.mubr.f32.gmra.mxu0 %v775
    %v860 = vpop.f32.mrf.mxu0
    %v861 = vadd.f32 0.0, %v860
    %v862 = vpop.f32.mrf.mxu0
    %863 = vmatprep.mubr.f32.mxu0 0.0
    %864 = vmatmul.mubr.f32.gmra.mxu0 %v778
    %v865 = vpop.f32.mrf.mxu0
    %v866 = vadd.f32 0.0, %v865
    %v867 = vpop.f32.mrf.mxu0
    %868 = vdwg.mxu0
    %v869 = vmul.f32 %v656, %v851
    %v870 = vmul.f32 %v661, %v856
    %v871 = vmul.f32 %v666, %v861
    %v872 = vmul.f32 %v671, %v866
    %v873 = vadd.f32 %v44, %v869
    %v874 = vadd.f32 %v45, %v870
    %v875 = vadd.f32 %v46, %v871
    %v876 = vadd.f32 %v47, %v872
    %s877 = scalar_lea.vmem %s2, 16
    %v878 = vld [vmem:[%s877] sm:$0xff]
    %v879 = vld [vmem:[%s877 + $0x8] sm:$0xff]
    %v881 = vsel %vm86, %v873, 0
    %v884 = vsel %vm86, %v874, 0
    %v887 = vsel %vm86, %v875, 0
    %v890 = vsel %vm86, %v876, 0
    %892 = vmatprep.subr.mxu0 0.0
    %893 = vmatpush1.msra.mxu0 0.0
    %894 = vmatprep.subr.mxu0 0.0
    %895 = vmatpush1.msra.mxu0 0.0
    %896 = vmatprep.subr.mxu0 0.0
    %897 = vmatpush1.msra.mxu0 0.0
    %898 = vmatprep.subr.mxu0 0.0
    %899 = vmatpush1.msra.mxu0 0.0
    %900 = vmatprep.subr.mxu0 0.0
    %901 = vmatpush1.msra.mxu0 0.0
    %902 = vmatprep.subr.mxu0 0.0
    %903 = vmatpush1.msra.mxu0 0.0
    %904 = vmatprep.subr.mxu0 0.0
    %905 = vmatpush1.msra.mxu0 0.0
    %906 = vmatprep.subr.mxu0 0.0
    %907 = vmatpush1.msra.mxu0 0.0
    %908 = vmatprep.subr.mxu0 0.0
    %909 = vmatpush1.msra.mxu0 0.0
    %910 = vmatprep.subr.mxu0 0.0
    %911 = vmatpush1.msra.mxu0 0.0
    %912 = vmatprep.subr.mxu0 0.0
    %913 = vmatpush1.msra.mxu0 0.0
    %914 = vmatprep.subr.mxu0 0.0
    %915 = vmatpush1.msra.mxu0 0.0
    %916 = vmatprep.subr.mxu0 0.0
    %917 = vmatpush1.msra.mxu0 0.0
    %918 = vmatprep.subr.mxu0 0.0
    %919 = vmatpush1.msra.mxu0 0.0
    %920 = vmatprep.subr.mxu0 0.0
    %921 = vmatpush1.msra.mxu0 %v879
    %922 = vmatprep.subr.mxu0 0.0
    %923 = vmatpush1.msra.mxu0 %v878
    %924 = vmatprep.subr.mxu0 0.0
    %925 = vmatpush2.msra.mxu0 0.0
    %926 = vmatprep.subr.mxu0 0.0
    %927 = vmatpush2.msra.mxu0 0.0
    %928 = vmatprep.subr.mxu0 0.0
    %929 = vmatpush2.msra.mxu0 0.0
    %930 = vmatprep.subr.mxu0 0.0
    %931 = vmatpush2.msra.mxu0 0.0
    %932 = vmatprep.subr.mxu0 0.0
    %933 = vmatpush2.msra.mxu0 0.0
    %934 = vmatprep.subr.mxu0 0.0
    %935 = vmatpush2.msra.mxu0 0.0
    %936 = vmatprep.subr.mxu0 0.0
    %937 = vmatpush2.msra.mxu0 0.0
    %938 = vmatprep.subr.mxu0 0.0
    %939 = vmatpush2.msra.mxu0 0.0
    %940 = vmatprep.subr.mxu0 0.0
    %941 = vmatpush2.msra.mxu0 0.0
    %942 = vmatprep.subr.mxu0 0.0
    %943 = vmatpush2.msra.mxu0 0.0
    %944 = vmatprep.subr.mxu0 0.0
    %945 = vmatpush2.msra.mxu0 0.0
    %946 = vmatprep.subr.mxu0 0.0
    %947 = vmatpush2.msra.mxu0 0.0
    %948 = vmatprep.subr.mxu0 0.0
    %949 = vmatpush2.msra.mxu0 0.0
    %950 = vmatprep.subr.mxu0 0.0
    %951 = vmatpush2.msra.mxu0 0.0
    %952 = vmatprep.subr.mxu0 0.0
    %953 = vmatpush2.msra.mxu0 0.0
    %954 = vmatprep.subr.mxu0 0.0
    %955 = vmatpush2.msra.mxu0 0.0
    %956 = vmatprep.mubr.f32.mxu0 0.0
    %957 = vmatmul.mubr.f32.gmra.mxu0 %v881
    %v958 = vpop.f32.mrf.mxu0
    %v959 = vadd.f32 0.0, %v958
    %v960 = vpop.f32.mrf.mxu0
    %961 = vmatprep.mubr.f32.mxu0 0.0
    %962 = vmatmul.mubr.f32.gmra.mxu0 %v884
    %v963 = vpop.f32.mrf.mxu0
    %v964 = vadd.f32 0.0, %v963
    %v965 = vpop.f32.mrf.mxu0
    %966 = vmatprep.mubr.f32.mxu0 0.0
    %967 = vmatmul.mubr.f32.gmra.mxu0 %v887
    %v968 = vpop.f32.mrf.mxu0
    %v969 = vadd.f32 0.0, %v968
    %v970 = vpop.f32.mrf.mxu0
    %971 = vmatprep.mubr.f32.mxu0 0.0
    %972 = vmatmul.mubr.f32.gmra.mxu0 %v890
    %v973 = vpop.f32.mrf.mxu0
    %v974 = vadd.f32 0.0, %v973
    %v975 = vpop.f32.mrf.mxu0
    %976 = vdwg.mxu0
    %977 = vst.msk [vmem:[#allocation2] sm:$0xff] %vm86, %v873
    %978 = vst.msk [vmem:[#allocation2 + $0x8] sm:$0xff] %vm86, %v874
    %979 = vst.msk [vmem:[#allocation2 + $0x10] sm:$0xff] %vm86, %v875
    %980 = vst.msk [vmem:[#allocation2 + $0x18] sm:$0xff] %vm86, %v876
    %981 = vrot.lane.b32.xlu0 %v873, 16
    %v982 = vpop.permute.xlu0 %981
    %983 = vrot.lane.b32.xlu0 %v874, 16
    %v984 = vpop.permute.xlu0 %983
    %985 = vrot.lane.b32.xlu0 %v875, 16
    %v986 = vpop.permute.xlu0 %985
    %987 = vrot.lane.b32.xlu0 %v876, 16
    %v988 = vpop.permute.xlu0 %987
    %993 = vst.msk [vmem:[#allocation2 + $0x20] sm:$0xff] %vm218, %v982
    %994 = vst.msk [vmem:[#allocation2 + $0x28] sm:$0xff] %vm218, %v984
    %995 = vst.msk [vmem:[#allocation2 + $0x30] sm:$0xff] %vm218, %v986
    %996 = vst.msk [vmem:[#allocation2 + $0x38] sm:$0xff] %vm218, %v988
    %997 = vrot.lane.b32.xlu0 %v873, 32
    %v998 = vpop.permute.xlu0 %997
    %999 = vrot.lane.b32.xlu0 %v874, 32
    %v1000 = vpop.permute.xlu0 %999
    %1001 = vrot.lane.b32.xlu0 %v875, 32
    %v1002 = vpop.permute.xlu0 %1001
    %1003 = vrot.lane.b32.xlu0 %v876, 32
    %v1004 = vpop.permute.xlu0 %1003
    %1009 = vst.msk [vmem:[#allocation2 + $0x40] sm:$0xff] %vm235, %v998
    %1010 = vst.msk [vmem:[#allocation2 + $0x48] sm:$0xff] %vm235, %v1000
    %1011 = vst.msk [vmem:[#allocation2 + $0x50] sm:$0xff] %vm235, %v1002
    %1012 = vst.msk [vmem:[#allocation2 + $0x58] sm:$0xff] %vm235, %v1004
    %1013 = vrot.lane.b32.xlu0 %v873, 48
    %v1014 = vpop.permute.xlu0 %1013
    %1015 = vrot.lane.b32.xlu0 %v874, 48
    %v1016 = vpop.permute.xlu0 %1015
    %1017 = vrot.lane.b32.xlu0 %v875, 48
    %v1018 = vpop.permute.xlu0 %1017
    %1019 = vrot.lane.b32.xlu0 %v876, 48
    %v1020 = vpop.permute.xlu0 %1019
    %1025 = vst.msk [vmem:[#allocation2 + $0x60] sm:$0xff] %vm252, %v1014
    %1026 = vst.msk [vmem:[#allocation2 + $0x68] sm:$0xff] %vm252, %v1016
    %1027 = vst.msk [vmem:[#allocation2 + $0x70] sm:$0xff] %vm252, %v1018
    %1028 = vst.msk [vmem:[#allocation2 + $0x78] sm:$0xff] %vm252, %v1020
    %v1029 = vld [vmem:[#allocation2] sm:$0xff]
    %v1030 = vld [vmem:[#allocation2 + $0x8] sm:$0xff]
    %v1031 = vld [vmem:[#allocation2 + $0x10] sm:$0xff]
    %v1032 = vld [vmem:[#allocation2 + $0x18] sm:$0xff]
    %v1033 = vld [vmem:[#allocation2 + $0x20] sm:$0xff]
    %v1034 = vld [vmem:[#allocation2 + $0x28] sm:$0xff]
    %v1035 = vld [vmem:[#allocation2 + $0x30] sm:$0xff]
    %v1036 = vld [vmem:[#allocation2 + $0x38] sm:$0xff]
    %v1037 = vld [vmem:[#allocation2 + $0x40] sm:$0xff]
    %v1038 = vld [vmem:[#allocation2 + $0x48] sm:$0xff]
    %v1039 = vld [vmem:[#allocation2 + $0x50] sm:$0xff]
    %v1040 = vld [vmem:[#allocation2 + $0x58] sm:$0xff]
    %v1041 = vld [vmem:[#allocation2 + $0x60] sm:$0xff]
    %v1042 = vld [vmem:[#allocation2 + $0x68] sm:$0xff]
    %v1043 = vld [vmem:[#allocation2 + $0x70] sm:$0xff]
    %v1044 = vld [vmem:[#allocation2 + $0x78] sm:$0xff]
    %v1046 = vsel %vm69, %v959, 0
    %v1049 = vsel %vm69, %v964, 0
    %v1052 = vsel %vm69, %v969, 0
    %v1055 = vsel %vm69, %v974, 0
    %v1058 = vsel %vm69, %v1029, 0
    %v1061 = vsel %vm69, %v1030, 0
    %v1064 = vsel %vm69, %v1031, 0
    %v1067 = vsel %vm69, %v1032, 0
    %v1070 = vsel %vm69, %v1033, 0
    %v1073 = vsel %vm69, %v1034, 0
    %v1076 = vsel %vm69, %v1035, 0
    %v1079 = vsel %vm69, %v1036, 0
    %v1082 = vsel %vm69, %v1037, 0
    %v1085 = vsel %vm69, %v1038, 0
    %v1088 = vsel %vm69, %v1039, 0
    %v1091 = vsel %vm69, %v1040, 0
    %v1094 = vsel %vm69, %v1041, 0
    %v1097 = vsel %vm69, %v1042, 0
    %v1100 = vsel %vm69, %v1043, 0
    %v1103 = vsel %vm69, %v1044, 0
    %1105 = vmatprep.subr.mxu0 0.0
    %1106 = vmatpush1.xpose.msra.mxu0 %v1103
    %1107 = vmatprep.subr.mxu0 0.0
    %1108 = vmatpush1.xpose.msra.mxu0 %v1100
    %1109 = vmatprep.subr.mxu0 0.0
    %1110 = vmatpush1.xpose.msra.mxu0 %v1097
    %1111 = vmatprep.subr.mxu0 0.0
    %1112 = vmatpush1.xpose.msra.mxu0 %v1094
    %1113 = vmatprep.subr.mxu0 0.0
    %1114 = vmatpush1.xpose.msra.mxu0 %v1091
    %1115 = vmatprep.subr.mxu0 0.0
    %1116 = vmatpush1.xpose.msra.mxu0 %v1088
    %1117 = vmatprep.subr.mxu0 0.0
    %1118 = vmatpush1.xpose.msra.mxu0 %v1085
    %1119 = vmatprep.subr.mxu0 0.0
    %1120 = vmatpush1.xpose.msra.mxu0 %v1082
    %1121 = vmatprep.subr.mxu0 0.0
    %1122 = vmatpush1.xpose.msra.mxu0 %v1079
    %1123 = vmatprep.subr.mxu0 0.0
    %1124 = vmatpush1.xpose.msra.mxu0 %v1076
    %1125 = vmatprep.subr.mxu0 0.0
    %1126 = vmatpush1.xpose.msra.mxu0 %v1073
    %1127 = vmatprep.subr.mxu0 0.0
    %1128 = vmatpush1.xpose.msra.mxu0 %v1070
    %1129 = vmatprep.subr.mxu0 0.0
    %1130 = vmatpush1.xpose.msra.mxu0 %v1067
    %1131 = vmatprep.subr.mxu0 0.0
    %1132 = vmatpush1.xpose.msra.mxu0 %v1064
    %1133 = vmatprep.subr.mxu0 0.0
    %1134 = vmatpush1.xpose.msra.mxu0 %v1061
    %1135 = vmatprep.subr.mxu0 0.0
    %1136 = vmatpush1.xpose.msra.mxu0 %v1058
    %1137 = vmatprep.subr.mxu0 0.0
    %1138 = vmatpush2.xpose.msra.mxu0 0.0
    %1139 = vmatprep.subr.mxu0 0.0
    %1140 = vmatpush2.xpose.msra.mxu0 0.0
    %1141 = vmatprep.subr.mxu0 0.0
    %1142 = vmatpush2.xpose.msra.mxu0 0.0
    %1143 = vmatprep.subr.mxu0 0.0
    %1144 = vmatpush2.xpose.msra.mxu0 0.0
    %1145 = vmatprep.subr.mxu0 0.0
    %1146 = vmatpush2.xpose.msra.mxu0 0.0
    %1147 = vmatprep.subr.mxu0 0.0
    %1148 = vmatpush2.xpose.msra.mxu0 0.0
    %1149 = vmatprep.subr.mxu0 0.0
    %1150 = vmatpush2.xpose.msra.mxu0 0.0
    %1151 = vmatprep.subr.mxu0 0.0
    %1152 = vmatpush2.xpose.msra.mxu0 0.0
    %1153 = vmatprep.subr.mxu0 0.0
    %1154 = vmatpush2.xpose.msra.mxu0 0.0
    %1155 = vmatprep.subr.mxu0 0.0
    %1156 = vmatpush2.xpose.msra.mxu0 0.0
    %1157 = vmatprep.subr.mxu0 0.0
    %1158 = vmatpush2.xpose.msra.mxu0 0.0
    %1159 = vmatprep.subr.mxu0 0.0
    %1160 = vmatpush2.xpose.msra.mxu0 0.0
    %1161 = vmatprep.subr.mxu0 0.0
    %1162 = vmatpush2.xpose.msra.mxu0 0.0
    %1163 = vmatprep.subr.mxu0 0.0
    %1164 = vmatpush2.xpose.msra.mxu0 0.0
    %1165 = vmatprep.subr.mxu0 0.0
    %1166 = vmatpush2.xpose.msra.mxu0 0.0
    %1167 = vmatprep.subr.mxu0 0.0
    %1168 = vmatpush2.xpose.msra.mxu0 0.0
    %1169 = vmatprep.mubr.f32.mxu0 0.0
    %1170 = vmatmul.mubr.f32.gmra.mxu0 %v1046
    %v1171 = vpop.f32.mrf.mxu0
    %v1172 = vadd.f32 %v48, %v1171
    %v1173 = vpop.f32.mrf.mxu0
    %1174 = vmatprep.mubr.f32.mxu0 0.0
    %1175 = vmatmul.mubr.f32.gmra.mxu0 %v1049
    %v1176 = vpop.f32.mrf.mxu0
    %v1177 = vadd.f32 %v49, %v1176
    %v1178 = vpop.f32.mrf.mxu0
    %1179 = vmatprep.mubr.f32.mxu0 0.0
    %1180 = vmatmul.mubr.f32.gmra.mxu0 %v1052
    %v1181 = vpop.f32.mrf.mxu0
    %v1182 = vadd.f32 %v50, %v1181
    %v1183 = vpop.f32.mrf.mxu0
    %1184 = vmatprep.mubr.f32.mxu0 0.0
    %1185 = vmatmul.mubr.f32.gmra.mxu0 %v1055
    %v1186 = vpop.f32.mrf.mxu0
    %v1187 = vadd.f32 %v51, %v1186
    %v1188 = vpop.f32.mrf.mxu0
    %1189 = vdwg.mxu0
    %1190 = vmax.xlane.f32.xlu0 %v1172
    %v1191 = vpop.xlane.xlu0 %1190
    %1192 = vmax.xlane.f32.xlu0 %v1177
    %v1193 = vpop.xlane.xlu0 %1192
    %1194 = vmax.xlane.f32.xlu0 %v1182
    %v1195 = vpop.xlane.xlu0 %1194
    %1196 = vmax.xlane.f32.xlu0 %v1187
    %v1197 = vpop.xlane.xlu0 %1196
    %v1198 = vsub.f32 %v1172, %v1191
    %v1199 = vsub.f32 %v1177, %v1193
    %v1200 = vsub.f32 %v1182, %v1195
    %v1201 = vsub.f32 %v1187, %v1197
    %v1202 = vmul.f32 %v1198, 1.442695
    %v1203 = vpow.pop %v1202
    %v1204 = vmul.f32 %v1199, 1.442695
    %v1205 = vpow.pop %v1204
    %v1206 = vmul.f32 %v1200, 1.442695
    %v1207 = vpow.pop %v1206
    %v1208 = vmul.f32 %v1201, 1.442695
    %v1209 = vpow.pop %v1208
    %s1210 = scalar_lea.vmem [#allocation4], 16
    %v1211 = vld [vmem:[%s1210] sm:$0xff]
    %v1212 = vld [vmem:[%s1210 + $0x8] sm:$0xff]
    %1213 = vmatprep.subr.mxu0 0.0
    %1214 = vmatpush1.msra.mxu0 0.0
    %1215 = vmatprep.subr.mxu0 0.0
    %1216 = vmatpush1.msra.mxu0 0.0
    %1217 = vmatprep.subr.mxu0 0.0
    %1218 = vmatpush1.msra.mxu0 0.0
    %1219 = vmatprep.subr.mxu0 0.0
    %1220 = vmatpush1.msra.mxu0 0.0
    %1221 = vmatprep.subr.mxu0 0.0
    %1222 = vmatpush1.msra.mxu0 0.0
    %1223 = vmatprep.subr.mxu0 0.0
    %1224 = vmatpush1.msra.mxu0 0.0
    %1225 = vmatprep.subr.mxu0 0.0
    %1226 = vmatpush1.msra.mxu0 0.0
    %1227 = vmatprep.subr.mxu0 0.0
    %1228 = vmatpush1.msra.mxu0 0.0
    %1229 = vmatprep.subr.mxu0 0.0
    %1230 = vmatpush1.msra.mxu0 0.0
    %1231 = vmatprep.subr.mxu0 0.0
    %1232 = vmatpush1.msra.mxu0 0.0
    %1233 = vmatprep.subr.mxu0 0.0
    %1234 = vmatpush1.msra.mxu0 0.0
    %1235 = vmatprep.subr.mxu0 0.0
    %1236 = vmatpush1.msra.mxu0 0.0
    %1237 = vmatprep.subr.mxu0 0.0
    %1238 = vmatpush1.msra.mxu0 0.0
    %1239 = vmatprep.subr.mxu0 0.0
    %1240 = vmatpush1.msra.mxu0 0.0
    %1241 = vmatprep.subr.mxu0 0.0
    %1242 = vmatpush1.msra.mxu0 %v1212
    %1243 = vmatprep.subr.mxu0 0.0
    %1244 = vmatpush1.msra.mxu0 %v1211
    %1245 = vmatprep.subr.mxu0 0.0
    %1246 = vmatpush2.msra.mxu0 0.0
    %1247 = vmatprep.subr.mxu0 0.0
    %1248 = vmatpush2.msra.mxu0 0.0
    %1249 = vmatprep.subr.mxu0 0.0
    %1250 = vmatpush2.msra.mxu0 0.0
    %1251 = vmatprep.subr.mxu0 0.0
    %1252 = vmatpush2.msra.mxu0 0.0
    %1253 = vmatprep.subr.mxu0 0.0
    %1254 = vmatpush2.msra.mxu0 0.0
    %1255 = vmatprep.subr.mxu0 0.0
    %1256 = vmatpush2.msra.mxu0 0.0
    %1257 = vmatprep.subr.mxu0 0.0
    %1258 = vmatpush2.msra.mxu0 0.0
    %1259 = vmatprep.subr.mxu0 0.0
    %1260 = vmatpush2.msra.mxu0 0.0
    %1261 = vmatprep.subr.mxu0 0.0
    %1262 = vmatpush2.msra.mxu0 0.0
    %1263 = vmatprep.subr.mxu0 0.0
    %1264 = vmatpush2.msra.mxu0 0.0
    %1265 = vmatprep.subr.mxu0 0.0
    %1266 = vmatpush2.msra.mxu0 0.0
    %1267 = vmatprep.subr.mxu0 0.0
    %1268 = vmatpush2.msra.mxu0 0.0
    %1269 = vmatprep.subr.mxu0 0.0
    %1270 = vmatpush2.msra.mxu0 0.0
    %1271 = vmatprep.subr.mxu0 0.0
    %1272 = vmatpush2.msra.mxu0 0.0
    %1273 = vmatprep.subr.mxu0 0.0
    %1274 = vmatpush2.msra.mxu0 0.0
    %1275 = vmatprep.subr.mxu0 0.0
    %1276 = vmatpush2.msra.mxu0 0.0
    %1277 = vmatprep.mubr.f32.mxu0 0.0
    %1278 = vmatmul.mubr.f32.gmra.mxu0 %v881
    %v1279 = vpop.f32.mrf.mxu0
    %v1280 = vadd.f32 0.0, %v1279
    %v1281 = vpop.f32.mrf.mxu0
    %1282 = vmatprep.mubr.f32.mxu0 0.0
    %1283 = vmatmul.mubr.f32.gmra.mxu0 %v884
    %v1284 = vpop.f32.mrf.mxu0
    %v1285 = vadd.f32 0.0, %v1284
    %v1286 = vpop.f32.mrf.mxu0
    %1287 = vmatprep.mubr.f32.mxu0 0.0
    %1288 = vmatmul.mubr.f32.gmra.mxu0 %v887
    %v1289 = vpop.f32.mrf.mxu0
    %v1290 = vadd.f32 0.0, %v1289
    %v1291 = vpop.f32.mrf.mxu0
    %1292 = vmatprep.mubr.f32.mxu0 0.0
    %1293 = vmatmul.mubr.f32.gmra.mxu0 %v890
    %v1294 = vpop.f32.mrf.mxu0
    %v1295 = vadd.f32 0.0, %v1294
    %v1296 = vpop.f32.mrf.mxu0
    %1297 = vdwg.mxu0
    %v1298 = vmul.f32 %v1280, %v528
    %v1299 = vmul.f32 %v1285, %v528
    %v1300 = vmul.f32 %v1290, %v528
    %v1301 = vmul.f32 %v1295, %v528
    %1302 = vst.msk [vmem:[#allocation3] sm:$0xff] %vm86, %v1298
    %1303 = vst.msk [vmem:[#allocation3 + $0x8] sm:$0xff] %vm86, %v1299
    %1304 = vst.msk [vmem:[#allocation3 + $0x10] sm:$0xff] %vm86, %v1300
    %1305 = vst.msk [vmem:[#allocation3 + $0x18] sm:$0xff] %vm86, %v1301
    %v1306 = vmul.f32 %v1280, %v540
    %v1307 = vmul.f32 %v1285, %v540
    %v1308 = vmul.f32 %v1290, %v540
    %v1309 = vmul.f32 %v1295, %v540
    %1310 = vst.msk [vmem:[#allocation3 + $0x20] sm:$0xff] %vm86, %v1306
    %1311 = vst.msk [vmem:[#allocation3 + $0x28] sm:$0xff] %vm86, %v1307
    %1312 = vst.msk [vmem:[#allocation3 + $0x30] sm:$0xff] %vm86, %v1308
    %1313 = vst.msk [vmem:[#allocation3 + $0x38] sm:$0xff] %vm86, %v1309
    %v1314 = vmul.f32 %v1280, %v552
    %v1315 = vmul.f32 %v1285, %v552
    %v1316 = vmul.f32 %v1290, %v552
    %v1317 = vmul.f32 %v1295, %v552
    %1318 = vst.msk [vmem:[#allocation3 + $0x40] sm:$0xff] %vm86, %v1314
    %1319 = vst.msk [vmem:[#allocation3 + $0x48] sm:$0xff] %vm86, %v1315
    %1320 = vst.msk [vmem:[#allocation3 + $0x50] sm:$0xff] %vm86, %v1316
    %1321 = vst.msk [vmem:[#allocation3 + $0x58] sm:$0xff] %vm86, %v1317
    %v1322 = vmul.f32 %v1280, %v564
    %v1323 = vmul.f32 %v1285, %v564
    %v1324 = vmul.f32 %v1290, %v564
    %v1325 = vmul.f32 %v1295, %v564
    %1326 = vst.msk [vmem:[#allocation3 + $0x60] sm:$0xff] %vm86, %v1322
    %1327 = vst.msk [vmem:[#allocation3 + $0x68] sm:$0xff] %vm86, %v1323
    %1328 = vst.msk [vmem:[#allocation3 + $0x70] sm:$0xff] %vm86, %v1324
    %1329 = vst.msk [vmem:[#allocation3 + $0x78] sm:$0xff] %vm86, %v1325
    %v1330 = vld [vmem:[#allocation3] sm:$0xff]
    %v1331 = vld [vmem:[#allocation3 + $0x8] sm:$0xff]
    %v1332 = vld [vmem:[#allocation3 + $0x10] sm:$0xff]
    %v1333 = vld [vmem:[#allocation3 + $0x18] sm:$0xff]
    %v1334 = vld [vmem:[#allocation3 + $0x20] sm:$0xff]
    %v1335 = vld [vmem:[#allocation3 + $0x28] sm:$0xff]
    %v1336 = vld [vmem:[#allocation3 + $0x30] sm:$0xff]
    %v1337 = vld [vmem:[#allocation3 + $0x38] sm:$0xff]
    %v1338 = vld [vmem:[#allocation3 + $0x40] sm:$0xff]
    %v1339 = vld [vmem:[#allocation3 + $0x48] sm:$0xff]
    %v1340 = vld [vmem:[#allocation3 + $0x50] sm:$0xff]
    %v1341 = vld [vmem:[#allocation3 + $0x58] sm:$0xff]
    %v1342 = vld [vmem:[#allocation3 + $0x60] sm:$0xff]
    %v1343 = vld [vmem:[#allocation3 + $0x68] sm:$0xff]
    %v1344 = vld [vmem:[#allocation3 + $0x70] sm:$0xff]
    %v1345 = vld [vmem:[#allocation3 + $0x78] sm:$0xff]
    %1346 = vmatprep.subr.mxu0 0.0
    %1347 = vmatpush1.msra.mxu0 %v1345
    %1348 = vmatprep.subr.mxu0 0.0
    %1349 = vmatpush1.msra.mxu0 %v1344
    %1350 = vmatprep.subr.mxu0 0.0
    %1351 = vmatpush1.msra.mxu0 %v1343
    %1352 = vmatprep.subr.mxu0 0.0
    %1353 = vmatpush1.msra.mxu0 %v1342
    %1354 = vmatprep.subr.mxu0 0.0
    %1355 = vmatpush1.msra.mxu0 %v1341
    %1356 = vmatprep.subr.mxu0 0.0
    %1357 = vmatpush1.msra.mxu0 %v1340
    %1358 = vmatprep.subr.mxu0 0.0
    %1359 = vmatpush1.msra.mxu0 %v1339
    %1360 = vmatprep.subr.mxu0 0.0
    %1361 = vmatpush1.msra.mxu0 %v1338
    %1362 = vmatprep.subr.mxu0 0.0
    %1363 = vmatpush1.msra.mxu0 %v1337
    %1364 = vmatprep.subr.mxu0 0.0
    %1365 = vmatpush1.msra.mxu0 %v1336
    %1366 = vmatprep.subr.mxu0 0.0
    %1367 = vmatpush1.msra.mxu0 %v1335
    %1368 = vmatprep.subr.mxu0 0.0
    %1369 = vmatpush1.msra.mxu0 %v1334
    %1370 = vmatprep.subr.mxu0 0.0
    %1371 = vmatpush1.msra.mxu0 %v1333
    %1372 = vmatprep.subr.mxu0 0.0
    %1373 = vmatpush1.msra.mxu0 %v1332
    %1374 = vmatprep.subr.mxu0 0.0
    %1375 = vmatpush1.msra.mxu0 %v1331
    %1376 = vmatprep.subr.mxu0 0.0
    %1377 = vmatpush1.msra.mxu0 %v1330
    %1378 = vmatprep.subr.mxu0 0.0
    %1379 = vmatpush2.msra.mxu0 0.0
    %1380 = vmatprep.subr.mxu0 0.0
    %1381 = vmatpush2.msra.mxu0 0.0
    %1382 = vmatprep.subr.mxu0 0.0
    %1383 = vmatpush2.msra.mxu0 0.0
    %1384 = vmatprep.subr.mxu0 0.0
    %1385 = vmatpush2.msra.mxu0 0.0
    %1386 = vmatprep.subr.mxu0 0.0
    %1387 = vmatpush2.msra.mxu0 0.0
    %1388 = vmatprep.subr.mxu0 0.0
    %1389 = vmatpush2.msra.mxu0 0.0
    %1390 = vmatprep.subr.mxu0 0.0
    %1391 = vmatpush2.msra.mxu0 0.0
    %1392 = vmatprep.subr.mxu0 0.0
    %1393 = vmatpush2.msra.mxu0 0.0
    %1394 = vmatprep.subr.mxu0 0.0
    %1395 = vmatpush2.msra.mxu0 0.0
    %1396 = vmatprep.subr.mxu0 0.0
    %1397 = vmatpush2.msra.mxu0 0.0
    %1398 = vmatprep.subr.mxu0 0.0
    %1399 = vmatpush2.msra.mxu0 0.0
    %1400 = vmatprep.subr.mxu0 0.0
    %1401 = vmatpush2.msra.mxu0 0.0
    %1402 = vmatprep.subr.mxu0 0.0
    %1403 = vmatpush2.msra.mxu0 0.0
    %1404 = vmatprep.subr.mxu0 0.0
    %1405 = vmatpush2.msra.mxu0 0.0
    %1406 = vmatprep.subr.mxu0 0.0
    %1407 = vmatpush2.msra.mxu0 0.0
    %1408 = vmatprep.subr.mxu0 0.0
    %1409 = vmatpush2.msra.mxu0 0.0
    %1410 = vmatprep.mubr.f32.mxu0 0.0
    %1411 = vmatmul.mubr.f32.gmra.mxu0 %v1203
    %v1412 = vpop.f32.mrf.mxu0
    %v1413 = vadd.f32 0.0, %v1412
    %v1414 = vpop.f32.mrf.mxu0
    %1415 = vmatprep.mubr.f32.mxu0 0.0
    %1416 = vmatmul.mubr.f32.gmra.mxu0 %v1205
    %v1417 = vpop.f32.mrf.mxu0
    %v1418 = vadd.f32 0.0, %v1417
    %v1419 = vpop.f32.mrf.mxu0
    %1420 = vmatprep.mubr.f32.mxu0 0.0
    %1421 = vmatmul.mubr.f32.gmra.mxu0 %v1207
    %v1422 = vpop.f32.mrf.mxu0
    %v1423 = vadd.f32 0.0, %v1422
    %v1424 = vpop.f32.mrf.mxu0
    %1425 = vmatprep.mubr.f32.mxu0 0.0
    %1426 = vmatmul.mubr.f32.gmra.mxu0 %v1209
    %v1427 = vpop.f32.mrf.mxu0
    %v1428 = vadd.f32 0.0, %v1427
    %v1429 = vpop.f32.mrf.mxu0
    %1430 = vdwg.mxu0
    %1431 = vmatprep.subr.mxu0 0.0
    %1432 = vmatpush1.msra.mxu0 %v67
    %1433 = vmatprep.subr.mxu0 0.0
    %1434 = vmatpush1.msra.mxu0 %v66
    %1435 = vmatprep.subr.mxu0 0.0
    %1436 = vmatpush1.msra.mxu0 %v65
    %1437 = vmatprep.subr.mxu0 0.0
    %1438 = vmatpush1.msra.mxu0 %v64
    %1439 = vmatprep.subr.mxu0 0.0
    %1440 = vmatpush1.msra.mxu0 %v63
    %1441 = vmatprep.subr.mxu0 0.0
    %1442 = vmatpush1.msra.mxu0 %v62
    %1443 = vmatprep.subr.mxu0 0.0
    %1444 = vmatpush1.msra.mxu0 %v61
    %1445 = vmatprep.subr.mxu0 0.0
    %1446 = vmatpush1.msra.mxu0 %v60
    %1447 = vmatprep.subr.mxu0 0.0
    %1448 = vmatpush1.msra.mxu0 %v59
    %1449 = vmatprep.subr.mxu0 0.0
    %1450 = vmatpush1.msra.mxu0 %v58
    %1451 = vmatprep.subr.mxu0 0.0
    %1452 = vmatpush1.msra.mxu0 %v57
    %1453 = vmatprep.subr.mxu0 0.0
    %1454 = vmatpush1.msra.mxu0 %v56
    %1455 = vmatprep.subr.mxu0 0.0
    %1456 = vmatpush1.msra.mxu0 %v55
    %1457 = vmatprep.subr.mxu0 0.0
    %1458 = vmatpush1.msra.mxu0 %v54
    %1459 = vmatprep.subr.mxu0 0.0
    %1460 = vmatpush1.msra.mxu0 %v53
    %1461 = vmatprep.subr.mxu0 0.0
    %1462 = vmatpush1.msra.mxu0 %v52
    %1463 = vmatprep.subr.mxu0 0.0
    %1464 = vmatpush2.msra.mxu0 0.0
    %1465 = vmatprep.subr.mxu0 0.0
    %1466 = vmatpush2.msra.mxu0 0.0
    %1467 = vmatprep.subr.mxu0 0.0
    %1468 = vmatpush2.msra.mxu0 0.0
    %1469 = vmatprep.subr.mxu0 0.0
    %1470 = vmatpush2.msra.mxu0 0.0
    %1471 = vmatprep.subr.mxu0 0.0
    %1472 = vmatpush2.msra.mxu0 0.0
    %1473 = vmatprep.subr.mxu0 0.0
    %1474 = vmatpush2.msra.mxu0 0.0
    %1475 = vmatprep.subr.mxu0 0.0
    %1476 = vmatpush2.msra.mxu0 0.0
    %1477 = vmatprep.subr.mxu0 0.0
    %1478 = vmatpush2.msra.mxu0 0.0
    %1479 = vmatprep.subr.mxu0 0.0
    %1480 = vmatpush2.msra.mxu0 0.0
    %1481 = vmatprep.subr.mxu0 0.0
    %1482 = vmatpush2.msra.mxu0 0.0
    %1483 = vmatprep.subr.mxu0 0.0
    %1484 = vmatpush2.msra.mxu0 0.0
    %1485 = vmatprep.subr.mxu0 0.0
    %1486 = vmatpush2.msra.mxu0 0.0
    %1487 = vmatprep.subr.mxu0 0.0
    %1488 = vmatpush2.msra.mxu0 0.0
    %1489 = vmatprep.subr.mxu0 0.0
    %1490 = vmatpush2.msra.mxu0 0.0
    %1491 = vmatprep.subr.mxu0 0.0
    %1492 = vmatpush2.msra.mxu0 0.0
    %1493 = vmatprep.subr.mxu0 0.0
    %1494 = vmatpush2.msra.mxu0 0.0
    %1495 = vmatprep.mubr.f32.mxu0 0.0
    %1496 = vmatmul.mubr.f32.gmra.mxu0 %v1203
    %v1497 = vpop.f32.mrf.mxu0
    %v1498 = vadd.f32 0.0, %v1497
    %v1499 = vpop.f32.mrf.mxu0
    %1500 = vmatprep.mubr.f32.mxu0 0.0
    %1501 = vmatmul.mubr.f32.gmra.mxu0 %v1205
    %v1502 = vpop.f32.mrf.mxu0
    %v1503 = vadd.f32 0.0, %v1502
    %v1504 = vpop.f32.mrf.mxu0
    %1505 = vmatprep.mubr.f32.mxu0 0.0
    %1506 = vmatmul.mubr.f32.gmra.mxu0 %v1207
    %v1507 = vpop.f32.mrf.mxu0
    %v1508 = vadd.f32 0.0, %v1507
    %v1509 = vpop.f32.mrf.mxu0
    %1510 = vmatprep.mubr.f32.mxu0 0.0
    %1511 = vmatmul.mubr.f32.gmra.mxu0 %v1209
    %v1512 = vpop.f32.mrf.mxu0
    %v1513 = vadd.f32 0.0, %v1512
    %v1514 = vpop.f32.mrf.mxu0
    %1515 = vdwg.mxu0
    %v1516 = vrcp.pop %v1498
    %v1517 = vmul.f32 1.0, %v1516
    %v1518 = vrcp.pop %v1503
    %v1519 = vmul.f32 1.0, %v1518
    %v1520 = vrcp.pop %v1508
    %v1521 = vmul.f32 1.0, %v1520
    %v1522 = vrcp.pop %v1513
    %v1523 = vmul.f32 1.0, %v1522
    %v1525 = vsel %vm767, %v1517, 0
    %v1528 = vsel %vm767, %v1519, 0
    %v1531 = vsel %vm767, %v1521, 0
    %v1534 = vsel %vm767, %v1523, 0
    %1536 = vmatprep.subr.mxu0 0.0
    %1537 = vmatpush1.msra.mxu0 0.0
    %1538 = vmatprep.subr.mxu0 0.0
    %1539 = vmatpush1.msra.mxu0 0.0
    %1540 = vmatprep.subr.mxu0 0.0
    %1541 = vmatpush1.msra.mxu0 0.0
    %1542 = vmatprep.subr.mxu0 0.0
    %1543 = vmatpush1.msra.mxu0 0.0
    %1544 = vmatprep.subr.mxu0 0.0
    %1545 = vmatpush1.msra.mxu0 0.0
    %1546 = vmatprep.subr.mxu0 0.0
    %1547 = vmatpush1.msra.mxu0 0.0
    %1548 = vmatprep.subr.mxu0 0.0
    %1549 = vmatpush1.msra.mxu0 0.0
    %1550 = vmatprep.subr.mxu0 0.0
    %1551 = vmatpush1.msra.mxu0 0.0
    %1552 = vmatprep.subr.mxu0 0.0
    %1553 = vmatpush1.msra.mxu0 0.0
    %1554 = vmatprep.subr.mxu0 0.0
    %1555 = vmatpush1.msra.mxu0 0.0
    %1556 = vmatprep.subr.mxu0 0.0
    %1557 = vmatpush1.msra.mxu0 0.0
    %1558 = vmatprep.subr.mxu0 0.0
    %1559 = vmatpush1.msra.mxu0 0.0
    %1560 = vmatprep.subr.mxu0 0.0
    %1561 = vmatpush1.msra.mxu0 0.0
    %1562 = vmatprep.subr.mxu0 0.0
    %1563 = vmatpush1.msra.mxu0 0.0
    %1564 = vmatprep.subr.mxu0 0.0
    %1565 = vmatpush1.msra.mxu0 0.0
    %1566 = vmatprep.subr.mxu0 0.0
    %1567 = vmatpush1.msra.mxu0 %v782
    %1568 = vmatprep.subr.mxu0 0.0
    %1569 = vmatpush2.msra.mxu0 0.0
    %1570 = vmatprep.subr.mxu0 0.0
    %1571 = vmatpush2.msra.mxu0 0.0
    %1572 = vmatprep.subr.mxu0 0.0
    %1573 = vmatpush2.msra.mxu0 0.0
    %1574 = vmatprep.subr.mxu0 0.0
    %1575 = vmatpush2.msra.mxu0 0.0
    %1576 = vmatprep.subr.mxu0 0.0
    %1577 = vmatpush2.msra.mxu0 0.0
    %1578 = vmatprep.subr.mxu0 0.0
    %1579 = vmatpush2.msra.mxu0 0.0
    %1580 = vmatprep.subr.mxu0 0.0
    %1581 = vmatpush2.msra.mxu0 0.0
    %1582 = vmatprep.subr.mxu0 0.0
    %1583 = vmatpush2.msra.mxu0 0.0
    %1584 = vmatprep.subr.mxu0 0.0
    %1585 = vmatpush2.msra.mxu0 0.0
    %1586 = vmatprep.subr.mxu0 0.0
    %1587 = vmatpush2.msra.mxu0 0.0
    %1588 = vmatprep.subr.mxu0 0.0
    %1589 = vmatpush2.msra.mxu0 0.0
    %1590 = vmatprep.subr.mxu0 0.0
    %1591 = vmatpush2.msra.mxu0 0.0
    %1592 = vmatprep.subr.mxu0 0.0
    %1593 = vmatpush2.msra.mxu0 0.0
    %1594 = vmatprep.subr.mxu0 0.0
    %1595 = vmatpush2.msra.mxu0 0.0
    %1596 = vmatprep.subr.mxu0 0.0
    %1597 = vmatpush2.msra.mxu0 0.0
    %1598 = vmatprep.subr.mxu0 0.0
    %1599 = vmatpush2.msra.mxu0 0.0
    %1600 = vmatprep.mubr.f32.mxu0 0.0
    %1601 = vmatmul.mubr.f32.gmra.mxu0 %v1525
    %v1602 = vpop.f32.mrf.mxu0
    %v1603 = vadd.f32 0.0, %v1602
    %v1604 = vpop.f32.mrf.mxu0
    %1605 = vmatprep.mubr.f32.mxu0 0.0
    %1606 = vmatmul.mubr.f32.gmra.mxu0 %v1528
    %v1607 = vpop.f32.mrf.mxu0
    %v1608 = vadd.f32 0.0, %v1607
    %v1609 = vpop.f32.mrf.mxu0
    %1610 = vmatprep.mubr.f32.mxu0 0.0
    %1611 = vmatmul.mubr.f32.gmra.mxu0 %v1531
    %v1612 = vpop.f32.mrf.mxu0
    %v1613 = vadd.f32 0.0, %v1612
    %v1614 = vpop.f32.mrf.mxu0
    %1615 = vmatprep.mubr.f32.mxu0 0.0
    %1616 = vmatmul.mubr.f32.gmra.mxu0 %v1534
    %v1617 = vpop.f32.mrf.mxu0
    %v1618 = vadd.f32 0.0, %v1617
    %v1619 = vpop.f32.mrf.mxu0
    %1620 = vdwg.mxu0
    %v1621 = vmul.f32 %v1413, %v1603
    %v1622 = vmul.f32 %v1418, %v1608
    %v1623 = vmul.f32 %v1423, %v1613
    %v1624 = vmul.f32 %v1428, %v1618
    %v1625 = vadd.f32 %v873, %v1621
    %v1626 = vadd.f32 %v874, %v1622
    %v1627 = vadd.f32 %v875, %v1623
    %v1628 = vadd.f32 %v876, %v1624
    %s1629 = scalar_lea.vmem %s2, 32
    %v1630 = vld [vmem:[%s1629] sm:$0xff]
    %v1631 = vld [vmem:[%s1629 + $0x8] sm:$0xff]
    %v1633 = vsel %vm86, %v1625, 0
    %v1636 = vsel %vm86, %v1626, 0
    %v1639 = vsel %vm86, %v1627, 0
    %v1642 = vsel %vm86, %v1628, 0
    %1644 = vmatprep.subr.mxu0 0.0
    %1645 = vmatpush1.msra.mxu0 0.0
    %1646 = vmatprep.subr.mxu0 0.0
    %1647 = vmatpush1.msra.mxu0 0.0
    %1648 = vmatprep.subr.mxu0 0.0
    %1649 = vmatpush1.msra.mxu0 0.0
    %1650 = vmatprep.subr.mxu0 0.0
    %1651 = vmatpush1.msra.mxu0 0.0
    %1652 = vmatprep.subr.mxu0 0.0
    %1653 = vmatpush1.msra.mxu0 0.0
    %1654 = vmatprep.subr.mxu0 0.0
    %1655 = vmatpush1.msra.mxu0 0.0
    %1656 = vmatprep.subr.mxu0 0.0
    %1657 = vmatpush1.msra.mxu0 0.0
    %1658 = vmatprep.subr.mxu0 0.0
    %1659 = vmatpush1.msra.mxu0 0.0
    %1660 = vmatprep.subr.mxu0 0.0
    %1661 = vmatpush1.msra.mxu0 0.0
    %1662 = vmatprep.subr.mxu0 0.0
    %1663 = vmatpush1.msra.mxu0 0.0
    %1664 = vmatprep.subr.mxu0 0.0
    %1665 = vmatpush1.msra.mxu0 0.0
    %1666 = vmatprep.subr.mxu0 0.0
    %1667 = vmatpush1.msra.mxu0 0.0
    %1668 = vmatprep.subr.mxu0 0.0
    %1669 = vmatpush1.msra.mxu0 0.0
    %1670 = vmatprep.subr.mxu0 0.0
    %1671 = vmatpush1.msra.mxu0 0.0
    %1672 = vmatprep.subr.mxu0 0.0
    %1673 = vmatpush1.msra.mxu0 %v1631
    %1674 = vmatprep.subr.mxu0 0.0
    %1675 = vmatpush1.msra.mxu0 %v1630
    %1676 = vmatprep.subr.mxu0 0.0
    %1677 = vmatpush2.msra.mxu0 0.0
    %1678 = vmatprep.subr.mxu0 0.0
    %1679 = vmatpush2.msra.mxu0 0.0
    %1680 = vmatprep.subr.mxu0 0.0
    %1681 = vmatpush2.msra.mxu0 0.0
    %1682 = vmatprep.subr.mxu0 0.0
    %1683 = vmatpush2.msra.mxu0 0.0
    %1684 = vmatprep.subr.mxu0 0.0
    %1685 = vmatpush2.msra.mxu0 0.0
    %1686 = vmatprep.subr.mxu0 0.0
    %1687 = vmatpush2.msra.mxu0 0.0
    %1688 = vmatprep.subr.mxu0 0.0
    %1689 = vmatpush2.msra.mxu0 0.0
    %1690 = vmatprep.subr.mxu0 0.0
    %1691 = vmatpush2.msra.mxu0 0.0
    %1692 = vmatprep.subr.mxu0 0.0
    %1693 = vmatpush2.msra.mxu0 0.0
    %1694 = vmatprep.subr.mxu0 0.0
    %1695 = vmatpush2.msra.mxu0 0.0
    %1696 = vmatprep.subr.mxu0 0.0
    %1697 = vmatpush2.msra.mxu0 0.0
    %1698 = vmatprep.subr.mxu0 0.0
    %1699 = vmatpush2.msra.mxu0 0.0
    %1700 = vmatprep.subr.mxu0 0.0
    %1701 = vmatpush2.msra.mxu0 0.0
    %1702 = vmatprep.subr.mxu0 0.0
    %1703 = vmatpush2.msra.mxu0 0.0
    %1704 = vmatprep.subr.mxu0 0.0
    %1705 = vmatpush2.msra.mxu0 0.0
    %1706 = vmatprep.subr.mxu0 0.0
    %1707 = vmatpush2.msra.mxu0 0.0
    %1708 = vmatprep.mubr.f32.mxu0 0.0
    %1709 = vmatmul.mubr.f32.gmra.mxu0 %v1633
    %v1710 = vpop.f32.mrf.mxu0
    %v1711 = vadd.f32 0.0, %v1710
    %v1712 = vpop.f32.mrf.mxu0
    %1713 = vmatprep.mubr.f32.mxu0 0.0
    %1714 = vmatmul.mubr.f32.gmra.mxu0 %v1636
    %v1715 = vpop.f32.mrf.mxu0
    %v1716 = vadd.f32 0.0, %v1715
    %v1717 = vpop.f32.mrf.mxu0
    %1718 = vmatprep.mubr.f32.mxu0 0.0
    %1719 = vmatmul.mubr.f32.gmra.mxu0 %v1639
    %v1720 = vpop.f32.mrf.mxu0
    %v1721 = vadd.f32 0.0, %v1720
    %v1722 = vpop.f32.mrf.mxu0
    %1723 = vmatprep.mubr.f32.mxu0 0.0
    %1724 = vmatmul.mubr.f32.gmra.mxu0 %v1642
    %v1725 = vpop.f32.mrf.mxu0
    %v1726 = vadd.f32 0.0, %v1725
    %v1727 = vpop.f32.mrf.mxu0
    %1728 = vdwg.mxu0
    %1729 = vst.msk [vmem:[#allocation2] sm:$0xff] %vm86, %v1625
    %1730 = vst.msk [vmem:[#allocation2 + $0x8] sm:$0xff] %vm86, %v1626
    %1731 = vst.msk [vmem:[#allocation2 + $0x10] sm:$0xff] %vm86, %v1627
    %1732 = vst.msk [vmem:[#allocation2 + $0x18] sm:$0xff] %vm86, %v1628
    %1733 = vrot.lane.b32.xlu0 %v1625, 16
    %v1734 = vpop.permute.xlu0 %1733
    %1735 = vrot.lane.b32.xlu0 %v1626, 16
    %v1736 = vpop.permute.xlu0 %1735
    %1737 = vrot.lane.b32.xlu0 %v1627, 16
    %v1738 = vpop.permute.xlu0 %1737
    %1739 = vrot.lane.b32.xlu0 %v1628, 16
    %v1740 = vpop.permute.xlu0 %1739
    %1745 = vst.msk [vmem:[#allocation2 + $0x20] sm:$0xff] %vm218, %v1734
    %1746 = vst.msk [vmem:[#allocation2 + $0x28] sm:$0xff] %vm218, %v1736
    %1747 = vst.msk [vmem:[#allocation2 + $0x30] sm:$0xff] %vm218, %v1738
    %1748 = vst.msk [vmem:[#allocation2 + $0x38] sm:$0xff] %vm218, %v1740
    %1749 = vrot.lane.b32.xlu0 %v1625, 32
    %v1750 = vpop.permute.xlu0 %1749
    %1751 = vrot.lane.b32.xlu0 %v1626, 32
    %v1752 = vpop.permute.xlu0 %1751
    %1753 = vrot.lane.b32.xlu0 %v1627, 32
    %v1754 = vpop.permute.xlu0 %1753
    %1755 = vrot.lane.b32.xlu0 %v1628, 32
    %v1756 = vpop.permute.xlu0 %1755
    %1761 = vst.msk [vmem:[#allocation2 + $0x40] sm:$0xff] %vm235, %v1750
    %1762 = vst.msk [vmem:[#allocation2 + $0x48] sm:$0xff] %vm235, %v1752
    %1763 = vst.msk [vmem:[#allocation2 + $0x50] sm:$0xff] %vm235, %v1754
    %1764 = vst.msk [vmem:[#allocation2 + $0x58] sm:$0xff] %vm235, %v1756
    %1765 = vrot.lane.b32.xlu0 %v1625, 48
    %v1766 = vpop.permute.xlu0 %1765
    %1767 = vrot.lane.b32.xlu0 %v1626, 48
    %v1768 = vpop.permute.xlu0 %1767
    %1769 = vrot.lane.b32.xlu0 %v1627, 48
    %v1770 = vpop.permute.xlu0 %1769
    %1771 = vrot.lane.b32.xlu0 %v1628, 48
    %v1772 = vpop.permute.xlu0 %1771
    %1777 = vst.msk [vmem:[#allocation2 + $0x60] sm:$0xff] %vm252, %v1766
    %1778 = vst.msk [vmem:[#allocation2 + $0x68] sm:$0xff] %vm252, %v1768
    %1779 = vst.msk [vmem:[#allocation2 + $0x70] sm:$0xff] %vm252, %v1770
    %1780 = vst.msk [vmem:[#allocation2 + $0x78] sm:$0xff] %vm252, %v1772
    %v1781 = vld [vmem:[#allocation2] sm:$0xff]
    %v1782 = vld [vmem:[#allocation2 + $0x8] sm:$0xff]
    %v1783 = vld [vmem:[#allocation2 + $0x10] sm:$0xff]
    %v1784 = vld [vmem:[#allocation2 + $0x18] sm:$0xff]
    %v1785 = vld [vmem:[#allocation2 + $0x20] sm:$0xff]
    %v1786 = vld [vmem:[#allocation2 + $0x28] sm:$0xff]
    %v1787 = vld [vmem:[#allocation2 + $0x30] sm:$0xff]
    %v1788 = vld [vmem:[#allocation2 + $0x38] sm:$0xff]
    %v1789 = vld [vmem:[#allocation2 + $0x40] sm:$0xff]
    %v1790 = vld [vmem:[#allocation2 + $0x48] sm:$0xff]
    %v1791 = vld [vmem:[#allocation2 + $0x50] sm:$0xff]
    %v1792 = vld [vmem:[#allocation2 + $0x58] sm:$0xff]
    %v1793 = vld [vmem:[#allocation2 + $0x60] sm:$0xff]
    %v1794 = vld [vmem:[#allocation2 + $0x68] sm:$0xff]
    %v1795 = vld [vmem:[#allocation2 + $0x70] sm:$0xff]
    %v1796 = vld [vmem:[#allocation2 + $0x78] sm:$0xff]
    %v1798 = vsel %vm69, %v1711, 0
    %v1801 = vsel %vm69, %v1716, 0
    %v1804 = vsel %vm69, %v1721, 0
    %v1807 = vsel %vm69, %v1726, 0
    %v1810 = vsel %vm69, %v1781, 0
    %v1813 = vsel %vm69, %v1782, 0
    %v1816 = vsel %vm69, %v1783, 0
    %v1819 = vsel %vm69, %v1784, 0
    %v1822 = vsel %vm69, %v1785, 0
    %v1825 = vsel %vm69, %v1786, 0
    %v1828 = vsel %vm69, %v1787, 0
    %v1831 = vsel %vm69, %v1788, 0
    %v1834 = vsel %vm69, %v1789, 0
    %v1837 = vsel %vm69, %v1790, 0
    %v1840 = vsel %vm69, %v1791, 0
    %v1843 = vsel %vm69, %v1792, 0
    %v1846 = vsel %vm69, %v1793, 0
    %v1849 = vsel %vm69, %v1794, 0
    %v1852 = vsel %vm69, %v1795, 0
    %v1855 = vsel %vm69, %v1796, 0
    %1857 = vmatprep.subr.mxu0 0.0
    %1858 = vmatpush1.xpose.msra.mxu0 %v1855
    %1859 = vmatprep.subr.mxu0 0.0
    %1860 = vmatpush1.xpose.msra.mxu0 %v1852
    %1861 = vmatprep.subr.mxu0 0.0
    %1862 = vmatpush1.xpose.msra.mxu0 %v1849
    %1863 = vmatprep.subr.mxu0 0.0
    %1864 = vmatpush1.xpose.msra.mxu0 %v1846
    %1865 = vmatprep.subr.mxu0 0.0
    %1866 = vmatpush1.xpose.msra.mxu0 %v1843
    %1867 = vmatprep.subr.mxu0 0.0
    %1868 = vmatpush1.xpose.msra.mxu0 %v1840
    %1869 = vmatprep.subr.mxu0 0.0
    %1870 = vmatpush1.xpose.msra.mxu0 %v1837
    %1871 = vmatprep.subr.mxu0 0.0
    %1872 = vmatpush1.xpose.msra.mxu0 %v1834
    %1873 = vmatprep.subr.mxu0 0.0
    %1874 = vmatpush1.xpose.msra.mxu0 %v1831
    %1875 = vmatprep.subr.mxu0 0.0
    %1876 = vmatpush1.xpose.msra.mxu0 %v1828
    %1877 = vmatprep.subr.mxu0 0.0
    %1878 = vmatpush1.xpose.msra.mxu0 %v1825
    %1879 = vmatprep.subr.mxu0 0.0
    %1880 = vmatpush1.xpose.msra.mxu0 %v1822
    %1881 = vmatprep.subr.mxu0 0.0
    %1882 = vmatpush1.xpose.msra.mxu0 %v1819
    %1883 = vmatprep.subr.mxu0 0.0
    %1884 = vmatpush1.xpose.msra.mxu0 %v1816
    %1885 = vmatprep.subr.mxu0 0.0
    %1886 = vmatpush1.xpose.msra.mxu0 %v1813
    %1887 = vmatprep.subr.mxu0 0.0
    %1888 = vmatpush1.xpose.msra.mxu0 %v1810
    %1889 = vmatprep.subr.mxu0 0.0
    %1890 = vmatpush2.xpose.msra.mxu0 0.0
    %1891 = vmatprep.subr.mxu0 0.0
    %1892 = vmatpush2.xpose.msra.mxu0 0.0
    %1893 = vmatprep.subr.mxu0 0.0
    %1894 = vmatpush2.xpose.msra.mxu0 0.0
    %1895 = vmatprep.subr.mxu0 0.0
    %1896 = vmatpush2.xpose.msra.mxu0 0.0
    %1897 = vmatprep.subr.mxu0 0.0
    %1898 = vmatpush2.xpose.msra.mxu0 0.0
    %1899 = vmatprep.subr.mxu0 0.0
    %1900 = vmatpush2.xpose.msra.mxu0 0.0
    %1901 = vmatprep.subr.mxu0 0.0
    %1902 = vmatpush2.xpose.msra.mxu0 0.0
    %1903 = vmatprep.subr.mxu0 0.0
    %1904 = vmatpush2.xpose.msra.mxu0 0.0
    %1905 = vmatprep.subr.mxu0 0.0
    %1906 = vmatpush2.xpose.msra.mxu0 0.0
    %1907 = vmatprep.subr.mxu0 0.0
    %1908 = vmatpush2.xpose.msra.mxu0 0.0
    %1909 = vmatprep.subr.mxu0 0.0
    %1910 = vmatpush2.xpose.msra.mxu0 0.0
    %1911 = vmatprep.subr.mxu0 0.0
    %1912 = vmatpush2.xpose.msra.mxu0 0.0
    %1913 = vmatprep.subr.mxu0 0.0
    %1914 = vmatpush2.xpose.msra.mxu0 0.0
    %1915 = vmatprep.subr.mxu0 0.0
    %1916 = vmatpush2.xpose.msra.mxu0 0.0
    %1917 = vmatprep.subr.mxu0 0.0
    %1918 = vmatpush2.xpose.msra.mxu0 0.0
    %1919 = vmatprep.subr.mxu0 0.0
    %1920 = vmatpush2.xpose.msra.mxu0 0.0
    %1921 = vmatprep.mubr.f32.mxu0 0.0
    %1922 = vmatmul.mubr.f32.gmra.mxu0 %v1798
    %v1923 = vpop.f32.mrf.mxu0
    %v1924 = vadd.f32 %v48, %v1923
    %v1925 = vpop.f32.mrf.mxu0
    %1926 = vmatprep.mubr.f32.mxu0 0.0
    %1927 = vmatmul.mubr.f32.gmra.mxu0 %v1801
    %v1928 = vpop.f32.mrf.mxu0
    %v1929 = vadd.f32 %v49, %v1928
    %v1930 = vpop.f32.mrf.mxu0
    %1931 = vmatprep.mubr.f32.mxu0 0.0
    %1932 = vmatmul.mubr.f32.gmra.mxu0 %v1804
    %v1933 = vpop.f32.mrf.mxu0
    %v1934 = vadd.f32 %v50, %v1933
    %v1935 = vpop.f32.mrf.mxu0
    %1936 = vmatprep.mubr.f32.mxu0 0.0
    %1937 = vmatmul.mubr.f32.gmra.mxu0 %v1807
    %v1938 = vpop.f32.mrf.mxu0
    %v1939 = vadd.f32 %v51, %v1938
    %v1940 = vpop.f32.mrf.mxu0
    %1941 = vdwg.mxu0
    %1942 = vmax.xlane.f32.xlu0 %v1924
    %v1943 = vpop.xlane.xlu0 %1942
    %1944 = vmax.xlane.f32.xlu0 %v1929
    %v1945 = vpop.xlane.xlu0 %1944
    %1946 = vmax.xlane.f32.xlu0 %v1934
    %v1947 = vpop.xlane.xlu0 %1946
    %1948 = vmax.xlane.f32.xlu0 %v1939
    %v1949 = vpop.xlane.xlu0 %1948
    %v1950 = vsub.f32 %v1924, %v1943
    %v1951 = vsub.f32 %v1929, %v1945
    %v1952 = vsub.f32 %v1934, %v1947
    %v1953 = vsub.f32 %v1939, %v1949
    %v1954 = vmul.f32 %v1950, 1.442695
    %v1955 = vpow.pop %v1954
    %v1956 = vmul.f32 %v1951, 1.442695
    %v1957 = vpow.pop %v1956
    %v1958 = vmul.f32 %v1952, 1.442695
    %v1959 = vpow.pop %v1958
    %v1960 = vmul.f32 %v1953, 1.442695
    %v1961 = vpow.pop %v1960
    %s1962 = scalar_lea.vmem [#allocation4], 32
    %v1963 = vld [vmem:[%s1962] sm:$0xff]
    %v1964 = vld [vmem:[%s1962 + $0x8] sm:$0xff]
    %1965 = vmatprep.subr.mxu0 0.0
    %1966 = vmatpush1.msra.mxu0 0.0
    %1967 = vmatprep.subr.mxu0 0.0
    %1968 = vmatpush1.msra.mxu0 0.0
    %1969 = vmatprep.subr.mxu0 0.0
    %1970 = vmatpush1.msra.mxu0 0.0
    %1971 = vmatprep.subr.mxu0 0.0
    %1972 = vmatpush1.msra.mxu0 0.0
    %1973 = vmatprep.subr.mxu0 0.0
    %1974 = vmatpush1.msra.mxu0 0.0
    %1975 = vmatprep.subr.mxu0 0.0
    %1976 = vmatpush1.msra.mxu0 0.0
    %1977 = vmatprep.subr.mxu0 0.0
    %1978 = vmatpush1.msra.mxu0 0.0
    %1979 = vmatprep.subr.mxu0 0.0
    %1980 = vmatpush1.msra.mxu0 0.0
    %1981 = vmatprep.subr.mxu0 0.0
    %1982 = vmatpush1.msra.mxu0 0.0
    %1983 = vmatprep.subr.mxu0 0.0
    %1984 = vmatpush1.msra.mxu0 0.0
    %1985 = vmatprep.subr.mxu0 0.0
    %1986 = vmatpush1.msra.mxu0 0.0
    %1987 = vmatprep.subr.mxu0 0.0
    %1988 = vmatpush1.msra.mxu0 0.0
    %1989 = vmatprep.subr.mxu0 0.0
    %1990 = vmatpush1.msra.mxu0 0.0
    %1991 = vmatprep.subr.mxu0 0.0
    %1992 = vmatpush1.msra.mxu0 0.0
    %1993 = vmatprep.subr.mxu0 0.0
    %1994 = vmatpush1.msra.mxu0 %v1964
    %1995 = vmatprep.subr.mxu0 0.0
    %1996 = vmatpush1.msra.mxu0 %v1963
    %1997 = vmatprep.subr.mxu0 0.0
    %1998 = vmatpush2.msra.mxu0 0.0
    %1999 = vmatprep.subr.mxu0 0.0
    %2000 = vmatpush2.msra.mxu0 0.0
    %2001 = vmatprep.subr.mxu0 0.0
    %2002 = vmatpush2.msra.mxu0 0.0
    %2003 = vmatprep.subr.mxu0 0.0
    %2004 = vmatpush2.msra.mxu0 0.0
    %2005 = vmatprep.subr.mxu0 0.0
    %2006 = vmatpush2.msra.mxu0 0.0
    %2007 = vmatprep.subr.mxu0 0.0
    %2008 = vmatpush2.msra.mxu0 0.0
    %2009 = vmatprep.subr.mxu0 0.0
    %2010 = vmatpush2.msra.mxu0 0.0
    %2011 = vmatprep.subr.mxu0 0.0
    %2012 = vmatpush2.msra.mxu0 0.0
    %2013 = vmatprep.subr.mxu0 0.0
    %2014 = vmatpush2.msra.mxu0 0.0
    %2015 = vmatprep.subr.mxu0 0.0
    %2016 = vmatpush2.msra.mxu0 0.0
    %2017 = vmatprep.subr.mxu0 0.0
    %2018 = vmatpush2.msra.mxu0 0.0
    %2019 = vmatprep.subr.mxu0 0.0
    %2020 = vmatpush2.msra.mxu0 0.0
    %2021 = vmatprep.subr.mxu0 0.0
    %2022 = vmatpush2.msra.mxu0 0.0
    %2023 = vmatprep.subr.mxu0 0.0
    %2024 = vmatpush2.msra.mxu0 0.0
    %2025 = vmatprep.subr.mxu0 0.0
    %2026 = vmatpush2.msra.mxu0 0.0
    %2027 = vmatprep.subr.mxu0 0.0
    %2028 = vmatpush2.msra.mxu0 0.0
    %2029 = vmatprep.mubr.f32.mxu0 0.0
    %2030 = vmatmul.mubr.f32.gmra.mxu0 %v1633
    %v2031 = vpop.f32.mrf.mxu0
    %v2032 = vadd.f32 0.0, %v2031
    %v2033 = vpop.f32.mrf.mxu0
    %2034 = vmatprep.mubr.f32.mxu0 0.0
    %2035 = vmatmul.mubr.f32.gmra.mxu0 %v1636
    %v2036 = vpop.f32.mrf.mxu0
    %v2037 = vadd.f32 0.0, %v2036
    %v2038 = vpop.f32.mrf.mxu0
    %2039 = vmatprep.mubr.f32.mxu0 0.0
    %2040 = vmatmul.mubr.f32.gmra.mxu0 %v1639
    %v2041 = vpop.f32.mrf.mxu0
    %v2042 = vadd.f32 0.0, %v2041
    %v2043 = vpop.f32.mrf.mxu0
    %2044 = vmatprep.mubr.f32.mxu0 0.0
    %2045 = vmatmul.mubr.f32.gmra.mxu0 %v1642
    %v2046 = vpop.f32.mrf.mxu0
    %v2047 = vadd.f32 0.0, %v2046
    %v2048 = vpop.f32.mrf.mxu0
    %2049 = vdwg.mxu0
    %v2050 = vmul.f32 %v2032, %v528
    %v2051 = vmul.f32 %v2037, %v528
    %v2052 = vmul.f32 %v2042, %v528
    %v2053 = vmul.f32 %v2047, %v528
    %2054 = vst.msk [vmem:[#allocation3] sm:$0xff] %vm86, %v2050
    %2055 = vst.msk [vmem:[#allocation3 + $0x8] sm:$0xff] %vm86, %v2051
    %2056 = vst.msk [vmem:[#allocation3 + $0x10] sm:$0xff] %vm86, %v2052
    %2057 = vst.msk [vmem:[#allocation3 + $0x18] sm:$0xff] %vm86, %v2053
    %v2058 = vmul.f32 %v2032, %v540
    %v2059 = vmul.f32 %v2037, %v540
    %v2060 = vmul.f32 %v2042, %v540
    %v2061 = vmul.f32 %v2047, %v540
    %2062 = vst.msk [vmem:[#allocation3 + $0x20] sm:$0xff] %vm86, %v2058
    %2063 = vst.msk [vmem:[#allocation3 + $0x28] sm:$0xff] %vm86, %v2059
    %2064 = vst.msk [vmem:[#allocation3 + $0x30] sm:$0xff] %vm86, %v2060
    %2065 = vst.msk [vmem:[#allocation3 + $0x38] sm:$0xff] %vm86, %v2061
    %v2066 = vmul.f32 %v2032, %v552
    %v2067 = vmul.f32 %v2037, %v552
    %v2068 = vmul.f32 %v2042, %v552
    %v2069 = vmul.f32 %v2047, %v552
    %2070 = vst.msk [vmem:[#allocation3 + $0x40] sm:$0xff] %vm86, %v2066
    %2071 = vst.msk [vmem:[#allocation3 + $0x48] sm:$0xff] %vm86, %v2067
    %2072 = vst.msk [vmem:[#allocation3 + $0x50] sm:$0xff] %vm86, %v2068
    %2073 = vst.msk [vmem:[#allocation3 + $0x58] sm:$0xff] %vm86, %v2069
    %v2074 = vmul.f32 %v2032, %v564
    %v2075 = vmul.f32 %v2037, %v564
    %v2076 = vmul.f32 %v2042, %v564
    %v2077 = vmul.f32 %v2047, %v564
    %2078 = vst.msk [vmem:[#allocation3 + $0x60] sm:$0xff] %vm86, %v2074
    %2079 = vst.msk [vmem:[#allocation3 + $0x68] sm:$0xff] %vm86, %v2075
    %2080 = vst.msk [vmem:[#allocation3 + $0x70] sm:$0xff] %vm86, %v2076
    %2081 = vst.msk [vmem:[#allocation3 + $0x78] sm:$0xff] %vm86, %v2077
    %v2082 = vld [vmem:[#allocation3] sm:$0xff]
    %v2083 = vld [vmem:[#allocation3 + $0x8] sm:$0xff]
    %v2084 = vld [vmem:[#allocation3 + $0x10] sm:$0xff]
    %v2085 = vld [vmem:[#allocation3 + $0x18] sm:$0xff]
    %v2086 = vld [vmem:[#allocation3 + $0x20] sm:$0xff]
    %v2087 = vld [vmem:[#allocation3 + $0x28] sm:$0xff]
    %v2088 = vld [vmem:[#allocation3 + $0x30] sm:$0xff]
    %v2089 = vld [vmem:[#allocation3 + $0x38] sm:$0xff]
    %v2090 = vld [vmem:[#allocation3 + $0x40] sm:$0xff]
    %v2091 = vld [vmem:[#allocation3 + $0x48] sm:$0xff]
    %v2092 = vld [vmem:[#allocation3 + $0x50] sm:$0xff]
    %v2093 = vld [vmem:[#allocation3 + $0x58] sm:$0xff]
    %v2094 = vld [vmem:[#allocation3 + $0x60] sm:$0xff]
    %v2095 = vld [vmem:[#allocation3 + $0x68] sm:$0xff]
    %v2096 = vld [vmem:[#allocation3 + $0x70] sm:$0xff]
    %v2097 = vld [vmem:[#allocation3 + $0x78] sm:$0xff]
    %2098 = vmatprep.subr.mxu0 0.0
    %2099 = vmatpush1.msra.mxu0 %v2097
    %2100 = vmatprep.subr.mxu0 0.0
    %2101 = vmatpush1.msra.mxu0 %v2096
    %2102 = vmatprep.subr.mxu0 0.0
    %2103 = vmatpush1.msra.mxu0 %v2095
    %2104 = vmatprep.subr.mxu0 0.0
    %2105 = vmatpush1.msra.mxu0 %v2094
    %2106 = vmatprep.subr.mxu0 0.0
    %2107 = vmatpush1.msra.mxu0 %v2093
    %2108 = vmatprep.subr.mxu0 0.0
    %2109 = vmatpush1.msra.mxu0 %v2092
    %2110 = vmatprep.subr.mxu0 0.0
    %2111 = vmatpush1.msra.mxu0 %v2091
    %2112 = vmatprep.subr.mxu0 0.0
    %2113 = vmatpush1.msra.mxu0 %v2090
    %2114 = vmatprep.subr.mxu0 0.0
    %2115 = vmatpush1.msra.mxu0 %v2089
    %2116 = vmatprep.subr.mxu0 0.0
    %2117 = vmatpush1.msra.mxu0 %v2088
    %2118 = vmatprep.subr.mxu0 0.0
    %2119 = vmatpush1.msra.mxu0 %v2087
    %2120 = vmatprep.subr.mxu0 0.0
    %2121 = vmatpush1.msra.mxu0 %v2086
    %2122 = vmatprep.subr.mxu0 0.0
    %2123 = vmatpush1.msra.mxu0 %v2085
    %2124 = vmatprep.subr.mxu0 0.0
    %2125 = vmatpush1.msra.mxu0 %v2084
    %2126 = vmatprep.subr.mxu0 0.0
    %2127 = vmatpush1.msra.mxu0 %v2083
    %2128 = vmatprep.subr.mxu0 0.0
    %2129 = vmatpush1.msra.mxu0 %v2082
    %2130 = vmatprep.subr.mxu0 0.0
    %2131 = vmatpush2.msra.mxu0 0.0
    %2132 = vmatprep.subr.mxu0 0.0
    %2133 = vmatpush2.msra.mxu0 0.0
    %2134 = vmatprep.subr.mxu0 0.0
    %2135 = vmatpush2.msra.mxu0 0.0
    %2136 = vmatprep.subr.mxu0 0.0
    %2137 = vmatpush2.msra.mxu0 0.0
    %2138 = vmatprep.subr.mxu0 0.0
    %2139 = vmatpush2.msra.mxu0 0.0
    %2140 = vmatprep.subr.mxu0 0.0
    %2141 = vmatpush2.msra.mxu0 0.0
    %2142 = vmatprep.subr.mxu0 0.0
    %2143 = vmatpush2.msra.mxu0 0.0
    %2144 = vmatprep.subr.mxu0 0.0
    %2145 = vmatpush2.msra.mxu0 0.0
    %2146 = vmatprep.subr.mxu0 0.0
    %2147 = vmatpush2.msra.mxu0 0.0
    %2148 = vmatprep.subr.mxu0 0.0
    %2149 = vmatpush2.msra.mxu0 0.0
    %2150 = vmatprep.subr.mxu0 0.0
    %2151 = vmatpush2.msra.mxu0 0.0
    %2152 = vmatprep.subr.mxu0 0.0
    %2153 = vmatpush2.msra.mxu0 0.0
    %2154 = vmatprep.subr.mxu0 0.0
    %2155 = vmatpush2.msra.mxu0 0.0
    %2156 = vmatprep.subr.mxu0 0.0
    %2157 = vmatpush2.msra.mxu0 0.0
    %2158 = vmatprep.subr.mxu0 0.0
    %2159 = vmatpush2.msra.mxu0 0.0
    %2160 = vmatprep.subr.mxu0 0.0
    %2161 = vmatpush2.msra.mxu0 0.0
    %2162 = vmatprep.mubr.f32.mxu0 0.0
    %2163 = vmatmul.mubr.f32.gmra.mxu0 %v1955
    %v2164 = vpop.f32.mrf.mxu0
    %v2165 = vadd.f32 0.0, %v2164
    %v2166 = vpop.f32.mrf.mxu0
    %2167 = vmatprep.mubr.f32.mxu0 0.0
    %2168 = vmatmul.mubr.f32.gmra.mxu0 %v1957
    %v2169 = vpop.f32.mrf.mxu0
    %v2170 = vadd.f32 0.0, %v2169
    %v2171 = vpop.f32.mrf.mxu0
    %2172 = vmatprep.mubr.f32.mxu0 0.0
    %2173 = vmatmul.mubr.f32.gmra.mxu0 %v1959
    %v2174 = vpop.f32.mrf.mxu0
    %v2175 = vadd.f32 0.0, %v2174
    %v2176 = vpop.f32.mrf.mxu0
    %2177 = vmatprep.mubr.f32.mxu0 0.0
    %2178 = vmatmul.mubr.f32.gmra.mxu0 %v1961
    %v2179 = vpop.f32.mrf.mxu0
    %v2180 = vadd.f32 0.0, %v2179
    %v2181 = vpop.f32.mrf.mxu0
    %2182 = vdwg.mxu0
    %2183 = vmatprep.subr.mxu0 0.0
    %2184 = vmatpush1.msra.mxu0 %v67
    %2185 = vmatprep.subr.mxu0 0.0
    %2186 = vmatpush1.msra.mxu0 %v66
    %2187 = vmatprep.subr.mxu0 0.0
    %2188 = vmatpush1.msra.mxu0 %v65
    %2189 = vmatprep.subr.mxu0 0.0
    %2190 = vmatpush1.msra.mxu0 %v64
    %2191 = vmatprep.subr.mxu0 0.0
    %2192 = vmatpush1.msra.mxu0 %v63
    %2193 = vmatprep.subr.mxu0 0.0
    %2194 = vmatpush1.msra.mxu0 %v62
    %2195 = vmatprep.subr.mxu0 0.0
    %2196 = vmatpush1.msra.mxu0 %v61
    %2197 = vmatprep.subr.mxu0 0.0
    %2198 = vmatpush1.msra.mxu0 %v60
    %2199 = vmatprep.subr.mxu0 0.0
    %2200 = vmatpush1.msra.mxu0 %v59
    %2201 = vmatprep.subr.mxu0 0.0
    %2202 = vmatpush1.msra.mxu0 %v58
    %2203 = vmatprep.subr.mxu0 0.0
    %2204 = vmatpush1.msra.mxu0 %v57
    %2205 = vmatprep.subr.mxu0 0.0
    %2206 = vmatpush1.msra.mxu0 %v56
    %2207 = vmatprep.subr.mxu0 0.0
    %2208 = vmatpush1.msra.mxu0 %v55
    %2209 = vmatprep.subr.mxu0 0.0
    %2210 = vmatpush1.msra.mxu0 %v54
    %2211 = vmatprep.subr.mxu0 0.0
    %2212 = vmatpush1.msra.mxu0 %v53
    %2213 = vmatprep.subr.mxu0 0.0
    %2214 = vmatpush1.msra.mxu0 %v52
    %2215 = vmatprep.subr.mxu0 0.0
    %2216 = vmatpush2.msra.mxu0 0.0
    %2217 = vmatprep.subr.mxu0 0.0
    %2218 = vmatpush2.msra.mxu0 0.0
    %2219 = vmatprep.subr.mxu0 0.0
    %2220 = vmatpush2.msra.mxu0 0.0
    %2221 = vmatprep.subr.mxu0 0.0
    %2222 = vmatpush2.msra.mxu0 0.0
    %2223 = vmatprep.subr.mxu0 0.0
    %2224 = vmatpush2.msra.mxu0 0.0
    %2225 = vmatprep.subr.mxu0 0.0
    %2226 = vmatpush2.msra.mxu0 0.0
    %2227 = vmatprep.subr.mxu0 0.0
    %2228 = vmatpush2.msra.mxu0 0.0
    %2229 = vmatprep.subr.mxu0 0.0
    %2230 = vmatpush2.msra.mxu0 0.0
    %2231 = vmatprep.subr.mxu0 0.0
    %2232 = vmatpush2.msra.mxu0 0.0
    %2233 = vmatprep.subr.mxu0 0.0
    %2234 = vmatpush2.msra.mxu0 0.0
    %2235 = vmatprep.subr.mxu0 0.0
    %2236 = vmatpush2.msra.mxu0 0.0
    %2237 = vmatprep.subr.mxu0 0.0
    %2238 = vmatpush2.msra.mxu0 0.0
    %2239 = vmatprep.subr.mxu0 0.0
    %2240 = vmatpush2.msra.mxu0 0.0
    %2241 = vmatprep.subr.mxu0 0.0
    %2242 = vmatpush2.msra.mxu0 0.0
    %2243 = vmatprep.subr.mxu0 0.0
    %2244 = vmatpush2.msra.mxu0 0.0
    %2245 = vmatprep.subr.mxu0 0.0
    %2246 = vmatpush2.msra.mxu0 0.0
    %2247 = vmatprep.mubr.f32.mxu0 0.0
    %2248 = vmatmul.mubr.f32.gmra.mxu0 %v1955
    %v2249 = vpop.f32.mrf.mxu0
    %v2250 = vadd.f32 0.0, %v2249
    %v2251 = vpop.f32.mrf.mxu0
    %2252 = vmatprep.mubr.f32.mxu0 0.0
    %2253 = vmatmul.mubr.f32.gmra.mxu0 %v1957
    %v2254 = vpop.f32.mrf.mxu0
    %v2255 = vadd.f32 0.0, %v2254
    %v2256 = vpop.f32.mrf.mxu0
    %2257 = vmatprep.mubr.f32.mxu0 0.0
    %2258 = vmatmul.mubr.f32.gmra.mxu0 %v1959
    %v2259 = vpop.f32.mrf.mxu0
    %v2260 = vadd.f32 0.0, %v2259
    %v2261 = vpop.f32.mrf.mxu0
    %2262 = vmatprep.mubr.f32.mxu0 0.0
    %2263 = vmatmul.mubr.f32.gmra.mxu0 %v1961
    %v2264 = vpop.f32.mrf.mxu0
    %v2265 = vadd.f32 0.0, %v2264
    %v2266 = vpop.f32.mrf.mxu0
    %2267 = vdwg.mxu0
    %v2268 = vrcp.pop %v2250
    %v2269 = vmul.f32 1.0, %v2268
    %v2270 = vrcp.pop %v2255
    %v2271 = vmul.f32 1.0, %v2270
    %v2272 = vrcp.pop %v2260
    %v2273 = vmul.f32 1.0, %v2272
    %v2274 = vrcp.pop %v2265
    %v2275 = vmul.f32 1.0, %v2274
    %v2277 = vsel %vm767, %v2269, 0
    %v2280 = vsel %vm767, %v2271, 0
    %v2283 = vsel %vm767, %v2273, 0
    %v2286 = vsel %vm767, %v2275, 0
    %2288 = vmatprep.subr.mxu0 0.0
    %2289 = vmatpush1.msra.mxu0 0.0
    %2290 = vmatprep.subr.mxu0 0.0
    %2291 = vmatpush1.msra.mxu0 0.0
    %2292 = vmatprep.subr.mxu0 0.0
    %2293 = vmatpush1.msra.mxu0 0.0
    %2294 = vmatprep.subr.mxu0 0.0
    %2295 = vmatpush1.msra.mxu0 0.0
    %2296 = vmatprep.subr.mxu0 0.0
    %2297 = vmatpush1.msra.mxu0 0.0
    %2298 = vmatprep.subr.mxu0 0.0
    %2299 = vmatpush1.msra.mxu0 0.0
    %2300 = vmatprep.subr.mxu0 0.0
    %2301 = vmatpush1.msra.mxu0 0.0
    %2302 = vmatprep.subr.mxu0 0.0
    %2303 = vmatpush1.msra.mxu0 0.0
    %2304 = vmatprep.subr.mxu0 0.0
    %2305 = vmatpush1.msra.mxu0 0.0
    %2306 = vmatprep.subr.mxu0 0.0
    %2307 = vmatpush1.msra.mxu0 0.0
    %2308 = vmatprep.subr.mxu0 0.0
    %2309 = vmatpush1.msra.mxu0 0.0
    %2310 = vmatprep.subr.mxu0 0.0
    %2311 = vmatpush1.msra.mxu0 0.0
    %2312 = vmatprep.subr.mxu0 0.0
    %2313 = vmatpush1.msra.mxu0 0.0
    %2314 = vmatprep.subr.mxu0 0.0
    %2315 = vmatpush1.msra.mxu0 0.0
    %2316 = vmatprep.subr.mxu0 0.0
    %2317 = vmatpush1.msra.mxu0 0.0
    %2318 = vmatprep.subr.mxu0 0.0
    %2319 = vmatpush1.msra.mxu0 %v782
    %2320 = vmatprep.subr.mxu0 0.0
    %2321 = vmatpush2.msra.mxu0 0.0
    %2322 = vmatprep.subr.mxu0 0.0
    %2323 = vmatpush2.msra.mxu0 0.0
    %2324 = vmatprep.subr.mxu0 0.0
    %2325 = vmatpush2.msra.mxu0 0.0
    %2326 = vmatprep.subr.mxu0 0.0
    %2327 = vmatpush2.msra.mxu0 0.0
    %2328 = vmatprep.subr.mxu0 0.0
    %2329 = vmatpush2.msra.mxu0 0.0
    %2330 = vmatprep.subr.mxu0 0.0
    %2331 = vmatpush2.msra.mxu0 0.0
    %2332 = vmatprep.subr.mxu0 0.0
    %2333 = vmatpush2.msra.mxu0 0.0
    %2334 = vmatprep.subr.mxu0 0.0
    %2335 = vmatpush2.msra.mxu0 0.0
    %2336 = vmatprep.subr.mxu0 0.0
    %2337 = vmatpush2.msra.mxu0 0.0
    %2338 = vmatprep.subr.mxu0 0.0
    %2339 = vmatpush2.msra.mxu0 0.0
    %2340 = vmatprep.subr.mxu0 0.0
    %2341 = vmatpush2.msra.mxu0 0.0
    %2342 = vmatprep.subr.mxu0 0.0
    %2343 = vmatpush2.msra.mxu0 0.0
    %2344 = vmatprep.subr.mxu0 0.0
    %2345 = vmatpush2.msra.mxu0 0.0
    %2346 = vmatprep.subr.mxu0 0.0
    %2347 = vmatpush2.msra.mxu0 0.0
    %2348 = vmatprep.subr.mxu0 0.0
    %2349 = vmatpush2.msra.mxu0 0.0
    %2350 = vmatprep.subr.mxu0 0.0
    %2351 = vmatpush2.msra.mxu0 0.0
    %2352 = vmatprep.mubr.f32.mxu0 0.0
    %2353 = vmatmul.mubr.f32.gmra.mxu0 %v2277
    %v2354 = vpop.f32.mrf.mxu0
    %v2355 = vadd.f32 0.0, %v2354
    %v2356 = vpop.f32.mrf.mxu0
    %2357 = vmatprep.mubr.f32.mxu0 0.0
    %2358 = vmatmul.mubr.f32.gmra.mxu0 %v2280
    %v2359 = vpop.f32.mrf.mxu0
    %v2360 = vadd.f32 0.0, %v2359
    %v2361 = vpop.f32.mrf.mxu0
    %2362 = vmatprep.mubr.f32.mxu0 0.0
    %2363 = vmatmul.mubr.f32.gmra.mxu0 %v2283
    %v2364 = vpop.f32.mrf.mxu0
    %v2365 = vadd.f32 0.0, %v2364
    %v2366 = vpop.f32.mrf.mxu0
    %2367 = vmatprep.mubr.f32.mxu0 0.0
    %2368 = vmatmul.mubr.f32.gmra.mxu0 %v2286
    %v2369 = vpop.f32.mrf.mxu0
    %v2370 = vadd.f32 0.0, %v2369
    %v2371 = vpop.f32.mrf.mxu0
    %2372 = vdwg.mxu0
    %v2373 = vmul.f32 %v2165, %v2355
    %v2374 = vmul.f32 %v2170, %v2360
    %v2375 = vmul.f32 %v2175, %v2365
    %v2376 = vmul.f32 %v2180, %v2370
    %v2377 = vadd.f32 %v1625, %v2373
    %v2378 = vadd.f32 %v1626, %v2374
    %v2379 = vadd.f32 %v1627, %v2375
    %v2380 = vadd.f32 %v1628, %v2376
    %s2381 = scalar_lea.vmem %s2, 48
    %v2382 = vld [vmem:[%s2381] sm:$0xff]
    %v2383 = vld [vmem:[%s2381 + $0x8] sm:$0xff]
    %v2385 = vsel %vm86, %v2377, 0
    %v2388 = vsel %vm86, %v2378, 0
    %v2391 = vsel %vm86, %v2379, 0
    %v2394 = vsel %vm86, %v2380, 0
    %2396 = vmatprep.subr.mxu0 0.0
    %2397 = vmatpush1.msra.mxu0 0.0
    %2398 = vmatprep.subr.mxu0 0.0
    %2399 = vmatpush1.msra.mxu0 0.0
    %2400 = vmatprep.subr.mxu0 0.0
    %2401 = vmatpush1.msra.mxu0 0.0
    %2402 = vmatprep.subr.mxu0 0.0
    %2403 = vmatpush1.msra.mxu0 0.0
    %2404 = vmatprep.subr.mxu0 0.0
    %2405 = vmatpush1.msra.mxu0 0.0
    %2406 = vmatprep.subr.mxu0 0.0
    %2407 = vmatpush1.msra.mxu0 0.0
    %2408 = vmatprep.subr.mxu0 0.0
    %2409 = vmatpush1.msra.mxu0 0.0
    %2410 = vmatprep.subr.mxu0 0.0
    %2411 = vmatpush1.msra.mxu0 0.0
    %2412 = vmatprep.subr.mxu0 0.0
    %2413 = vmatpush1.msra.mxu0 0.0
    %2414 = vmatprep.subr.mxu0 0.0
    %2415 = vmatpush1.msra.mxu0 0.0
    %2416 = vmatprep.subr.mxu0 0.0
    %2417 = vmatpush1.msra.mxu0 0.0
    %2418 = vmatprep.subr.mxu0 0.0
    %2419 = vmatpush1.msra.mxu0 0.0
    %2420 = vmatprep.subr.mxu0 0.0
    %2421 = vmatpush1.msra.mxu0 0.0
    %2422 = vmatprep.subr.mxu0 0.0
    %2423 = vmatpush1.msra.mxu0 0.0
    %2424 = vmatprep.subr.mxu0 0.0
    %2425 = vmatpush1.msra.mxu0 %v2383
    %2426 = vmatprep.subr.mxu0 0.0
    %2427 = vmatpush1.msra.mxu0 %v2382
    %2428 = vmatprep.subr.mxu0 0.0
    %2429 = vmatpush2.msra.mxu0 0.0
    %2430 = vmatprep.subr.mxu0 0.0
    %2431 = vmatpush2.msra.mxu0 0.0
    %2432 = vmatprep.subr.mxu0 0.0
    %2433 = vmatpush2.msra.mxu0 0.0
    %2434 = vmatprep.subr.mxu0 0.0
    %2435 = vmatpush2.msra.mxu0 0.0
    %2436 = vmatprep.subr.mxu0 0.0
    %2437 = vmatpush2.msra.mxu0 0.0
    %2438 = vmatprep.subr.mxu0 0.0
    %2439 = vmatpush2.msra.mxu0 0.0
    %2440 = vmatprep.subr.mxu0 0.0
    %2441 = vmatpush2.msra.mxu0 0.0
    %2442 = vmatprep.subr.mxu0 0.0
    %2443 = vmatpush2.msra.mxu0 0.0
    %2444 = vmatprep.subr.mxu0 0.0
    %2445 = vmatpush2.msra.mxu0 0.0
    %2446 = vmatprep.subr.mxu0 0.0
    %2447 = vmatpush2.msra.mxu0 0.0
    %2448 = vmatprep.subr.mxu0 0.0
    %2449 = vmatpush2.msra.mxu0 0.0
    %2450 = vmatprep.subr.mxu0 0.0
    %2451 = vmatpush2.msra.mxu0 0.0
    %2452 = vmatprep.subr.mxu0 0.0
    %2453 = vmatpush2.msra.mxu0 0.0
    %2454 = vmatprep.subr.mxu0 0.0
    %2455 = vmatpush2.msra.mxu0 0.0
    %2456 = vmatprep.subr.mxu0 0.0
    %2457 = vmatpush2.msra.mxu0 0.0
    %2458 = vmatprep.subr.mxu0 0.0
    %2459 = vmatpush2.msra.mxu0 0.0
    %2460 = vmatprep.mubr.f32.mxu0 0.0
    %2461 = vmatmul.mubr.f32.gmra.mxu0 %v2385
    %v2462 = vpop.f32.mrf.mxu0
    %v2463 = vadd.f32 0.0, %v2462
    %v2464 = vpop.f32.mrf.mxu0
    %2465 = vmatprep.mubr.f32.mxu0 0.0
    %2466 = vmatmul.mubr.f32.gmra.mxu0 %v2388
    %v2467 = vpop.f32.mrf.mxu0
    %v2468 = vadd.f32 0.0, %v2467
    %v2469 = vpop.f32.mrf.mxu0
    %2470 = vmatprep.mubr.f32.mxu0 0.0
    %2471 = vmatmul.mubr.f32.gmra.mxu0 %v2391
    %v2472 = vpop.f32.mrf.mxu0
    %v2473 = vadd.f32 0.0, %v2472
    %v2474 = vpop.f32.mrf.mxu0
    %2475 = vmatprep.mubr.f32.mxu0 0.0
    %2476 = vmatmul.mubr.f32.gmra.mxu0 %v2394
    %v2477 = vpop.f32.mrf.mxu0
    %v2478 = vadd.f32 0.0, %v2477
    %v2479 = vpop.f32.mrf.mxu0
    %2480 = vdwg.mxu0
    %2481 = vst.msk [vmem:[#allocation2] sm:$0xff] %vm86, %v2377
    %2482 = vst.msk [vmem:[#allocation2 + $0x8] sm:$0xff] %vm86, %v2378
    %2483 = vst.msk [vmem:[#allocation2 + $0x10] sm:$0xff] %vm86, %v2379
    %2484 = vst.msk [vmem:[#allocation2 + $0x18] sm:$0xff] %vm86, %v2380
    %2485 = vrot.lane.b32.xlu0 %v2377, 16
    %v2486 = vpop.permute.xlu0 %2485
    %2487 = vrot.lane.b32.xlu0 %v2378, 16
    %v2488 = vpop.permute.xlu0 %2487
    %2489 = vrot.lane.b32.xlu0 %v2379, 16
    %v2490 = vpop.permute.xlu0 %2489
    %2491 = vrot.lane.b32.xlu0 %v2380, 16
    %v2492 = vpop.permute.xlu0 %2491
    %2497 = vst.msk [vmem:[#allocation2 + $0x20] sm:$0xff] %vm218, %v2486
    %2498 = vst.msk [vmem:[#allocation2 + $0x28] sm:$0xff] %vm218, %v2488
    %2499 = vst.msk [vmem:[#allocation2 + $0x30] sm:$0xff] %vm218, %v2490
    %2500 = vst.msk [vmem:[#allocation2 + $0x38] sm:$0xff] %vm218, %v2492
    %2501 = vrot.lane.b32.xlu0 %v2377, 32
    %v2502 = vpop.permute.xlu0 %2501
    %2503 = vrot.lane.b32.xlu0 %v2378, 32
    %v2504 = vpop.permute.xlu0 %2503
    %2505 = vrot.lane.b32.xlu0 %v2379, 32
    %v2506 = vpop.permute.xlu0 %2505
    %2507 = vrot.lane.b32.xlu0 %v2380, 32
    %v2508 = vpop.permute.xlu0 %2507
    %2513 = vst.msk [vmem:[#allocation2 + $0x40] sm:$0xff] %vm235, %v2502
    %2514 = vst.msk [vmem:[#allocation2 + $0x48] sm:$0xff] %vm235, %v2504
    %2515 = vst.msk [vmem:[#allocation2 + $0x50] sm:$0xff] %vm235, %v2506
    %2516 = vst.msk [vmem:[#allocation2 + $0x58] sm:$0xff] %vm235, %v2508
    %2517 = vrot.lane.b32.xlu0 %v2377, 48
    %v2518 = vpop.permute.xlu0 %2517
    %2519 = vrot.lane.b32.xlu0 %v2378, 48
    %v2520 = vpop.permute.xlu0 %2519
    %2521 = vrot.lane.b32.xlu0 %v2379, 48
    %v2522 = vpop.permute.xlu0 %2521
    %2523 = vrot.lane.b32.xlu0 %v2380, 48
    %v2524 = vpop.permute.xlu0 %2523
    %2529 = vst.msk [vmem:[#allocation2 + $0x60] sm:$0xff] %vm252, %v2518
    %2530 = vst.msk [vmem:[#allocation2 + $0x68] sm:$0xff] %vm252, %v2520
    %2531 = vst.msk [vmem:[#allocation2 + $0x70] sm:$0xff] %vm252, %v2522
    %2532 = vst.msk [vmem:[#allocation2 + $0x78] sm:$0xff] %vm252, %v2524
    %v2533 = vld [vmem:[#allocation2] sm:$0xff]
    %v2534 = vld [vmem:[#allocation2 + $0x8] sm:$0xff]
    %v2535 = vld [vmem:[#allocation2 + $0x10] sm:$0xff]
    %v2536 = vld [vmem:[#allocation2 + $0x18] sm:$0xff]
    %v2537 = vld [vmem:[#allocation2 + $0x20] sm:$0xff]
    %v2538 = vld [vmem:[#allocation2 + $0x28] sm:$0xff]
    %v2539 = vld [vmem:[#allocation2 + $0x30] sm:$0xff]
    %v2540 = vld [vmem:[#allocation2 + $0x38] sm:$0xff]
    %v2541 = vld [vmem:[#allocation2 + $0x40] sm:$0xff]
    %v2542 = vld [vmem:[#allocation2 + $0x48] sm:$0xff]
    %v2543 = vld [vmem:[#allocation2 + $0x50] sm:$0xff]
    %v2544 = vld [vmem:[#allocation2 + $0x58] sm:$0xff]
    %v2545 = vld [vmem:[#allocation2 + $0x60] sm:$0xff]
    %v2546 = vld [vmem:[#allocation2 + $0x68] sm:$0xff]
    %v2547 = vld [vmem:[#allocation2 + $0x70] sm:$0xff]
    %v2548 = vld [vmem:[#allocation2 + $0x78] sm:$0xff]
    %v2550 = vsel %vm69, %v2463, 0
    %v2553 = vsel %vm69, %v2468, 0
    %v2556 = vsel %vm69, %v2473, 0
    %v2559 = vsel %vm69, %v2478, 0
    %v2562 = vsel %vm69, %v2533, 0
    %v2565 = vsel %vm69, %v2534, 0
    %v2568 = vsel %vm69, %v2535, 0
    %v2571 = vsel %vm69, %v2536, 0
    %v2574 = vsel %vm69, %v2537, 0
    %v2577 = vsel %vm69, %v2538, 0
    %v2580 = vsel %vm69, %v2539, 0
    %v2583 = vsel %vm69, %v2540, 0
    %v2586 = vsel %vm69, %v2541, 0
    %v2589 = vsel %vm69, %v2542, 0
    %v2592 = vsel %vm69, %v2543, 0
    %v2595 = vsel %vm69, %v2544, 0
    %v2598 = vsel %vm69, %v2545, 0
    %v2601 = vsel %vm69, %v2546, 0
    %v2604 = vsel %vm69, %v2547, 0
    %v2607 = vsel %vm69, %v2548, 0
    %2609 = vmatprep.subr.mxu0 0.0
    %2610 = vmatpush1.xpose.msra.mxu0 %v2607
    %2611 = vmatprep.subr.mxu0 0.0
    %2612 = vmatpush1.xpose.msra.mxu0 %v2604
    %2613 = vmatprep.subr.mxu0 0.0
    %2614 = vmatpush1.xpose.msra.mxu0 %v2601
    %2615 = vmatprep.subr.mxu0 0.0
    %2616 = vmatpush1.xpose.msra.mxu0 %v2598
    %2617 = vmatprep.subr.mxu0 0.0
    %2618 = vmatpush1.xpose.msra.mxu0 %v2595
    %2619 = vmatprep.subr.mxu0 0.0
    %2620 = vmatpush1.xpose.msra.mxu0 %v2592
    %2621 = vmatprep.subr.mxu0 0.0
    %2622 = vmatpush1.xpose.msra.mxu0 %v2589
    %2623 = vmatprep.subr.mxu0 0.0
    %2624 = vmatpush1.xpose.msra.mxu0 %v2586
    %2625 = vmatprep.subr.mxu0 0.0
    %2626 = vmatpush1.xpose.msra.mxu0 %v2583
    %2627 = vmatprep.subr.mxu0 0.0
    %2628 = vmatpush1.xpose.msra.mxu0 %v2580
    %2629 = vmatprep.subr.mxu0 0.0
    %2630 = vmatpush1.xpose.msra.mxu0 %v2577
    %2631 = vmatprep.subr.mxu0 0.0
    %2632 = vmatpush1.xpose.msra.mxu0 %v2574
    %2633 = vmatprep.subr.mxu0 0.0
    %2634 = vmatpush1.xpose.msra.mxu0 %v2571
    %2635 = vmatprep.subr.mxu0 0.0
    %2636 = vmatpush1.xpose.msra.mxu0 %v2568
    %2637 = vmatprep.subr.mxu0 0.0
    %2638 = vmatpush1.xpose.msra.mxu0 %v2565
    %2639 = vmatprep.subr.mxu0 0.0
    %2640 = vmatpush1.xpose.msra.mxu0 %v2562
    %2641 = vmatprep.subr.mxu0 0.0
    %2642 = vmatpush2.xpose.msra.mxu0 0.0
    %2643 = vmatprep.subr.mxu0 0.0
    %2644 = vmatpush2.xpose.msra.mxu0 0.0
    %2645 = vmatprep.subr.mxu0 0.0
    %2646 = vmatpush2.xpose.msra.mxu0 0.0
    %2647 = vmatprep.subr.mxu0 0.0
    %2648 = vmatpush2.xpose.msra.mxu0 0.0
    %2649 = vmatprep.subr.mxu0 0.0
    %2650 = vmatpush2.xpose.msra.mxu0 0.0
    %2651 = vmatprep.subr.mxu0 0.0
    %2652 = vmatpush2.xpose.msra.mxu0 0.0
    %2653 = vmatprep.subr.mxu0 0.0
    %2654 = vmatpush2.xpose.msra.mxu0 0.0
    %2655 = vmatprep.subr.mxu0 0.0
    %2656 = vmatpush2.xpose.msra.mxu0 0.0
    %2657 = vmatprep.subr.mxu0 0.0
    %2658 = vmatpush2.xpose.msra.mxu0 0.0
    %2659 = vmatprep.subr.mxu0 0.0
    %2660 = vmatpush2.xpose.msra.mxu0 0.0
    %2661 = vmatprep.subr.mxu0 0.0
    %2662 = vmatpush2.xpose.msra.mxu0 0.0
    %2663 = vmatprep.subr.mxu0 0.0
    %2664 = vmatpush2.xpose.msra.mxu0 0.0
    %2665 = vmatprep.subr.mxu0 0.0
    %2666 = vmatpush2.xpose.msra.mxu0 0.0
    %2667 = vmatprep.subr.mxu0 0.0
    %2668 = vmatpush2.xpose.msra.mxu0 0.0
    %2669 = vmatprep.subr.mxu0 0.0
    %2670 = vmatpush2.xpose.msra.mxu0 0.0
    %2671 = vmatprep.subr.mxu0 0.0
    %2672 = vmatpush2.xpose.msra.mxu0 0.0
    %2673 = vmatprep.mubr.f32.mxu0 0.0
    %2674 = vmatmul.mubr.f32.gmra.mxu0 %v2550
    %v2675 = vpop.f32.mrf.mxu0
    %v2676 = vadd.f32 %v48, %v2675
    %v2677 = vpop.f32.mrf.mxu0
    %2678 = vmatprep.mubr.f32.mxu0 0.0
    %2679 = vmatmul.mubr.f32.gmra.mxu0 %v2553
    %v2680 = vpop.f32.mrf.mxu0
    %v2681 = vadd.f32 %v49, %v2680
    %v2682 = vpop.f32.mrf.mxu0
    %2683 = vmatprep.mubr.f32.mxu0 0.0
    %2684 = vmatmul.mubr.f32.gmra.mxu0 %v2556
    %v2685 = vpop.f32.mrf.mxu0
    %v2686 = vadd.f32 %v50, %v2685
    %v2687 = vpop.f32.mrf.mxu0
    %2688 = vmatprep.mubr.f32.mxu0 0.0
    %2689 = vmatmul.mubr.f32.gmra.mxu0 %v2559
    %v2690 = vpop.f32.mrf.mxu0
    %v2691 = vadd.f32 %v51, %v2690
    %v2692 = vpop.f32.mrf.mxu0
    %2693 = vdwg.mxu0
    %2694 = vmax.xlane.f32.xlu0 %v2676
    %v2695 = vpop.xlane.xlu0 %2694
    %2696 = vmax.xlane.f32.xlu0 %v2681
    %v2697 = vpop.xlane.xlu0 %2696
    %2698 = vmax.xlane.f32.xlu0 %v2686
    %v2699 = vpop.xlane.xlu0 %2698
    %2700 = vmax.xlane.f32.xlu0 %v2691
    %v2701 = vpop.xlane.xlu0 %2700
    %v2702 = vsub.f32 %v2676, %v2695
    %v2703 = vsub.f32 %v2681, %v2697
    %v2704 = vsub.f32 %v2686, %v2699
    %v2705 = vsub.f32 %v2691, %v2701
    %v2706 = vmul.f32 %v2702, 1.442695
    %v2707 = vpow.pop %v2706
    %v2708 = vmul.f32 %v2703, 1.442695
    %v2709 = vpow.pop %v2708
    %v2710 = vmul.f32 %v2704, 1.442695
    %v2711 = vpow.pop %v2710
    %v2712 = vmul.f32 %v2705, 1.442695
    %v2713 = vpow.pop %v2712
    %s2714 = scalar_lea.vmem [#allocation4], 48
    %v2715 = vld [vmem:[%s2714] sm:$0xff]
    %v2716 = vld [vmem:[%s2714 + $0x8] sm:$0xff]
    %2717 = vmatprep.subr.mxu0 0.0
    %2718 = vmatpush1.msra.mxu0 0.0
    %2719 = vmatprep.subr.mxu0 0.0
    %2720 = vmatpush1.msra.mxu0 0.0
    %2721 = vmatprep.subr.mxu0 0.0
    %2722 = vmatpush1.msra.mxu0 0.0
    %2723 = vmatprep.subr.mxu0 0.0
    %2724 = vmatpush1.msra.mxu0 0.0
    %2725 = vmatprep.subr.mxu0 0.0
    %2726 = vmatpush1.msra.mxu0 0.0
    %2727 = vmatprep.subr.mxu0 0.0
    %2728 = vmatpush1.msra.mxu0 0.0
    %2729 = vmatprep.subr.mxu0 0.0
    %2730 = vmatpush1.msra.mxu0 0.0
    %2731 = vmatprep.subr.mxu0 0.0
    %2732 = vmatpush1.msra.mxu0 0.0
    %2733 = vmatprep.subr.mxu0 0.0
    %2734 = vmatpush1.msra.mxu0 0.0
    %2735 = vmatprep.subr.mxu0 0.0
    %2736 = vmatpush1.msra.mxu0 0.0
    %2737 = vmatprep.subr.mxu0 0.0
    %2738 = vmatpush1.msra.mxu0 0.0
    %2739 = vmatprep.subr.mxu0 0.0
    %2740 = vmatpush1.msra.mxu0 0.0
    %2741 = vmatprep.subr.mxu0 0.0
    %2742 = vmatpush1.msra.mxu0 0.0
    %2743 = vmatprep.subr.mxu0 0.0
    %2744 = vmatpush1.msra.mxu0 0.0
    %2745 = vmatprep.subr.mxu0 0.0
    %2746 = vmatpush1.msra.mxu0 %v2716
    %2747 = vmatprep.subr.mxu0 0.0
    %2748 = vmatpush1.msra.mxu0 %v2715
    %2749 = vmatprep.subr.mxu0 0.0
    %2750 = vmatpush2.msra.mxu0 0.0
    %2751 = vmatprep.subr.mxu0 0.0
    %2752 = vmatpush2.msra.mxu0 0.0
    %2753 = vmatprep.subr.mxu0 0.0
    %2754 = vmatpush2.msra.mxu0 0.0
    %2755 = vmatprep.subr.mxu0 0.0
    %2756 = vmatpush2.msra.mxu0 0.0
    %2757 = vmatprep.subr.mxu0 0.0
    %2758 = vmatpush2.msra.mxu0 0.0
    %2759 = vmatprep.subr.mxu0 0.0
    %2760 = vmatpush2.msra.mxu0 0.0
    %2761 = vmatprep.subr.mxu0 0.0
    %2762 = vmatpush2.msra.mxu0 0.0
    %2763 = vmatprep.subr.mxu0 0.0
    %2764 = vmatpush2.msra.mxu0 0.0
    %2765 = vmatprep.subr.mxu0 0.0
    %2766 = vmatpush2.msra.mxu0 0.0
    %2767 = vmatprep.subr.mxu0 0.0
    %2768 = vmatpush2.msra.mxu0 0.0
    %2769 = vmatprep.subr.mxu0 0.0
    %2770 = vmatpush2.msra.mxu0 0.0
    %2771 = vmatprep.subr.mxu0 0.0
    %2772 = vmatpush2.msra.mxu0 0.0
    %2773 = vmatprep.subr.mxu0 0.0
    %2774 = vmatpush2.msra.mxu0 0.0
    %2775 = vmatprep.subr.mxu0 0.0
    %2776 = vmatpush2.msra.mxu0 0.0
    %2777 = vmatprep.subr.mxu0 0.0
    %2778 = vmatpush2.msra.mxu0 0.0
    %2779 = vmatprep.subr.mxu0 0.0
    %2780 = vmatpush2.msra.mxu0 0.0
    %2781 = vmatprep.mubr.f32.mxu0 0.0
    %2782 = vmatmul.mubr.f32.gmra.mxu0 %v2385
    %v2783 = vpop.f32.mrf.mxu0
    %v2784 = vadd.f32 0.0, %v2783
    %v2785 = vpop.f32.mrf.mxu0
    %2786 = vmatprep.mubr.f32.mxu0 0.0
    %2787 = vmatmul.mubr.f32.gmra.mxu0 %v2388
    %v2788 = vpop.f32.mrf.mxu0
    %v2789 = vadd.f32 0.0, %v2788
    %v2790 = vpop.f32.mrf.mxu0
    %2791 = vmatprep.mubr.f32.mxu0 0.0
    %2792 = vmatmul.mubr.f32.gmra.mxu0 %v2391
    %v2793 = vpop.f32.mrf.mxu0
    %v2794 = vadd.f32 0.0, %v2793
    %v2795 = vpop.f32.mrf.mxu0
    %2796 = vmatprep.mubr.f32.mxu0 0.0
    %2797 = vmatmul.mubr.f32.gmra.mxu0 %v2394
    %v2798 = vpop.f32.mrf.mxu0
    %v2799 = vadd.f32 0.0, %v2798
    %v2800 = vpop.f32.mrf.mxu0
    %2801 = vdwg.mxu0
    %v2802 = vmul.f32 %v2784, %v528
    %v2803 = vmul.f32 %v2789, %v528
    %v2804 = vmul.f32 %v2794, %v528
    %v2805 = vmul.f32 %v2799, %v528
    %2806 = vst.msk [vmem:[#allocation3] sm:$0xff] %vm86, %v2802
    %2807 = vst.msk [vmem:[#allocation3 + $0x8] sm:$0xff] %vm86, %v2803
    %2808 = vst.msk [vmem:[#allocation3 + $0x10] sm:$0xff] %vm86, %v2804
    %2809 = vst.msk [vmem:[#allocation3 + $0x18] sm:$0xff] %vm86, %v2805
    %v2810 = vmul.f32 %v2784, %v540
    %v2811 = vmul.f32 %v2789, %v540
    %v2812 = vmul.f32 %v2794, %v540
    %v2813 = vmul.f32 %v2799, %v540
    %2814 = vst.msk [vmem:[#allocation3 + $0x20] sm:$0xff] %vm86, %v2810
    %2815 = vst.msk [vmem:[#allocation3 + $0x28] sm:$0xff] %vm86, %v2811
    %2816 = vst.msk [vmem:[#allocation3 + $0x30] sm:$0xff] %vm86, %v2812
    %2817 = vst.msk [vmem:[#allocation3 + $0x38] sm:$0xff] %vm86, %v2813
    %v2818 = vmul.f32 %v2784, %v552
    %v2819 = vmul.f32 %v2789, %v552
    %v2820 = vmul.f32 %v2794, %v552
    %v2821 = vmul.f32 %v2799, %v552
    %2822 = vst.msk [vmem:[#allocation3 + $0x40] sm:$0xff] %vm86, %v2818
    %2823 = vst.msk [vmem:[#allocation3 + $0x48] sm:$0xff] %vm86, %v2819
    %2824 = vst.msk [vmem:[#allocation3 + $0x50] sm:$0xff] %vm86, %v2820
    %2825 = vst.msk [vmem:[#allocation3 + $0x58] sm:$0xff] %vm86, %v2821
    %v2826 = vmul.f32 %v2784, %v564
    %v2827 = vmul.f32 %v2789, %v564
    %v2828 = vmul.f32 %v2794, %v564
    %v2829 = vmul.f32 %v2799, %v564
    %2830 = vst.msk [vmem:[#allocation3 + $0x60] sm:$0xff] %vm86, %v2826
    %2831 = vst.msk [vmem:[#allocation3 + $0x68] sm:$0xff] %vm86, %v2827
    %2832 = vst.msk [vmem:[#allocation3 + $0x70] sm:$0xff] %vm86, %v2828
    %2833 = vst.msk [vmem:[#allocation3 + $0x78] sm:$0xff] %vm86, %v2829
    %v2834 = vld [vmem:[#allocation3] sm:$0xff]
    %v2835 = vld [vmem:[#allocation3 + $0x8] sm:$0xff]
    %v2836 = vld [vmem:[#allocation3 + $0x10] sm:$0xff]
    %v2837 = vld [vmem:[#allocation3 + $0x18] sm:$0xff]
    %v2838 = vld [vmem:[#allocation3 + $0x20] sm:$0xff]
    %v2839 = vld [vmem:[#allocation3 + $0x28] sm:$0xff]
    %v2840 = vld [vmem:[#allocation3 + $0x30] sm:$0xff]
    %v2841 = vld [vmem:[#allocation3 + $0x38] sm:$0xff]
    %v2842 = vld [vmem:[#allocation3 + $0x40] sm:$0xff]
    %v2843 = vld [vmem:[#allocation3 + $0x48] sm:$0xff]
    %v2844 = vld [vmem:[#allocation3 + $0x50] sm:$0xff]
    %v2845 = vld [vmem:[#allocation3 + $0x58] sm:$0xff]
    %v2846 = vld [vmem:[#allocation3 + $0x60] sm:$0xff]
    %v2847 = vld [vmem:[#allocation3 + $0x68] sm:$0xff]
    %v2848 = vld [vmem:[#allocation3 + $0x70] sm:$0xff]
    %v2849 = vld [vmem:[#allocation3 + $0x78] sm:$0xff]
    %2850 = vmatprep.subr.mxu0 0.0
    %2851 = vmatpush1.msra.mxu0 %v2849
    %2852 = vmatprep.subr.mxu0 0.0
    %2853 = vmatpush1.msra.mxu0 %v2848
    %2854 = vmatprep.subr.mxu0 0.0
    %2855 = vmatpush1.msra.mxu0 %v2847
    %2856 = vmatprep.subr.mxu0 0.0
    %2857 = vmatpush1.msra.mxu0 %v2846
    %2858 = vmatprep.subr.mxu0 0.0
    %2859 = vmatpush1.msra.mxu0 %v2845
    %2860 = vmatprep.subr.mxu0 0.0
    %2861 = vmatpush1.msra.mxu0 %v2844
    %2862 = vmatprep.subr.mxu0 0.0
    %2863 = vmatpush1.msra.mxu0 %v2843
    %2864 = vmatprep.subr.mxu0 0.0
    %2865 = vmatpush1.msra.mxu0 %v2842
    %2866 = vmatprep.subr.mxu0 0.0
    %2867 = vmatpush1.msra.mxu0 %v2841
    %2868 = vmatprep.subr.mxu0 0.0
    %2869 = vmatpush1.msra.mxu0 %v2840
    %2870 = vmatprep.subr.mxu0 0.0
    %2871 = vmatpush1.msra.mxu0 %v2839
    %2872 = vmatprep.subr.mxu0 0.0
    %2873 = vmatpush1.msra.mxu0 %v2838
    %2874 = vmatprep.subr.mxu0 0.0
    %2875 = vmatpush1.msra.mxu0 %v2837
    %2876 = vmatprep.subr.mxu0 0.0
    %2877 = vmatpush1.msra.mxu0 %v2836
    %2878 = vmatprep.subr.mxu0 0.0
    %2879 = vmatpush1.msra.mxu0 %v2835
    %2880 = vmatprep.subr.mxu0 0.0
    %2881 = vmatpush1.msra.mxu0 %v2834
    %2882 = vmatprep.subr.mxu0 0.0
    %2883 = vmatpush2.msra.mxu0 0.0
    %2884 = vmatprep.subr.mxu0 0.0
    %2885 = vmatpush2.msra.mxu0 0.0
    %2886 = vmatprep.subr.mxu0 0.0
    %2887 = vmatpush2.msra.mxu0 0.0
    %2888 = vmatprep.subr.mxu0 0.0
    %2889 = vmatpush2.msra.mxu0 0.0
    %2890 = vmatprep.subr.mxu0 0.0
    %2891 = vmatpush2.msra.mxu0 0.0
    %2892 = vmatprep.subr.mxu0 0.0
    %2893 = vmatpush2.msra.mxu0 0.0
    %2894 = vmatprep.subr.mxu0 0.0
    %2895 = vmatpush2.msra.mxu0 0.0
    %2896 = vmatprep.subr.mxu0 0.0
    %2897 = vmatpush2.msra.mxu0 0.0
    %2898 = vmatprep.subr.mxu0 0.0
    %2899 = vmatpush2.msra.mxu0 0.0
    %2900 = vmatprep.subr.mxu0 0.0
    %2901 = vmatpush2.msra.mxu0 0.0
    %2902 = vmatprep.subr.mxu0 0.0
    %2903 = vmatpush2.msra.mxu0 0.0
    %2904 = vmatprep.subr.mxu0 0.0
    %2905 = vmatpush2.msra.mxu0 0.0
    %2906 = vmatprep.subr.mxu0 0.0
    %2907 = vmatpush2.msra.mxu0 0.0
    %2908 = vmatprep.subr.mxu0 0.0
    %2909 = vmatpush2.msra.mxu0 0.0
    %2910 = vmatprep.subr.mxu0 0.0
    %2911 = vmatpush2.msra.mxu0 0.0
    %2912 = vmatprep.subr.mxu0 0.0
    %2913 = vmatpush2.msra.mxu0 0.0
    %2914 = vmatprep.mubr.f32.mxu0 0.0
    %2915 = vmatmul.mubr.f32.gmra.mxu0 %v2707
    %v2916 = vpop.f32.mrf.mxu0
    %v2917 = vadd.f32 0.0, %v2916
    %v2918 = vpop.f32.mrf.mxu0
    %2919 = vmatprep.mubr.f32.mxu0 0.0
    %2920 = vmatmul.mubr.f32.gmra.mxu0 %v2709
    %v2921 = vpop.f32.mrf.mxu0
    %v2922 = vadd.f32 0.0, %v2921
    %v2923 = vpop.f32.mrf.mxu0
    %2924 = vmatprep.mubr.f32.mxu0 0.0
    %2925 = vmatmul.mubr.f32.gmra.mxu0 %v2711
    %v2926 = vpop.f32.mrf.mxu0
    %v2927 = vadd.f32 0.0, %v2926
    %v2928 = vpop.f32.mrf.mxu0
    %2929 = vmatprep.mubr.f32.mxu0 0.0
    %2930 = vmatmul.mubr.f32.gmra.mxu0 %v2713
    %v2931 = vpop.f32.mrf.mxu0
    %v2932 = vadd.f32 0.0, %v2931
    %v2933 = vpop.f32.mrf.mxu0
    %2934 = vdwg.mxu0
    %2935 = vmatprep.subr.mxu0 0.0
    %2936 = vmatpush1.msra.mxu0 %v67
    %2937 = vmatprep.subr.mxu0 0.0
    %2938 = vmatpush1.msra.mxu0 %v66
    %2939 = vmatprep.subr.mxu0 0.0
    %2940 = vmatpush1.msra.mxu0 %v65
    %2941 = vmatprep.subr.mxu0 0.0
    %2942 = vmatpush1.msra.mxu0 %v64
    %2943 = vmatprep.subr.mxu0 0.0
    %2944 = vmatpush1.msra.mxu0 %v63
    %2945 = vmatprep.subr.mxu0 0.0
    %2946 = vmatpush1.msra.mxu0 %v62
    %2947 = vmatprep.subr.mxu0 0.0
    %2948 = vmatpush1.msra.mxu0 %v61
    %2949 = vmatprep.subr.mxu0 0.0
    %2950 = vmatpush1.msra.mxu0 %v60
    %2951 = vmatprep.subr.mxu0 0.0
    %2952 = vmatpush1.msra.mxu0 %v59
    %2953 = vmatprep.subr.mxu0 0.0
    %2954 = vmatpush1.msra.mxu0 %v58
    %2955 = vmatprep.subr.mxu0 0.0
    %2956 = vmatpush1.msra.mxu0 %v57
    %2957 = vmatprep.subr.mxu0 0.0
    %2958 = vmatpush1.msra.mxu0 %v56
    %2959 = vmatprep.subr.mxu0 0.0
    %2960 = vmatpush1.msra.mxu0 %v55
    %2961 = vmatprep.subr.mxu0 0.0
    %2962 = vmatpush1.msra.mxu0 %v54
    %2963 = vmatprep.subr.mxu0 0.0
    %2964 = vmatpush1.msra.mxu0 %v53
    %2965 = vmatprep.subr.mxu0 0.0
    %2966 = vmatpush1.msra.mxu0 %v52
    %2967 = vmatprep.subr.mxu0 0.0
    %2968 = vmatpush2.msra.mxu0 0.0
    %2969 = vmatprep.subr.mxu0 0.0
    %2970 = vmatpush2.msra.mxu0 0.0
    %2971 = vmatprep.subr.mxu0 0.0
    %2972 = vmatpush2.msra.mxu0 0.0
    %2973 = vmatprep.subr.mxu0 0.0
    %2974 = vmatpush2.msra.mxu0 0.0
    %2975 = vmatprep.subr.mxu0 0.0
    %2976 = vmatpush2.msra.mxu0 0.0
    %2977 = vmatprep.subr.mxu0 0.0
    %2978 = vmatpush2.msra.mxu0 0.0
    %2979 = vmatprep.subr.mxu0 0.0
    %2980 = vmatpush2.msra.mxu0 0.0
    %2981 = vmatprep.subr.mxu0 0.0
    %2982 = vmatpush2.msra.mxu0 0.0
    %2983 = vmatprep.subr.mxu0 0.0
    %2984 = vmatpush2.msra.mxu0 0.0
    %2985 = vmatprep.subr.mxu0 0.0
    %2986 = vmatpush2.msra.mxu0 0.0
    %2987 = vmatprep.subr.mxu0 0.0
    %2988 = vmatpush2.msra.mxu0 0.0
    %2989 = vmatprep.subr.mxu0 0.0
    %2990 = vmatpush2.msra.mxu0 0.0
    %2991 = vmatprep.subr.mxu0 0.0
    %2992 = vmatpush2.msra.mxu0 0.0
    %2993 = vmatprep.subr.mxu0 0.0
    %2994 = vmatpush2.msra.mxu0 0.0
    %2995 = vmatprep.subr.mxu0 0.0
    %2996 = vmatpush2.msra.mxu0 0.0
    %2997 = vmatprep.subr.mxu0 0.0
    %2998 = vmatpush2.msra.mxu0 0.0
    %2999 = vmatprep.mubr.f32.mxu0 0.0
    %3000 = vmatmul.mubr.f32.gmra.mxu0 %v2707
    %v3001 = vpop.f32.mrf.mxu0
    %v3002 = vadd.f32 0.0, %v3001
    %v3003 = vpop.f32.mrf.mxu0
    %3004 = vmatprep.mubr.f32.mxu0 0.0
    %3005 = vmatmul.mubr.f32.gmra.mxu0 %v2709
    %v3006 = vpop.f32.mrf.mxu0
    %v3007 = vadd.f32 0.0, %v3006
    %v3008 = vpop.f32.mrf.mxu0
    %3009 = vmatprep.mubr.f32.mxu0 0.0
    %3010 = vmatmul.mubr.f32.gmra.mxu0 %v2711
    %v3011 = vpop.f32.mrf.mxu0
    %v3012 = vadd.f32 0.0, %v3011
    %v3013 = vpop.f32.mrf.mxu0
    %3014 = vmatprep.mubr.f32.mxu0 0.0
    %3015 = vmatmul.mubr.f32.gmra.mxu0 %v2713
    %v3016 = vpop.f32.mrf.mxu0
    %v3017 = vadd.f32 0.0, %v3016
    %v3018 = vpop.f32.mrf.mxu0
    %3019 = vdwg.mxu0
    %v3020 = vrcp.pop %v3002
    %v3021 = vmul.f32 1.0, %v3020
    %v3022 = vrcp.pop %v3007
    %v3023 = vmul.f32 1.0, %v3022
    %v3024 = vrcp.pop %v3012
    %v3025 = vmul.f32 1.0, %v3024
    %v3026 = vrcp.pop %v3017
    %v3027 = vmul.f32 1.0, %v3026
    %v3029 = vsel %vm767, %v3021, 0
    %v3032 = vsel %vm767, %v3023, 0
    %v3035 = vsel %vm767, %v3025, 0
    %v3038 = vsel %vm767, %v3027, 0
    %3040 = vmatprep.subr.mxu0 0.0
    %3041 = vmatpush1.msra.mxu0 0.0
    %3042 = vmatprep.subr.mxu0 0.0
    %3043 = vmatpush1.msra.mxu0 0.0
    %3044 = vmatprep.subr.mxu0 0.0
    %3045 = vmatpush1.msra.mxu0 0.0
    %3046 = vmatprep.subr.mxu0 0.0
    %3047 = vmatpush1.msra.mxu0 0.0
    %3048 = vmatprep.subr.mxu0 0.0
    %3049 = vmatpush1.msra.mxu0 0.0
    %3050 = vmatprep.subr.mxu0 0.0
    %3051 = vmatpush1.msra.mxu0 0.0
    %3052 = vmatprep.subr.mxu0 0.0
    %3053 = vmatpush1.msra.mxu0 0.0
    %3054 = vmatprep.subr.mxu0 0.0
    %3055 = vmatpush1.msra.mxu0 0.0
    %3056 = vmatprep.subr.mxu0 0.0
    %3057 = vmatpush1.msra.mxu0 0.0
    %3058 = vmatprep.subr.mxu0 0.0
    %3059 = vmatpush1.msra.mxu0 0.0
    %3060 = vmatprep.subr.mxu0 0.0
    %3061 = vmatpush1.msra.mxu0 0.0
    %3062 = vmatprep.subr.mxu0 0.0
    %3063 = vmatpush1.msra.mxu0 0.0
    %3064 = vmatprep.subr.mxu0 0.0
    %3065 = vmatpush1.msra.mxu0 0.0
    %3066 = vmatprep.subr.mxu0 0.0
    %3067 = vmatpush1.msra.mxu0 0.0
    %3068 = vmatprep.subr.mxu0 0.0
    %3069 = vmatpush1.msra.mxu0 0.0
    %3070 = vmatprep.subr.mxu0 0.0
    %3071 = vmatpush1.msra.mxu0 %v782
    %3072 = vmatprep.subr.mxu0 0.0
    %3073 = vmatpush2.msra.mxu0 0.0
    %3074 = vmatprep.subr.mxu0 0.0
    %3075 = vmatpush2.msra.mxu0 0.0
    %3076 = vmatprep.subr.mxu0 0.0
    %3077 = vmatpush2.msra.mxu0 0.0
    %3078 = vmatprep.subr.mxu0 0.0
    %3079 = vmatpush2.msra.mxu0 0.0
    %3080 = vmatprep.subr.mxu0 0.0
    %3081 = vmatpush2.msra.mxu0 0.0
    %3082 = vmatprep.subr.mxu0 0.0
    %3083 = vmatpush2.msra.mxu0 0.0
    %3084 = vmatprep.subr.mxu0 0.0
    %3085 = vmatpush2.msra.mxu0 0.0
    %3086 = vmatprep.subr.mxu0 0.0
    %3087 = vmatpush2.msra.mxu0 0.0
    %3088 = vmatprep.subr.mxu0 0.0
    %3089 = vmatpush2.msra.mxu0 0.0
    %3090 = vmatprep.subr.mxu0 0.0
    %3091 = vmatpush2.msra.mxu0 0.0
    %3092 = vmatprep.subr.mxu0 0.0
    %3093 = vmatpush2.msra.mxu0 0.0
    %3094 = vmatprep.subr.mxu0 0.0
    %3095 = vmatpush2.msra.mxu0 0.0
    %3096 = vmatprep.subr.mxu0 0.0
    %3097 = vmatpush2.msra.mxu0 0.0
    %3098 = vmatprep.subr.mxu0 0.0
    %3099 = vmatpush2.msra.mxu0 0.0
    %3100 = vmatprep.subr.mxu0 0.0
    %3101 = vmatpush2.msra.mxu0 0.0
    %3102 = vmatprep.subr.mxu0 0.0
    %3103 = vmatpush2.msra.mxu0 0.0
    %3104 = vmatprep.mubr.f32.mxu0 0.0
    %3105 = vmatmul.mubr.f32.gmra.mxu0 %v3029
    %v3106 = vpop.f32.mrf.mxu0
    %v3107 = vadd.f32 0.0, %v3106
    %v3108 = vpop.f32.mrf.mxu0
    %3109 = vmatprep.mubr.f32.mxu0 0.0
    %3110 = vmatmul.mubr.f32.gmra.mxu0 %v3032
    %v3111 = vpop.f32.mrf.mxu0
    %v3112 = vadd.f32 0.0, %v3111
    %v3113 = vpop.f32.mrf.mxu0
    %3114 = vmatprep.mubr.f32.mxu0 0.0
    %3115 = vmatmul.mubr.f32.gmra.mxu0 %v3035
    %v3116 = vpop.f32.mrf.mxu0
    %v3117 = vadd.f32 0.0, %v3116
    %v3118 = vpop.f32.mrf.mxu0
    %3119 = vmatprep.mubr.f32.mxu0 0.0
    %3120 = vmatmul.mubr.f32.gmra.mxu0 %v3038
    %v3121 = vpop.f32.mrf.mxu0
    %v3122 = vadd.f32 0.0, %v3121
    %v3123 = vpop.f32.mrf.mxu0
    %3124 = vdwg.mxu0
    %v3125 = vmul.f32 %v2917, %v3107
    %v3126 = vmul.f32 %v2922, %v3112
    %v3127 = vmul.f32 %v2927, %v3117
    %v3128 = vmul.f32 %v2932, %v3122
    %v3129 = vadd.f32 %v2377, %v3125
    %v3130 = vadd.f32 %v2378, %v3126
    %v3131 = vadd.f32 %v2379, %v3127
    %v3132 = vadd.f32 %v2380, %v3128
    %s3133 = scalar_lea.vmem %s2, 64
    %v3134 = vld [vmem:[%s3133] sm:$0xff]
    %v3135 = vld [vmem:[%s3133 + $0x8] sm:$0xff]
    %v3137 = vsel %vm86, %v3129, 0
    %v3140 = vsel %vm86, %v3130, 0
    %v3143 = vsel %vm86, %v3131, 0
    %v3146 = vsel %vm86, %v3132, 0
    %3148 = vmatprep.subr.mxu0 0.0
    %3149 = vmatpush1.msra.mxu0 0.0
    %3150 = vmatprep.subr.mxu0 0.0
    %3151 = vmatpush1.msra.mxu0 0.0
    %3152 = vmatprep.subr.mxu0 0.0
    %3153 = vmatpush1.msra.mxu0 0.0
    %3154 = vmatprep.subr.mxu0 0.0
    %3155 = vmatpush1.msra.mxu0 0.0
    %3156 = vmatprep.subr.mxu0 0.0
    %3157 = vmatpush1.msra.mxu0 0.0
    %3158 = vmatprep.subr.mxu0 0.0
    %3159 = vmatpush1.msra.mxu0 0.0
    %3160 = vmatprep.subr.mxu0 0.0
    %3161 = vmatpush1.msra.mxu0 0.0
    %3162 = vmatprep.subr.mxu0 0.0
    %3163 = vmatpush1.msra.mxu0 0.0
    %3164 = vmatprep.subr.mxu0 0.0
    %3165 = vmatpush1.msra.mxu0 0.0
    %3166 = vmatprep.subr.mxu0 0.0
    %3167 = vmatpush1.msra.mxu0 0.0
    %3168 = vmatprep.subr.mxu0 0.0
    %3169 = vmatpush1.msra.mxu0 0.0
    %3170 = vmatprep.subr.mxu0 0.0
    %3171 = vmatpush1.msra.mxu0 0.0
    %3172 = vmatprep.subr.mxu0 0.0
    %3173 = vmatpush1.msra.mxu0 0.0
    %3174 = vmatprep.subr.mxu0 0.0
    %3175 = vmatpush1.msra.mxu0 0.0
    %3176 = vmatprep.subr.mxu0 0.0
    %3177 = vmatpush1.msra.mxu0 %v3135
    %3178 = vmatprep.subr.mxu0 0.0
    %3179 = vmatpush1.msra.mxu0 %v3134
    %3180 = vmatprep.subr.mxu0 0.0
    %3181 = vmatpush2.msra.mxu0 0.0
    %3182 = vmatprep.subr.mxu0 0.0
    %3183 = vmatpush2.msra.mxu0 0.0
    %3184 = vmatprep.subr.mxu0 0.0
    %3185 = vmatpush2.msra.mxu0 0.0
    %3186 = vmatprep.subr.mxu0 0.0
    %3187 = vmatpush2.msra.mxu0 0.0
    %3188 = vmatprep.subr.mxu0 0.0
    %3189 = vmatpush2.msra.mxu0 0.0
    %3190 = vmatprep.subr.mxu0 0.0
    %3191 = vmatpush2.msra.mxu0 0.0
    %3192 = vmatprep.subr.mxu0 0.0
    %3193 = vmatpush2.msra.mxu0 0.0
    %3194 = vmatprep.subr.mxu0 0.0
    %3195 = vmatpush2.msra.mxu0 0.0
    %3196 = vmatprep.subr.mxu0 0.0
    %3197 = vmatpush2.msra.mxu0 0.0
    %3198 = vmatprep.subr.mxu0 0.0
    %3199 = vmatpush2.msra.mxu0 0.0
    %3200 = vmatprep.subr.mxu0 0.0
    %3201 = vmatpush2.msra.mxu0 0.0
    %3202 = vmatprep.subr.mxu0 0.0
    %3203 = vmatpush2.msra.mxu0 0.0
    %3204 = vmatprep.subr.mxu0 0.0
    %3205 = vmatpush2.msra.mxu0 0.0
    %3206 = vmatprep.subr.mxu0 0.0
    %3207 = vmatpush2.msra.mxu0 0.0
    %3208 = vmatprep.subr.mxu0 0.0
    %3209 = vmatpush2.msra.mxu0 0.0
    %3210 = vmatprep.subr.mxu0 0.0
    %3211 = vmatpush2.msra.mxu0 0.0
    %3212 = vmatprep.mubr.f32.mxu0 0.0
    %3213 = vmatmul.mubr.f32.gmra.mxu0 %v3137
    %v3214 = vpop.f32.mrf.mxu0
    %v3215 = vadd.f32 0.0, %v3214
    %v3216 = vpop.f32.mrf.mxu0
    %3217 = vmatprep.mubr.f32.mxu0 0.0
    %3218 = vmatmul.mubr.f32.gmra.mxu0 %v3140
    %v3219 = vpop.f32.mrf.mxu0
    %v3220 = vadd.f32 0.0, %v3219
    %v3221 = vpop.f32.mrf.mxu0
    %3222 = vmatprep.mubr.f32.mxu0 0.0
    %3223 = vmatmul.mubr.f32.gmra.mxu0 %v3143
    %v3224 = vpop.f32.mrf.mxu0
    %v3225 = vadd.f32 0.0, %v3224
    %v3226 = vpop.f32.mrf.mxu0
    %3227 = vmatprep.mubr.f32.mxu0 0.0
    %3228 = vmatmul.mubr.f32.gmra.mxu0 %v3146
    %v3229 = vpop.f32.mrf.mxu0
    %v3230 = vadd.f32 0.0, %v3229
    %v3231 = vpop.f32.mrf.mxu0
    %3232 = vdwg.mxu0
    %3233 = vst.msk [vmem:[#allocation2] sm:$0xff] %vm86, %v3129
    %3234 = vst.msk [vmem:[#allocation2 + $0x8] sm:$0xff] %vm86, %v3130
    %3235 = vst.msk [vmem:[#allocation2 + $0x10] sm:$0xff] %vm86, %v3131
    %3236 = vst.msk [vmem:[#allocation2 + $0x18] sm:$0xff] %vm86, %v3132
    %3237 = vrot.lane.b32.xlu0 %v3129, 16
    %v3238 = vpop.permute.xlu0 %3237
    %3239 = vrot.lane.b32.xlu0 %v3130, 16
    %v3240 = vpop.permute.xlu0 %3239
    %3241 = vrot.lane.b32.xlu0 %v3131, 16
    %v3242 = vpop.permute.xlu0 %3241
    %3243 = vrot.lane.b32.xlu0 %v3132, 16
    %v3244 = vpop.permute.xlu0 %3243
    %3249 = vst.msk [vmem:[#allocation2 + $0x20] sm:$0xff] %vm218, %v3238
    %3250 = vst.msk [vmem:[#allocation2 + $0x28] sm:$0xff] %vm218, %v3240
    %3251 = vst.msk [vmem:[#allocation2 + $0x30] sm:$0xff] %vm218, %v3242
    %3252 = vst.msk [vmem:[#allocation2 + $0x38] sm:$0xff] %vm218, %v3244
    %3253 = vrot.lane.b32.xlu0 %v3129, 32
    %v3254 = vpop.permute.xlu0 %3253
    %3255 = vrot.lane.b32.xlu0 %v3130, 32
    %v3256 = vpop.permute.xlu0 %3255
    %3257 = vrot.lane.b32.xlu0 %v3131, 32
    %v3258 = vpop.permute.xlu0 %3257
    %3259 = vrot.lane.b32.xlu0 %v3132, 32
    %v3260 = vpop.permute.xlu0 %3259
    %3265 = vst.msk [vmem:[#allocation2 + $0x40] sm:$0xff] %vm235, %v3254
    %3266 = vst.msk [vmem:[#allocation2 + $0x48] sm:$0xff] %vm235, %v3256
    %3267 = vst.msk [vmem:[#allocation2 + $0x50] sm:$0xff] %vm235, %v3258
    %3268 = vst.msk [vmem:[#allocation2 + $0x58] sm:$0xff] %vm235, %v3260
    %3269 = vrot.lane.b32.xlu0 %v3129, 48
    %v3270 = vpop.permute.xlu0 %3269
    %3271 = vrot.lane.b32.xlu0 %v3130, 48
    %v3272 = vpop.permute.xlu0 %3271
    %3273 = vrot.lane.b32.xlu0 %v3131, 48
    %v3274 = vpop.permute.xlu0 %3273
    %3275 = vrot.lane.b32.xlu0 %v3132, 48
    %v3276 = vpop.permute.xlu0 %3275
    %3281 = vst.msk [vmem:[#allocation2 + $0x60] sm:$0xff] %vm252, %v3270
    %3282 = vst.msk [vmem:[#allocation2 + $0x68] sm:$0xff] %vm252, %v3272
    %3283 = vst.msk [vmem:[#allocation2 + $0x70] sm:$0xff] %vm252, %v3274
    %3284 = vst.msk [vmem:[#allocation2 + $0x78] sm:$0xff] %vm252, %v3276
    %v3285 = vld [vmem:[#allocation2] sm:$0xff]
    %v3286 = vld [vmem:[#allocation2 + $0x8] sm:$0xff]
    %v3287 = vld [vmem:[#allocation2 + $0x10] sm:$0xff]
    %v3288 = vld [vmem:[#allocation2 + $0x18] sm:$0xff]
    %v3289 = vld [vmem:[#allocation2 + $0x20] sm:$0xff]
    %v3290 = vld [vmem:[#allocation2 + $0x28] sm:$0xff]
    %v3291 = vld [vmem:[#allocation2 + $0x30] sm:$0xff]
    %v3292 = vld [vmem:[#allocation2 + $0x38] sm:$0xff]
    %v3293 = vld [vmem:[#allocation2 + $0x40] sm:$0xff]
    %v3294 = vld [vmem:[#allocation2 + $0x48] sm:$0xff]
    %v3295 = vld [vmem:[#allocation2 + $0x50] sm:$0xff]
    %v3296 = vld [vmem:[#allocation2 + $0x58] sm:$0xff]
    %v3297 = vld [vmem:[#allocation2 + $0x60] sm:$0xff]
    %v3298 = vld [vmem:[#allocation2 + $0x68] sm:$0xff]
    %v3299 = vld [vmem:[#allocation2 + $0x70] sm:$0xff]
    %v3300 = vld [vmem:[#allocation2 + $0x78] sm:$0xff]
    %v3302 = vsel %vm69, %v3215, 0
    %v3305 = vsel %vm69, %v3220, 0
    %v3308 = vsel %vm69, %v3225, 0
    %v3311 = vsel %vm69, %v3230, 0
    %v3314 = vsel %vm69, %v3285, 0
    %v3317 = vsel %vm69, %v3286, 0
    %v3320 = vsel %vm69, %v3287, 0
    %v3323 = vsel %vm69, %v3288, 0
    %v3326 = vsel %vm69, %v3289, 0
    %v3329 = vsel %vm69, %v3290, 0
    %v3332 = vsel %vm69, %v3291, 0
    %v3335 = vsel %vm69, %v3292, 0
    %v3338 = vsel %vm69, %v3293, 0
    %v3341 = vsel %vm69, %v3294, 0
    %v3344 = vsel %vm69, %v3295, 0
    %v3347 = vsel %vm69, %v3296, 0
    %v3350 = vsel %vm69, %v3297, 0
    %v3353 = vsel %vm69, %v3298, 0
    %v3356 = vsel %vm69, %v3299, 0
    %v3359 = vsel %vm69, %v3300, 0
    %3361 = vmatprep.subr.mxu0 0.0
    %3362 = vmatpush1.xpose.msra.mxu0 %v3359
    %3363 = vmatprep.subr.mxu0 0.0
    %3364 = vmatpush1.xpose.msra.mxu0 %v3356
    %3365 = vmatprep.subr.mxu0 0.0
    %3366 = vmatpush1.xpose.msra.mxu0 %v3353
    %3367 = vmatprep.subr.mxu0 0.0
    %3368 = vmatpush1.xpose.msra.mxu0 %v3350
    %3369 = vmatprep.subr.mxu0 0.0
    %3370 = vmatpush1.xpose.msra.mxu0 %v3347
    %3371 = vmatprep.subr.mxu0 0.0
    %3372 = vmatpush1.xpose.msra.mxu0 %v3344
    %3373 = vmatprep.subr.mxu0 0.0
    %3374 = vmatpush1.xpose.msra.mxu0 %v3341
    %3375 = vmatprep.subr.mxu0 0.0
    %3376 = vmatpush1.xpose.msra.mxu0 %v3338
    %3377 = vmatprep.subr.mxu0 0.0
    %3378 = vmatpush1.xpose.msra.mxu0 %v3335
    %3379 = vmatprep.subr.mxu0 0.0
    %3380 = vmatpush1.xpose.msra.mxu0 %v3332
    %3381 = vmatprep.subr.mxu0 0.0
    %3382 = vmatpush1.xpose.msra.mxu0 %v3329
    %3383 = vmatprep.subr.mxu0 0.0
    %3384 = vmatpush1.xpose.msra.mxu0 %v3326
    %3385 = vmatprep.subr.mxu0 0.0
    %3386 = vmatpush1.xpose.msra.mxu0 %v3323
    %3387 = vmatprep.subr.mxu0 0.0
    %3388 = vmatpush1.xpose.msra.mxu0 %v3320
    %3389 = vmatprep.subr.mxu0 0.0
    %3390 = vmatpush1.xpose.msra.mxu0 %v3317
    %3391 = vmatprep.subr.mxu0 0.0
    %3392 = vmatpush1.xpose.msra.mxu0 %v3314
    %3393 = vmatprep.subr.mxu0 0.0
    %3394 = vmatpush2.xpose.msra.mxu0 0.0
    %3395 = vmatprep.subr.mxu0 0.0
    %3396 = vmatpush2.xpose.msra.mxu0 0.0
    %3397 = vmatprep.subr.mxu0 0.0
    %3398 = vmatpush2.xpose.msra.mxu0 0.0
    %3399 = vmatprep.subr.mxu0 0.0
    %3400 = vmatpush2.xpose.msra.mxu0 0.0
    %3401 = vmatprep.subr.mxu0 0.0
    %3402 = vmatpush2.xpose.msra.mxu0 0.0
    %3403 = vmatprep.subr.mxu0 0.0
    %3404 = vmatpush2.xpose.msra.mxu0 0.0
    %3405 = vmatprep.subr.mxu0 0.0
    %3406 = vmatpush2.xpose.msra.mxu0 0.0
    %3407 = vmatprep.subr.mxu0 0.0
    %3408 = vmatpush2.xpose.msra.mxu0 0.0
    %3409 = vmatprep.subr.mxu0 0.0
    %3410 = vmatpush2.xpose.msra.mxu0 0.0
    %3411 = vmatprep.subr.mxu0 0.0
    %3412 = vmatpush2.xpose.msra.mxu0 0.0
    %3413 = vmatprep.subr.mxu0 0.0
    %3414 = vmatpush2.xpose.msra.mxu0 0.0
    %3415 = vmatprep.subr.mxu0 0.0
    %3416 = vmatpush2.xpose.msra.mxu0 0.0
    %3417 = vmatprep.subr.mxu0 0.0
    %3418 = vmatpush2.xpose.msra.mxu0 0.0
    %3419 = vmatprep.subr.mxu0 0.0
    %3420 = vmatpush2.xpose.msra.mxu0 0.0
    %3421 = vmatprep.subr.mxu0 0.0
    %3422 = vmatpush2.xpose.msra.mxu0 0.0
    %3423 = vmatprep.subr.mxu0 0.0
    %3424 = vmatpush2.xpose.msra.mxu0 0.0
    %3425 = vmatprep.mubr.f32.mxu0 0.0
    %3426 = vmatmul.mubr.f32.gmra.mxu0 %v3302
    %v3427 = vpop.f32.mrf.mxu0
    %v3428 = vadd.f32 %v48, %v3427
    %v3429 = vpop.f32.mrf.mxu0
    %3430 = vmatprep.mubr.f32.mxu0 0.0
    %3431 = vmatmul.mubr.f32.gmra.mxu0 %v3305
    %v3432 = vpop.f32.mrf.mxu0
    %v3433 = vadd.f32 %v49, %v3432
    %v3434 = vpop.f32.mrf.mxu0
    %3435 = vmatprep.mubr.f32.mxu0 0.0
    %3436 = vmatmul.mubr.f32.gmra.mxu0 %v3308
    %v3437 = vpop.f32.mrf.mxu0
    %v3438 = vadd.f32 %v50, %v3437
    %v3439 = vpop.f32.mrf.mxu0
    %3440 = vmatprep.mubr.f32.mxu0 0.0
    %3441 = vmatmul.mubr.f32.gmra.mxu0 %v3311
    %v3442 = vpop.f32.mrf.mxu0
    %v3443 = vadd.f32 %v51, %v3442
    %v3444 = vpop.f32.mrf.mxu0
    %3445 = vdwg.mxu0
    %3446 = vmax.xlane.f32.xlu0 %v3428
    %v3447 = vpop.xlane.xlu0 %3446
    %3448 = vmax.xlane.f32.xlu0 %v3433
    %v3449 = vpop.xlane.xlu0 %3448
    %3450 = vmax.xlane.f32.xlu0 %v3438
    %v3451 = vpop.xlane.xlu0 %3450
    %3452 = vmax.xlane.f32.xlu0 %v3443
    %v3453 = vpop.xlane.xlu0 %3452
    %v3454 = vsub.f32 %v3428, %v3447
    %v3455 = vsub.f32 %v3433, %v3449
    %v3456 = vsub.f32 %v3438, %v3451
    %v3457 = vsub.f32 %v3443, %v3453
    %v3458 = vmul.f32 %v3454, 1.442695
    %v3459 = vpow.pop %v3458
    %v3460 = vmul.f32 %v3455, 1.442695
    %v3461 = vpow.pop %v3460
    %v3462 = vmul.f32 %v3456, 1.442695
    %v3463 = vpow.pop %v3462
    %v3464 = vmul.f32 %v3457, 1.442695
    %v3465 = vpow.pop %v3464
    %s3466 = scalar_lea.vmem [#allocation4], 64
    %v3467 = vld [vmem:[%s3466] sm:$0xff]
    %v3468 = vld [vmem:[%s3466 + $0x8] sm:$0xff]
    %3469 = vmatprep.subr.mxu0 0.0
    %3470 = vmatpush1.msra.mxu0 0.0
    %3471 = vmatprep.subr.mxu0 0.0
    %3472 = vmatpush1.msra.mxu0 0.0
    %3473 = vmatprep.subr.mxu0 0.0
    %3474 = vmatpush1.msra.mxu0 0.0
    %3475 = vmatprep.subr.mxu0 0.0
    %3476 = vmatpush1.msra.mxu0 0.0
    %3477 = vmatprep.subr.mxu0 0.0
    %3478 = vmatpush1.msra.mxu0 0.0
    %3479 = vmatprep.subr.mxu0 0.0
    %3480 = vmatpush1.msra.mxu0 0.0
    %3481 = vmatprep.subr.mxu0 0.0
    %3482 = vmatpush1.msra.mxu0 0.0
    %3483 = vmatprep.subr.mxu0 0.0
    %3484 = vmatpush1.msra.mxu0 0.0
    %3485 = vmatprep.subr.mxu0 0.0
    %3486 = vmatpush1.msra.mxu0 0.0
    %3487 = vmatprep.subr.mxu0 0.0
    %3488 = vmatpush1.msra.mxu0 0.0
    %3489 = vmatprep.subr.mxu0 0.0
    %3490 = vmatpush1.msra.mxu0 0.0
    %3491 = vmatprep.subr.mxu0 0.0
    %3492 = vmatpush1.msra.mxu0 0.0
    %3493 = vmatprep.subr.mxu0 0.0
    %3494 = vmatpush1.msra.mxu0 0.0
    %3495 = vmatprep.subr.mxu0 0.0
    %3496 = vmatpush1.msra.mxu0 0.0
    %3497 = vmatprep.subr.mxu0 0.0
    %3498 = vmatpush1.msra.mxu0 %v3468
    %3499 = vmatprep.subr.mxu0 0.0
    %3500 = vmatpush1.msra.mxu0 %v3467
    %3501 = vmatprep.subr.mxu0 0.0
    %3502 = vmatpush2.msra.mxu0 0.0
    %3503 = vmatprep.subr.mxu0 0.0
    %3504 = vmatpush2.msra.mxu0 0.0
    %3505 = vmatprep.subr.mxu0 0.0
    %3506 = vmatpush2.msra.mxu0 0.0
    %3507 = vmatprep.subr.mxu0 0.0
    %3508 = vmatpush2.msra.mxu0 0.0
    %3509 = vmatprep.subr.mxu0 0.0
    %3510 = vmatpush2.msra.mxu0 0.0
    %3511 = vmatprep.subr.mxu0 0.0
    %3512 = vmatpush2.msra.mxu0 0.0
    %3513 = vmatprep.subr.mxu0 0.0
    %3514 = vmatpush2.msra.mxu0 0.0
    %3515 = vmatprep.subr.mxu0 0.0
    %3516 = vmatpush2.msra.mxu0 0.0
    %3517 = vmatprep.subr.mxu0 0.0
    %3518 = vmatpush2.msra.mxu0 0.0
    %3519 = vmatprep.subr.mxu0 0.0
    %3520 = vmatpush2.msra.mxu0 0.0
    %3521 = vmatprep.subr.mxu0 0.0
    %3522 = vmatpush2.msra.mxu0 0.0
    %3523 = vmatprep.subr.mxu0 0.0
    %3524 = vmatpush2.msra.mxu0 0.0
    %3525 = vmatprep.subr.mxu0 0.0
    %3526 = vmatpush2.msra.mxu0 0.0
    %3527 = vmatprep.subr.mxu0 0.0
    %3528 = vmatpush2.msra.mxu0 0.0
    %3529 = vmatprep.subr.mxu0 0.0
    %3530 = vmatpush2.msra.mxu0 0.0
    %3531 = vmatprep.subr.mxu0 0.0
    %3532 = vmatpush2.msra.mxu0 0.0
    %3533 = vmatprep.mubr.f32.mxu0 0.0
    %3534 = vmatmul.mubr.f32.gmra.mxu0 %v3137
    %v3535 = vpop.f32.mrf.mxu0
    %v3536 = vadd.f32 0.0, %v3535
    %v3537 = vpop.f32.mrf.mxu0
    %3538 = vmatprep.mubr.f32.mxu0 0.0
    %3539 = vmatmul.mubr.f32.gmra.mxu0 %v3140
    %v3540 = vpop.f32.mrf.mxu0
    %v3541 = vadd.f32 0.0, %v3540
    %v3542 = vpop.f32.mrf.mxu0
    %3543 = vmatprep.mubr.f32.mxu0 0.0
    %3544 = vmatmul.mubr.f32.gmra.mxu0 %v3143
    %v3545 = vpop.f32.mrf.mxu0
    %v3546 = vadd.f32 0.0, %v3545
    %v3547 = vpop.f32.mrf.mxu0
    %3548 = vmatprep.mubr.f32.mxu0 0.0
    %3549 = vmatmul.mubr.f32.gmra.mxu0 %v3146
    %v3550 = vpop.f32.mrf.mxu0
    %v3551 = vadd.f32 0.0, %v3550
    %v3552 = vpop.f32.mrf.mxu0
    %3553 = vdwg.mxu0
    %v3554 = vmul.f32 %v3536, %v528
    %v3555 = vmul.f32 %v3541, %v528
    %v3556 = vmul.f32 %v3546, %v528
    %v3557 = vmul.f32 %v3551, %v528
    %3558 = vst.msk [vmem:[#allocation3] sm:$0xff] %vm86, %v3554
    %3559 = vst.msk [vmem:[#allocation3 + $0x8] sm:$0xff] %vm86, %v3555
    %3560 = vst.msk [vmem:[#allocation3 + $0x10] sm:$0xff] %vm86, %v3556
    %3561 = vst.msk [vmem:[#allocation3 + $0x18] sm:$0xff] %vm86, %v3557
    %v3562 = vmul.f32 %v3536, %v540
    %v3563 = vmul.f32 %v3541, %v540
    %v3564 = vmul.f32 %v3546, %v540
    %v3565 = vmul.f32 %v3551, %v540
    %3566 = vst.msk [vmem:[#allocation3 + $0x20] sm:$0xff] %vm86, %v3562
    %3567 = vst.msk [vmem:[#allocation3 + $0x28] sm:$0xff] %vm86, %v3563
    %3568 = vst.msk [vmem:[#allocation3 + $0x30] sm:$0xff] %vm86, %v3564
    %3569 = vst.msk [vmem:[#allocation3 + $0x38] sm:$0xff] %vm86, %v3565
    %v3570 = vmul.f32 %v3536, %v552
    %v3571 = vmul.f32 %v3541, %v552
    %v3572 = vmul.f32 %v3546, %v552
    %v3573 = vmul.f32 %v3551, %v552
    %3574 = vst.msk [vmem:[#allocation3 + $0x40] sm:$0xff] %vm86, %v3570
    %3575 = vst.msk [vmem:[#allocation3 + $0x48] sm:$0xff] %vm86, %v3571
    %3576 = vst.msk [vmem:[#allocation3 + $0x50] sm:$0xff] %vm86, %v3572
    %3577 = vst.msk [vmem:[#allocation3 + $0x58] sm:$0xff] %vm86, %v3573
    %v3578 = vmul.f32 %v3536, %v564
    %v3579 = vmul.f32 %v3541, %v564
    %v3580 = vmul.f32 %v3546, %v564
    %v3581 = vmul.f32 %v3551, %v564
    %3582 = vst.msk [vmem:[#allocation3 + $0x60] sm:$0xff] %vm86, %v3578
    %3583 = vst.msk [vmem:[#allocation3 + $0x68] sm:$0xff] %vm86, %v3579
    %3584 = vst.msk [vmem:[#allocation3 + $0x70] sm:$0xff] %vm86, %v3580
    %3585 = vst.msk [vmem:[#allocation3 + $0x78] sm:$0xff] %vm86, %v3581
    %v3586 = vld [vmem:[#allocation3] sm:$0xff]
    %v3587 = vld [vmem:[#allocation3 + $0x8] sm:$0xff]
    %v3588 = vld [vmem:[#allocation3 + $0x10] sm:$0xff]
    %v3589 = vld [vmem:[#allocation3 + $0x18] sm:$0xff]
    %v3590 = vld [vmem:[#allocation3 + $0x20] sm:$0xff]
    %v3591 = vld [vmem:[#allocation3 + $0x28] sm:$0xff]
    %v3592 = vld [vmem:[#allocation3 + $0x30] sm:$0xff]
    %v3593 = vld [vmem:[#allocation3 + $0x38] sm:$0xff]
    %v3594 = vld [vmem:[#allocation3 + $0x40] sm:$0xff]
    %v3595 = vld [vmem:[#allocation3 + $0x48] sm:$0xff]
    %v3596 = vld [vmem:[#allocation3 + $0x50] sm:$0xff]
    %v3597 = vld [vmem:[#allocation3 + $0x58] sm:$0xff]
    %v3598 = vld [vmem:[#allocation3 + $0x60] sm:$0xff]
    %v3599 = vld [vmem:[#allocation3 + $0x68] sm:$0xff]
    %v3600 = vld [vmem:[#allocation3 + $0x70] sm:$0xff]
    %v3601 = vld [vmem:[#allocation3 + $0x78] sm:$0xff]
    %3602 = vmatprep.subr.mxu0 0.0
    %3603 = vmatpush1.msra.mxu0 %v3601
    %3604 = vmatprep.subr.mxu0 0.0
    %3605 = vmatpush1.msra.mxu0 %v3600
    %3606 = vmatprep.subr.mxu0 0.0
    %3607 = vmatpush1.msra.mxu0 %v3599
    %3608 = vmatprep.subr.mxu0 0.0
    %3609 = vmatpush1.msra.mxu0 %v3598
    %3610 = vmatprep.subr.mxu0 0.0
    %3611 = vmatpush1.msra.mxu0 %v3597
    %3612 = vmatprep.subr.mxu0 0.0
    %3613 = vmatpush1.msra.mxu0 %v3596
    %3614 = vmatprep.subr.mxu0 0.0
    %3615 = vmatpush1.msra.mxu0 %v3595
    %3616 = vmatprep.subr.mxu0 0.0
    %3617 = vmatpush1.msra.mxu0 %v3594
    %3618 = vmatprep.subr.mxu0 0.0
    %3619 = vmatpush1.msra.mxu0 %v3593
    %3620 = vmatprep.subr.mxu0 0.0
    %3621 = vmatpush1.msra.mxu0 %v3592
    %3622 = vmatprep.subr.mxu0 0.0
    %3623 = vmatpush1.msra.mxu0 %v3591
    %3624 = vmatprep.subr.mxu0 0.0
    %3625 = vmatpush1.msra.mxu0 %v3590
    %3626 = vmatprep.subr.mxu0 0.0
    %3627 = vmatpush1.msra.mxu0 %v3589
    %3628 = vmatprep.subr.mxu0 0.0
    %3629 = vmatpush1.msra.mxu0 %v3588
    %3630 = vmatprep.subr.mxu0 0.0
    %3631 = vmatpush1.msra.mxu0 %v3587
    %3632 = vmatprep.subr.mxu0 0.0
    %3633 = vmatpush1.msra.mxu0 %v3586
    %3634 = vmatprep.subr.mxu0 0.0
    %3635 = vmatpush2.msra.mxu0 0.0
    %3636 = vmatprep.subr.mxu0 0.0
    %3637 = vmatpush2.msra.mxu0 0.0
    %3638 = vmatprep.subr.mxu0 0.0
    %3639 = vmatpush2.msra.mxu0 0.0
    %3640 = vmatprep.subr.mxu0 0.0
    %3641 = vmatpush2.msra.mxu0 0.0
    %3642 = vmatprep.subr.mxu0 0.0
    %3643 = vmatpush2.msra.mxu0 0.0
    %3644 = vmatprep.subr.mxu0 0.0
    %3645 = vmatpush2.msra.mxu0 0.0
    %3646 = vmatprep.subr.mxu0 0.0
    %3647 = vmatpush2.msra.mxu0 0.0
    %3648 = vmatprep.subr.mxu0 0.0
    %3649 = vmatpush2.msra.mxu0 0.0
    %3650 = vmatprep.subr.mxu0 0.0
    %3651 = vmatpush2.msra.mxu0 0.0
    %3652 = vmatprep.subr.mxu0 0.0
    %3653 = vmatpush2.msra.mxu0 0.0
    %3654 = vmatprep.subr.mxu0 0.0
    %3655 = vmatpush2.msra.mxu0 0.0
    %3656 = vmatprep.subr.mxu0 0.0
    %3657 = vmatpush2.msra.mxu0 0.0
    %3658 = vmatprep.subr.mxu0 0.0
    %3659 = vmatpush2.msra.mxu0 0.0
    %3660 = vmatprep.subr.mxu0 0.0
    %3661 = vmatpush2.msra.mxu0 0.0
    %3662 = vmatprep.subr.mxu0 0.0
    %3663 = vmatpush2.msra.mxu0 0.0
    %3664 = vmatprep.subr.mxu0 0.0
    %3665 = vmatpush2.msra.mxu0 0.0
    %3666 = vmatprep.mubr.f32.mxu0 0.0
    %3667 = vmatmul.mubr.f32.gmra.mxu0 %v3459
    %v3668 = vpop.f32.mrf.mxu0
    %v3669 = vadd.f32 0.0, %v3668
    %v3670 = vpop.f32.mrf.mxu0
    %3671 = vmatprep.mubr.f32.mxu0 0.0
    %3672 = vmatmul.mubr.f32.gmra.mxu0 %v3461
    %v3673 = vpop.f32.mrf.mxu0
    %v3674 = vadd.f32 0.0, %v3673
    %v3675 = vpop.f32.mrf.mxu0
    %3676 = vmatprep.mubr.f32.mxu0 0.0
    %3677 = vmatmul.mubr.f32.gmra.mxu0 %v3463
    %v3678 = vpop.f32.mrf.mxu0
    %v3679 = vadd.f32 0.0, %v3678
    %v3680 = vpop.f32.mrf.mxu0
    %3681 = vmatprep.mubr.f32.mxu0 0.0
    %3682 = vmatmul.mubr.f32.gmra.mxu0 %v3465
    %v3683 = vpop.f32.mrf.mxu0
    %v3684 = vadd.f32 0.0, %v3683
    %v3685 = vpop.f32.mrf.mxu0
    %3686 = vdwg.mxu0
    %3687 = vmatprep.subr.mxu0 0.0
    %3688 = vmatpush1.msra.mxu0 %v67
    %3689 = vmatprep.subr.mxu0 0.0
    %3690 = vmatpush1.msra.mxu0 %v66
    %3691 = vmatprep.subr.mxu0 0.0
    %3692 = vmatpush1.msra.mxu0 %v65
    %3693 = vmatprep.subr.mxu0 0.0
    %3694 = vmatpush1.msra.mxu0 %v64
    %3695 = vmatprep.subr.mxu0 0.0
    %3696 = vmatpush1.msra.mxu0 %v63
    %3697 = vmatprep.subr.mxu0 0.0
    %3698 = vmatpush1.msra.mxu0 %v62
    %3699 = vmatprep.subr.mxu0 0.0
    %3700 = vmatpush1.msra.mxu0 %v61
    %3701 = vmatprep.subr.mxu0 0.0
    %3702 = vmatpush1.msra.mxu0 %v60
    %3703 = vmatprep.subr.mxu0 0.0
    %3704 = vmatpush1.msra.mxu0 %v59
    %3705 = vmatprep.subr.mxu0 0.0
    %3706 = vmatpush1.msra.mxu0 %v58
    %3707 = vmatprep.subr.mxu0 0.0
    %3708 = vmatpush1.msra.mxu0 %v57
    %3709 = vmatprep.subr.mxu0 0.0
    %3710 = vmatpush1.msra.mxu0 %v56
    %3711 = vmatprep.subr.mxu0 0.0
    %3712 = vmatpush1.msra.mxu0 %v55
    %3713 = vmatprep.subr.mxu0 0.0
    %3714 = vmatpush1.msra.mxu0 %v54
    %3715 = vmatprep.subr.mxu0 0.0
    %3716 = vmatpush1.msra.mxu0 %v53
    %3717 = vmatprep.subr.mxu0 0.0
    %3718 = vmatpush1.msra.mxu0 %v52
    %3719 = vmatprep.subr.mxu0 0.0
    %3720 = vmatpush2.msra.mxu0 0.0
    %3721 = vmatprep.subr.mxu0 0.0
    %3722 = vmatpush2.msra.mxu0 0.0
    %3723 = vmatprep.subr.mxu0 0.0
    %3724 = vmatpush2.msra.mxu0 0.0
    %3725 = vmatprep.subr.mxu0 0.0
    %3726 = vmatpush2.msra.mxu0 0.0
    %3727 = vmatprep.subr.mxu0 0.0
    %3728 = vmatpush2.msra.mxu0 0.0
    %3729 = vmatprep.subr.mxu0 0.0
    %3730 = vmatpush2.msra.mxu0 0.0
    %3731 = vmatprep.subr.mxu0 0.0
    %3732 = vmatpush2.msra.mxu0 0.0
    %3733 = vmatprep.subr.mxu0 0.0
    %3734 = vmatpush2.msra.mxu0 0.0
    %3735 = vmatprep.subr.mxu0 0.0
    %3736 = vmatpush2.msra.mxu0 0.0
    %3737 = vmatprep.subr.mxu0 0.0
    %3738 = vmatpush2.msra.mxu0 0.0
    %3739 = vmatprep.subr.mxu0 0.0
    %3740 = vmatpush2.msra.mxu0 0.0
    %3741 = vmatprep.subr.mxu0 0.0
    %3742 = vmatpush2.msra.mxu0 0.0
    %3743 = vmatprep.subr.mxu0 0.0
    %3744 = vmatpush2.msra.mxu0 0.0
    %3745 = vmatprep.subr.mxu0 0.0
    %3746 = vmatpush2.msra.mxu0 0.0
    %3747 = vmatprep.subr.mxu0 0.0
    %3748 = vmatpush2.msra.mxu0 0.0
    %3749 = vmatprep.subr.mxu0 0.0
    %3750 = vmatpush2.msra.mxu0 0.0
    %3751 = vmatprep.mubr.f32.mxu0 0.0
    %3752 = vmatmul.mubr.f32.gmra.mxu0 %v3459
    %v3753 = vpop.f32.mrf.mxu0
    %v3754 = vadd.f32 0.0, %v3753
    %v3755 = vpop.f32.mrf.mxu0
    %3756 = vmatprep.mubr.f32.mxu0 0.0
    %3757 = vmatmul.mubr.f32.gmra.mxu0 %v3461
    %v3758 = vpop.f32.mrf.mxu0
    %v3759 = vadd.f32 0.0, %v3758
    %v3760 = vpop.f32.mrf.mxu0
    %3761 = vmatprep.mubr.f32.mxu0 0.0
    %3762 = vmatmul.mubr.f32.gmra.mxu0 %v3463
    %v3763 = vpop.f32.mrf.mxu0
    %v3764 = vadd.f32 0.0, %v3763
    %v3765 = vpop.f32.mrf.mxu0
    %3766 = vmatprep.mubr.f32.mxu0 0.0
    %3767 = vmatmul.mubr.f32.gmra.mxu0 %v3465
    %v3768 = vpop.f32.mrf.mxu0
    %v3769 = vadd.f32 0.0, %v3768
    %v3770 = vpop.f32.mrf.mxu0
    %3771 = vdwg.mxu0
    %v3772 = vrcp.pop %v3754
    %v3773 = vmul.f32 1.0, %v3772
    %v3774 = vrcp.pop %v3759
    %v3775 = vmul.f32 1.0, %v3774
    %v3776 = vrcp.pop %v3764
    %v3777 = vmul.f32 1.0, %v3776
    %v3778 = vrcp.pop %v3769
    %v3779 = vmul.f32 1.0, %v3778
    %v3781 = vsel %vm767, %v3773, 0
    %v3784 = vsel %vm767, %v3775, 0
    %v3787 = vsel %vm767, %v3777, 0
    %v3790 = vsel %vm767, %v3779, 0
    %3792 = vmatprep.subr.mxu0 0.0
    %3793 = vmatpush1.msra.mxu0 0.0
    %3794 = vmatprep.subr.mxu0 0.0
    %3795 = vmatpush1.msra.mxu0 0.0
    %3796 = vmatprep.subr.mxu0 0.0
    %3797 = vmatpush1.msra.mxu0 0.0
    %3798 = vmatprep.subr.mxu0 0.0
    %3799 = vmatpush1.msra.mxu0 0.0
    %3800 = vmatprep.subr.mxu0 0.0
    %3801 = vmatpush1.msra.mxu0 0.0
    %3802 = vmatprep.subr.mxu0 0.0
    %3803 = vmatpush1.msra.mxu0 0.0
    %3804 = vmatprep.subr.mxu0 0.0
    %3805 = vmatpush1.msra.mxu0 0.0
    %3806 = vmatprep.subr.mxu0 0.0
    %3807 = vmatpush1.msra.mxu0 0.0
    %3808 = vmatprep.subr.mxu0 0.0
    %3809 = vmatpush1.msra.mxu0 0.0
    %3810 = vmatprep.subr.mxu0 0.0
    %3811 = vmatpush1.msra.mxu0 0.0
    %3812 = vmatprep.subr.mxu0 0.0
    %3813 = vmatpush1.msra.mxu0 0.0
    %3814 = vmatprep.subr.mxu0 0.0
    %3815 = vmatpush1.msra.mxu0 0.0
    %3816 = vmatprep.subr.mxu0 0.0
    %3817 = vmatpush1.msra.mxu0 0.0
    %3818 = vmatprep.subr.mxu0 0.0
    %3819 = vmatpush1.msra.mxu0 0.0
    %3820 = vmatprep.subr.mxu0 0.0
    %3821 = vmatpush1.msra.mxu0 0.0
    %3822 = vmatprep.subr.mxu0 0.0
    %3823 = vmatpush1.msra.mxu0 %v782
    %3824 = vmatprep.subr.mxu0 0.0
    %3825 = vmatpush2.msra.mxu0 0.0
    %3826 = vmatprep.subr.mxu0 0.0
    %3827 = vmatpush2.msra.mxu0 0.0
    %3828 = vmatprep.subr.mxu0 0.0
    %3829 = vmatpush2.msra.mxu0 0.0
    %3830 = vmatprep.subr.mxu0 0.0
    %3831 = vmatpush2.msra.mxu0 0.0
    %3832 = vmatprep.subr.mxu0 0.0
    %3833 = vmatpush2.msra.mxu0 0.0
    %3834 = vmatprep.subr.mxu0 0.0
    %3835 = vmatpush2.msra.mxu0 0.0
    %3836 = vmatprep.subr.mxu0 0.0
    %3837 = vmatpush2.msra.mxu0 0.0
    %3838 = vmatprep.subr.mxu0 0.0
    %3839 = vmatpush2.msra.mxu0 0.0
    %3840 = vmatprep.subr.mxu0 0.0
    %3841 = vmatpush2.msra.mxu0 0.0
    %3842 = vmatprep.subr.mxu0 0.0
    %3843 = vmatpush2.msra.mxu0 0.0
    %3844 = vmatprep.subr.mxu0 0.0
    %3845 = vmatpush2.msra.mxu0 0.0
    %3846 = vmatprep.subr.mxu0 0.0
    %3847 = vmatpush2.msra.mxu0 0.0
    %3848 = vmatprep.subr.mxu0 0.0
    %3849 = vmatpush2.msra.mxu0 0.0
    %3850 = vmatprep.subr.mxu0 0.0
    %3851 = vmatpush2.msra.mxu0 0.0
    %3852 = vmatprep.subr.mxu0 0.0
    %3853 = vmatpush2.msra.mxu0 0.0
    %3854 = vmatprep.subr.mxu0 0.0
    %3855 = vmatpush2.msra.mxu0 0.0
    %3856 = vmatprep.mubr.f32.mxu0 0.0
    %3857 = vmatmul.mubr.f32.gmra.mxu0 %v3781
    %v3858 = vpop.f32.mrf.mxu0
    %v3859 = vadd.f32 0.0, %v3858
    %v3860 = vpop.f32.mrf.mxu0
    %3861 = vmatprep.mubr.f32.mxu0 0.0
    %3862 = vmatmul.mubr.f32.gmra.mxu0 %v3784
    %v3863 = vpop.f32.mrf.mxu0
    %v3864 = vadd.f32 0.0, %v3863
    %v3865 = vpop.f32.mrf.mxu0
    %3866 = vmatprep.mubr.f32.mxu0 0.0
    %3867 = vmatmul.mubr.f32.gmra.mxu0 %v3787
    %v3868 = vpop.f32.mrf.mxu0
    %v3869 = vadd.f32 0.0, %v3868
    %v3870 = vpop.f32.mrf.mxu0
    %3871 = vmatprep.mubr.f32.mxu0 0.0
    %3872 = vmatmul.mubr.f32.gmra.mxu0 %v3790
    %v3873 = vpop.f32.mrf.mxu0
    %v3874 = vadd.f32 0.0, %v3873
    %v3875 = vpop.f32.mrf.mxu0
    %3876 = vdwg.mxu0
    %v3877 = vmul.f32 %v3669, %v3859
    %v3878 = vmul.f32 %v3674, %v3864
    %v3879 = vmul.f32 %v3679, %v3869
    %v3880 = vmul.f32 %v3684, %v3874
    %v3881 = vadd.f32 %v3129, %v3877
    %v3882 = vadd.f32 %v3130, %v3878
    %v3883 = vadd.f32 %v3131, %v3879
    %v3884 = vadd.f32 %v3132, %v3880
    %s3885 = scalar_lea.vmem %s2, 80
    %v3886 = vld [vmem:[%s3885] sm:$0xff]
    %v3887 = vld [vmem:[%s3885 + $0x8] sm:$0xff]
    %v3889 = vsel %vm86, %v3881, 0
    %v3892 = vsel %vm86, %v3882, 0
    %v3895 = vsel %vm86, %v3883, 0
    %v3898 = vsel %vm86, %v3884, 0
    %3900 = vmatprep.subr.mxu0 0.0
    %3901 = vmatpush1.msra.mxu0 0.0
    %3902 = vmatprep.subr.mxu0 0.0
    %3903 = vmatpush1.msra.mxu0 0.0
    %3904 = vmatprep.subr.mxu0 0.0
    %3905 = vmatpush1.msra.mxu0 0.0
    %3906 = vmatprep.subr.mxu0 0.0
    %3907 = vmatpush1.msra.mxu0 0.0
    %3908 = vmatprep.subr.mxu0 0.0
    %3909 = vmatpush1.msra.mxu0 0.0
    %3910 = vmatprep.subr.mxu0 0.0
    %3911 = vmatpush1.msra.mxu0 0.0
    %3912 = vmatprep.subr.mxu0 0.0
    %3913 = vmatpush1.msra.mxu0 0.0
    %3914 = vmatprep.subr.mxu0 0.0
    %3915 = vmatpush1.msra.mxu0 0.0
    %3916 = vmatprep.subr.mxu0 0.0
    %3917 = vmatpush1.msra.mxu0 0.0
    %3918 = vmatprep.subr.mxu0 0.0
    %3919 = vmatpush1.msra.mxu0 0.0
    %3920 = vmatprep.subr.mxu0 0.0
    %3921 = vmatpush1.msra.mxu0 0.0
    %3922 = vmatprep.subr.mxu0 0.0
    %3923 = vmatpush1.msra.mxu0 0.0
    %3924 = vmatprep.subr.mxu0 0.0
    %3925 = vmatpush1.msra.mxu0 0.0
    %3926 = vmatprep.subr.mxu0 0.0
    %3927 = vmatpush1.msra.mxu0 0.0
    %3928 = vmatprep.subr.mxu0 0.0
    %3929 = vmatpush1.msra.mxu0 %v3887
    %3930 = vmatprep.subr.mxu0 0.0
    %3931 = vmatpush1.msra.mxu0 %v3886
    %3932 = vmatprep.subr.mxu0 0.0
    %3933 = vmatpush2.msra.mxu0 0.0
    %3934 = vmatprep.subr.mxu0 0.0
    %3935 = vmatpush2.msra.mxu0 0.0
    %3936 = vmatprep.subr.mxu0 0.0
    %3937 = vmatpush2.msra.mxu0 0.0
    %3938 = vmatprep.subr.mxu0 0.0
    %3939 = vmatpush2.msra.mxu0 0.0
    %3940 = vmatprep.subr.mxu0 0.0
    %3941 = vmatpush2.msra.mxu0 0.0
    %3942 = vmatprep.subr.mxu0 0.0
    %3943 = vmatpush2.msra.mxu0 0.0
    %3944 = vmatprep.subr.mxu0 0.0
    %3945 = vmatpush2.msra.mxu0 0.0
    %3946 = vmatprep.subr.mxu0 0.0
    %3947 = vmatpush2.msra.mxu0 0.0
    %3948 = vmatprep.subr.mxu0 0.0
    %3949 = vmatpush2.msra.mxu0 0.0
    %3950 = vmatprep.subr.mxu0 0.0
    %3951 = vmatpush2.msra.mxu0 0.0
    %3952 = vmatprep.subr.mxu0 0.0
    %3953 = vmatpush2.msra.mxu0 0.0
    %3954 = vmatprep.subr.mxu0 0.0
    %3955 = vmatpush2.msra.mxu0 0.0
    %3956 = vmatprep.subr.mxu0 0.0
    %3957 = vmatpush2.msra.mxu0 0.0
    %3958 = vmatprep.subr.mxu0 0.0
    %3959 = vmatpush2.msra.mxu0 0.0
    %3960 = vmatprep.subr.mxu0 0.0
    %3961 = vmatpush2.msra.mxu0 0.0
    %3962 = vmatprep.subr.mxu0 0.0
    %3963 = vmatpush2.msra.mxu0 0.0
    %3964 = vmatprep.mubr.f32.mxu0 0.0
    %3965 = vmatmul.mubr.f32.gmra.mxu0 %v3889
    %v3966 = vpop.f32.mrf.mxu0
    %v3967 = vadd.f32 0.0, %v3966
    %v3968 = vpop.f32.mrf.mxu0
    %3969 = vmatprep.mubr.f32.mxu0 0.0
    %3970 = vmatmul.mubr.f32.gmra.mxu0 %v3892
    %v3971 = vpop.f32.mrf.mxu0
    %v3972 = vadd.f32 0.0, %v3971
    %v3973 = vpop.f32.mrf.mxu0
    %3974 = vmatprep.mubr.f32.mxu0 0.0
    %3975 = vmatmul.mubr.f32.gmra.mxu0 %v3895
    %v3976 = vpop.f32.mrf.mxu0
    %v3977 = vadd.f32 0.0, %v3976
    %v3978 = vpop.f32.mrf.mxu0
    %3979 = vmatprep.mubr.f32.mxu0 0.0
    %3980 = vmatmul.mubr.f32.gmra.mxu0 %v3898
    %v3981 = vpop.f32.mrf.mxu0
    %v3982 = vadd.f32 0.0, %v3981
    %v3983 = vpop.f32.mrf.mxu0
    %3984 = vdwg.mxu0
    %3985 = vst.msk [vmem:[#allocation2] sm:$0xff] %vm86, %v3881
    %3986 = vst.msk [vmem:[#allocation2 + $0x8] sm:$0xff] %vm86, %v3882
    %3987 = vst.msk [vmem:[#allocation2 + $0x10] sm:$0xff] %vm86, %v3883
    %3988 = vst.msk [vmem:[#allocation2 + $0x18] sm:$0xff] %vm86, %v3884
    %3989 = vrot.lane.b32.xlu0 %v3881, 16
    %v3990 = vpop.permute.xlu0 %3989
    %3991 = vrot.lane.b32.xlu0 %v3882, 16
    %v3992 = vpop.permute.xlu0 %3991
    %3993 = vrot.lane.b32.xlu0 %v3883, 16
    %v3994 = vpop.permute.xlu0 %3993
    %3995 = vrot.lane.b32.xlu0 %v3884, 16
    %v3996 = vpop.permute.xlu0 %3995
    %4001 = vst.msk [vmem:[#allocation2 + $0x20] sm:$0xff] %vm218, %v3990
    %4002 = vst.msk [vmem:[#allocation2 + $0x28] sm:$0xff] %vm218, %v3992
    %4003 = vst.msk [vmem:[#allocation2 + $0x30] sm:$0xff] %vm218, %v3994
    %4004 = vst.msk [vmem:[#allocation2 + $0x38] sm:$0xff] %vm218, %v3996
    %4005 = vrot.lane.b32.xlu0 %v3881, 32
    %v4006 = vpop.permute.xlu0 %4005
    %4007 = vrot.lane.b32.xlu0 %v3882, 32
    %v4008 = vpop.permute.xlu0 %4007
    %4009 = vrot.lane.b32.xlu0 %v3883, 32
    %v4010 = vpop.permute.xlu0 %4009
    %4011 = vrot.lane.b32.xlu0 %v3884, 32
    %v4012 = vpop.permute.xlu0 %4011
    %4017 = vst.msk [vmem:[#allocation2 + $0x40] sm:$0xff] %vm235, %v4006
    %4018 = vst.msk [vmem:[#allocation2 + $0x48] sm:$0xff] %vm235, %v4008
    %4019 = vst.msk [vmem:[#allocation2 + $0x50] sm:$0xff] %vm235, %v4010
    %4020 = vst.msk [vmem:[#allocation2 + $0x58] sm:$0xff] %vm235, %v4012
    %4021 = vrot.lane.b32.xlu0 %v3881, 48
    %v4022 = vpop.permute.xlu0 %4021
    %4023 = vrot.lane.b32.xlu0 %v3882, 48
    %v4024 = vpop.permute.xlu0 %4023
    %4025 = vrot.lane.b32.xlu0 %v3883, 48
    %v4026 = vpop.permute.xlu0 %4025
    %4027 = vrot.lane.b32.xlu0 %v3884, 48
    %v4028 = vpop.permute.xlu0 %4027
    %4033 = vst.msk [vmem:[#allocation2 + $0x60] sm:$0xff] %vm252, %v4022
    %4034 = vst.msk [vmem:[#allocation2 + $0x68] sm:$0xff] %vm252, %v4024
    %4035 = vst.msk [vmem:[#allocation2 + $0x70] sm:$0xff] %vm252, %v4026
    %4036 = vst.msk [vmem:[#allocation2 + $0x78] sm:$0xff] %vm252, %v4028
    %v4037 = vld [vmem:[#allocation2] sm:$0xff]
    %v4038 = vld [vmem:[#allocation2 + $0x8] sm:$0xff]
    %v4039 = vld [vmem:[#allocation2 + $0x10] sm:$0xff]
    %v4040 = vld [vmem:[#allocation2 + $0x18] sm:$0xff]
    %v4041 = vld [vmem:[#allocation2 + $0x20] sm:$0xff]
    %v4042 = vld [vmem:[#allocation2 + $0x28] sm:$0xff]
    %v4043 = vld [vmem:[#allocation2 + $0x30] sm:$0xff]
    %v4044 = vld [vmem:[#allocation2 + $0x38] sm:$0xff]
    %v4045 = vld [vmem:[#allocation2 + $0x40] sm:$0xff]
    %v4046 = vld [vmem:[#allocation2 + $0x48] sm:$0xff]
    %v4047 = vld [vmem:[#allocation2 + $0x50] sm:$0xff]
    %v4048 = vld [vmem:[#allocation2 + $0x58] sm:$0xff]
    %v4049 = vld [vmem:[#allocation2 + $0x60] sm:$0xff]
    %v4050 = vld [vmem:[#allocation2 + $0x68] sm:$0xff]
    %v4051 = vld [vmem:[#allocation2 + $0x70] sm:$0xff]
    %v4052 = vld [vmem:[#allocation2 + $0x78] sm:$0xff]
    %v4054 = vsel %vm69, %v3967, 0
    %v4057 = vsel %vm69, %v3972, 0
    %v4060 = vsel %vm69, %v3977, 0
    %v4063 = vsel %vm69, %v3982, 0
    %v4066 = vsel %vm69, %v4037, 0
    %v4069 = vsel %vm69, %v4038, 0
    %v4072 = vsel %vm69, %v4039, 0
    %v4075 = vsel %vm69, %v4040, 0
    %v4078 = vsel %vm69, %v4041, 0
    %v4081 = vsel %vm69, %v4042, 0
    %v4084 = vsel %vm69, %v4043, 0
    %v4087 = vsel %vm69, %v4044, 0
    %v4090 = vsel %vm69, %v4045, 0
    %v4093 = vsel %vm69, %v4046, 0
    %v4096 = vsel %vm69, %v4047, 0
    %v4099 = vsel %vm69, %v4048, 0
    %v4102 = vsel %vm69, %v4049, 0
    %v4105 = vsel %vm69, %v4050, 0
    %v4108 = vsel %vm69, %v4051, 0
    %v4111 = vsel %vm69, %v4052, 0
    %4113 = vmatprep.subr.mxu0 0.0
    %4114 = vmatpush1.xpose.msra.mxu0 %v4111
    %4115 = vmatprep.subr.mxu0 0.0
    %4116 = vmatpush1.xpose.msra.mxu0 %v4108
    %4117 = vmatprep.subr.mxu0 0.0
    %4118 = vmatpush1.xpose.msra.mxu0 %v4105
    %4119 = vmatprep.subr.mxu0 0.0
    %4120 = vmatpush1.xpose.msra.mxu0 %v4102
    %4121 = vmatprep.subr.mxu0 0.0
    %4122 = vmatpush1.xpose.msra.mxu0 %v4099
    %4123 = vmatprep.subr.mxu0 0.0
    %4124 = vmatpush1.xpose.msra.mxu0 %v4096
    %4125 = vmatprep.subr.mxu0 0.0
    %4126 = vmatpush1.xpose.msra.mxu0 %v4093
    %4127 = vmatprep.subr.mxu0 0.0
    %4128 = vmatpush1.xpose.msra.mxu0 %v4090
    %4129 = vmatprep.subr.mxu0 0.0
    %4130 = vmatpush1.xpose.msra.mxu0 %v4087
    %4131 = vmatprep.subr.mxu0 0.0
    %4132 = vmatpush1.xpose.msra.mxu0 %v4084
    %4133 = vmatprep.subr.mxu0 0.0
    %4134 = vmatpush1.xpose.msra.mxu0 %v4081
    %4135 = vmatprep.subr.mxu0 0.0
    %4136 = vmatpush1.xpose.msra.mxu0 %v4078
    %4137 = vmatprep.subr.mxu0 0.0
    %4138 = vmatpush1.xpose.msra.mxu0 %v4075
    %4139 = vmatprep.subr.mxu0 0.0
    %4140 = vmatpush1.xpose.msra.mxu0 %v4072
    %4141 = vmatprep.subr.mxu0 0.0
    %4142 = vmatpush1.xpose.msra.mxu0 %v4069
    %4143 = vmatprep.subr.mxu0 0.0
    %4144 = vmatpush1.xpose.msra.mxu0 %v4066
    %4145 = vmatprep.subr.mxu0 0.0
    %4146 = vmatpush2.xpose.msra.mxu0 0.0
    %4147 = vmatprep.subr.mxu0 0.0
    %4148 = vmatpush2.xpose.msra.mxu0 0.0
    %4149 = vmatprep.subr.mxu0 0.0
    %4150 = vmatpush2.xpose.msra.mxu0 0.0
    %4151 = vmatprep.subr.mxu0 0.0
    %4152 = vmatpush2.xpose.msra.mxu0 0.0
    %4153 = vmatprep.subr.mxu0 0.0
    %4154 = vmatpush2.xpose.msra.mxu0 0.0
    %4155 = vmatprep.subr.mxu0 0.0
    %4156 = vmatpush2.xpose.msra.mxu0 0.0
    %4157 = vmatprep.subr.mxu0 0.0
    %4158 = vmatpush2.xpose.msra.mxu0 0.0
    %4159 = vmatprep.subr.mxu0 0.0
    %4160 = vmatpush2.xpose.msra.mxu0 0.0
    %4161 = vmatprep.subr.mxu0 0.0
    %4162 = vmatpush2.xpose.msra.mxu0 0.0
    %4163 = vmatprep.subr.mxu0 0.0
    %4164 = vmatpush2.xpose.msra.mxu0 0.0
    %4165 = vmatprep.subr.mxu0 0.0
    %4166 = vmatpush2.xpose.msra.mxu0 0.0
    %4167 = vmatprep.subr.mxu0 0.0
    %4168 = vmatpush2.xpose.msra.mxu0 0.0
    %4169 = vmatprep.subr.mxu0 0.0
    %4170 = vmatpush2.xpose.msra.mxu0 0.0
    %4171 = vmatprep.subr.mxu0 0.0
    %4172 = vmatpush2.xpose.msra.mxu0 0.0
    %4173 = vmatprep.subr.mxu0 0.0
    %4174 = vmatpush2.xpose.msra.mxu0 0.0
    %4175 = vmatprep.subr.mxu0 0.0
    %4176 = vmatpush2.xpose.msra.mxu0 0.0
    %4177 = vmatprep.mubr.f32.mxu0 0.0
    %4178 = vmatmul.mubr.f32.gmra.mxu0 %v4054
    %v4179 = vpop.f32.mrf.mxu0
    %v4180 = vadd.f32 %v48, %v4179
    %v4181 = vpop.f32.mrf.mxu0
    %4182 = vmatprep.mubr.f32.mxu0 0.0
    %4183 = vmatmul.mubr.f32.gmra.mxu0 %v4057
    %v4184 = vpop.f32.mrf.mxu0
    %v4185 = vadd.f32 %v49, %v4184
    %v4186 = vpop.f32.mrf.mxu0
    %4187 = vmatprep.mubr.f32.mxu0 0.0
    %4188 = vmatmul.mubr.f32.gmra.mxu0 %v4060
    %v4189 = vpop.f32.mrf.mxu0
    %v4190 = vadd.f32 %v50, %v4189
    %v4191 = vpop.f32.mrf.mxu0
    %4192 = vmatprep.mubr.f32.mxu0 0.0
    %4193 = vmatmul.mubr.f32.gmra.mxu0 %v4063
    %v4194 = vpop.f32.mrf.mxu0
    %v4195 = vadd.f32 %v51, %v4194
    %v4196 = vpop.f32.mrf.mxu0
    %4197 = vdwg.mxu0
    %4198 = vmax.xlane.f32.xlu0 %v4180
    %v4199 = vpop.xlane.xlu0 %4198
    %4200 = vmax.xlane.f32.xlu0 %v4185
    %v4201 = vpop.xlane.xlu0 %4200
    %4202 = vmax.xlane.f32.xlu0 %v4190
    %v4203 = vpop.xlane.xlu0 %4202
    %4204 = vmax.xlane.f32.xlu0 %v4195
    %v4205 = vpop.xlane.xlu0 %4204
    %v4206 = vsub.f32 %v4180, %v4199
    %v4207 = vsub.f32 %v4185, %v4201
    %v4208 = vsub.f32 %v4190, %v4203
    %v4209 = vsub.f32 %v4195, %v4205
    %v4210 = vmul.f32 %v4206, 1.442695
    %v4211 = vpow.pop %v4210
    %v4212 = vmul.f32 %v4207, 1.442695
    %v4213 = vpow.pop %v4212
    %v4214 = vmul.f32 %v4208, 1.442695
    %v4215 = vpow.pop %v4214
    %v4216 = vmul.f32 %v4209, 1.442695
    %v4217 = vpow.pop %v4216
    %s4218 = scalar_lea.vmem [#allocation4], 80
    %v4219 = vld [vmem:[%s4218] sm:$0xff]
    %v4220 = vld [vmem:[%s4218 + $0x8] sm:$0xff]
    %4221 = vmatprep.subr.mxu0 0.0
    %4222 = vmatpush1.msra.mxu0 0.0
    %4223 = vmatprep.subr.mxu0 0.0
    %4224 = vmatpush1.msra.mxu0 0.0
    %4225 = vmatprep.subr.mxu0 0.0
    %4226 = vmatpush1.msra.mxu0 0.0
    %4227 = vmatprep.subr.mxu0 0.0
    %4228 = vmatpush1.msra.mxu0 0.0
    %4229 = vmatprep.subr.mxu0 0.0
    %4230 = vmatpush1.msra.mxu0 0.0
    %4231 = vmatprep.subr.mxu0 0.0
    %4232 = vmatpush1.msra.mxu0 0.0
    %4233 = vmatprep.subr.mxu0 0.0
    %4234 = vmatpush1.msra.mxu0 0.0
    %4235 = vmatprep.subr.mxu0 0.0
    %4236 = vmatpush1.msra.mxu0 0.0
    %4237 = vmatprep.subr.mxu0 0.0
    %4238 = vmatpush1.msra.mxu0 0.0
    %4239 = vmatprep.subr.mxu0 0.0
    %4240 = vmatpush1.msra.mxu0 0.0
    %4241 = vmatprep.subr.mxu0 0.0
    %4242 = vmatpush1.msra.mxu0 0.0
    %4243 = vmatprep.subr.mxu0 0.0
    %4244 = vmatpush1.msra.mxu0 0.0
    %4245 = vmatprep.subr.mxu0 0.0
    %4246 = vmatpush1.msra.mxu0 0.0
    %4247 = vmatprep.subr.mxu0 0.0
    %4248 = vmatpush1.msra.mxu0 0.0
    %4249 = vmatprep.subr.mxu0 0.0
    %4250 = vmatpush1.msra.mxu0 %v4220
    %4251 = vmatprep.subr.mxu0 0.0
    %4252 = vmatpush1.msra.mxu0 %v4219
    %4253 = vmatprep.subr.mxu0 0.0
    %4254 = vmatpush2.msra.mxu0 0.0
    %4255 = vmatprep.subr.mxu0 0.0
    %4256 = vmatpush2.msra.mxu0 0.0
    %4257 = vmatprep.subr.mxu0 0.0
    %4258 = vmatpush2.msra.mxu0 0.0
    %4259 = vmatprep.subr.mxu0 0.0
    %4260 = vmatpush2.msra.mxu0 0.0
    %4261 = vmatprep.subr.mxu0 0.0
    %4262 = vmatpush2.msra.mxu0 0.0
    %4263 = vmatprep.subr.mxu0 0.0
    %4264 = vmatpush2.msra.mxu0 0.0
    %4265 = vmatprep.subr.mxu0 0.0
    %4266 = vmatpush2.msra.mxu0 0.0
    %4267 = vmatprep.subr.mxu0 0.0
    %4268 = vmatpush2.msra.mxu0 0.0
    %4269 = vmatprep.subr.mxu0 0.0
    %4270 = vmatpush2.msra.mxu0 0.0
    %4271 = vmatprep.subr.mxu0 0.0
    %4272 = vmatpush2.msra.mxu0 0.0
    %4273 = vmatprep.subr.mxu0 0.0
    %4274 = vmatpush2.msra.mxu0 0.0
    %4275 = vmatprep.subr.mxu0 0.0
    %4276 = vmatpush2.msra.mxu0 0.0
    %4277 = vmatprep.subr.mxu0 0.0
    %4278 = vmatpush2.msra.mxu0 0.0
    %4279 = vmatprep.subr.mxu0 0.0
    %4280 = vmatpush2.msra.mxu0 0.0
    %4281 = vmatprep.subr.mxu0 0.0
    %4282 = vmatpush2.msra.mxu0 0.0
    %4283 = vmatprep.subr.mxu0 0.0
    %4284 = vmatpush2.msra.mxu0 0.0
    %4285 = vmatprep.mubr.f32.mxu0 0.0
    %4286 = vmatmul.mubr.f32.gmra.mxu0 %v3889
    %v4287 = vpop.f32.mrf.mxu0
    %v4288 = vadd.f32 0.0, %v4287
    %v4289 = vpop.f32.mrf.mxu0
    %4290 = vmatprep.mubr.f32.mxu0 0.0
    %4291 = vmatmul.mubr.f32.gmra.mxu0 %v3892
    %v4292 = vpop.f32.mrf.mxu0
    %v4293 = vadd.f32 0.0, %v4292
    %v4294 = vpop.f32.mrf.mxu0
    %4295 = vmatprep.mubr.f32.mxu0 0.0
    %4296 = vmatmul.mubr.f32.gmra.mxu0 %v3895
    %v4297 = vpop.f32.mrf.mxu0
    %v4298 = vadd.f32 0.0, %v4297
    %v4299 = vpop.f32.mrf.mxu0
    %4300 = vmatprep.mubr.f32.mxu0 0.0
    %4301 = vmatmul.mubr.f32.gmra.mxu0 %v3898
    %v4302 = vpop.f32.mrf.mxu0
    %v4303 = vadd.f32 0.0, %v4302
    %v4304 = vpop.f32.mrf.mxu0
    %4305 = vdwg.mxu0
    %v4306 = vmul.f32 %v4288, %v528
    %v4307 = vmul.f32 %v4293, %v528
    %v4308 = vmul.f32 %v4298, %v528
    %v4309 = vmul.f32 %v4303, %v528
    %4310 = vst.msk [vmem:[#allocation3] sm:$0xff] %vm86, %v4306
    %4311 = vst.msk [vmem:[#allocation3 + $0x8] sm:$0xff] %vm86, %v4307
    %4312 = vst.msk [vmem:[#allocation3 + $0x10] sm:$0xff] %vm86, %v4308
    %4313 = vst.msk [vmem:[#allocation3 + $0x18] sm:$0xff] %vm86, %v4309
    %v4314 = vmul.f32 %v4288, %v540
    %v4315 = vmul.f32 %v4293, %v540
    %v4316 = vmul.f32 %v4298, %v540
    %v4317 = vmul.f32 %v4303, %v540
    %4318 = vst.msk [vmem:[#allocation3 + $0x20] sm:$0xff] %vm86, %v4314
    %4319 = vst.msk [vmem:[#allocation3 + $0x28] sm:$0xff] %vm86, %v4315
    %4320 = vst.msk [vmem:[#allocation3 + $0x30] sm:$0xff] %vm86, %v4316
    %4321 = vst.msk [vmem:[#allocation3 + $0x38] sm:$0xff] %vm86, %v4317
    %v4322 = vmul.f32 %v4288, %v552
    %v4323 = vmul.f32 %v4293, %v552
    %v4324 = vmul.f32 %v4298, %v552
    %v4325 = vmul.f32 %v4303, %v552
    %4326 = vst.msk [vmem:[#allocation3 + $0x40] sm:$0xff] %vm86, %v4322
    %4327 = vst.msk [vmem:[#allocation3 + $0x48] sm:$0xff] %vm86, %v4323
    %4328 = vst.msk [vmem:[#allocation3 + $0x50] sm:$0xff] %vm86, %v4324
    %4329 = vst.msk [vmem:[#allocation3 + $0x58] sm:$0xff] %vm86, %v4325
    %v4330 = vmul.f32 %v4288, %v564
    %v4331 = vmul.f32 %v4293, %v564
    %v4332 = vmul.f32 %v4298, %v564
    %v4333 = vmul.f32 %v4303, %v564
    %4334 = vst.msk [vmem:[#allocation3 + $0x60] sm:$0xff] %vm86, %v4330
    %4335 = vst.msk [vmem:[#allocation3 + $0x68] sm:$0xff] %vm86, %v4331
    %4336 = vst.msk [vmem:[#allocation3 + $0x70] sm:$0xff] %vm86, %v4332
    %4337 = vst.msk [vmem:[#allocation3 + $0x78] sm:$0xff] %vm86, %v4333
    %v4338 = vld [vmem:[#allocation3] sm:$0xff]
    %v4339 = vld [vmem:[#allocation3 + $0x8] sm:$0xff]
    %v4340 = vld [vmem:[#allocation3 + $0x10] sm:$0xff]
    %v4341 = vld [vmem:[#allocation3 + $0x18] sm:$0xff]
    %v4342 = vld [vmem:[#allocation3 + $0x20] sm:$0xff]
    %v4343 = vld [vmem:[#allocation3 + $0x28] sm:$0xff]
    %v4344 = vld [vmem:[#allocation3 + $0x30] sm:$0xff]
    %v4345 = vld [vmem:[#allocation3 + $0x38] sm:$0xff]
    %v4346 = vld [vmem:[#allocation3 + $0x40] sm:$0xff]
    %v4347 = vld [vmem:[#allocation3 + $0x48] sm:$0xff]
    %v4348 = vld [vmem:[#allocation3 + $0x50] sm:$0xff]
    %v4349 = vld [vmem:[#allocation3 + $0x58] sm:$0xff]
    %v4350 = vld [vmem:[#allocation3 + $0x60] sm:$0xff]
    %v4351 = vld [vmem:[#allocation3 + $0x68] sm:$0xff]
    %v4352 = vld [vmem:[#allocation3 + $0x70] sm:$0xff]
    %v4353 = vld [vmem:[#allocation3 + $0x78] sm:$0xff]
    %4354 = vmatprep.subr.mxu0 0.0
    %4355 = vmatpush1.msra.mxu0 %v4353
    %4356 = vmatprep.subr.mxu0 0.0
    %4357 = vmatpush1.msra.mxu0 %v4352
    %4358 = vmatprep.subr.mxu0 0.0
    %4359 = vmatpush1.msra.mxu0 %v4351
    %4360 = vmatprep.subr.mxu0 0.0
    %4361 = vmatpush1.msra.mxu0 %v4350
    %4362 = vmatprep.subr.mxu0 0.0
    %4363 = vmatpush1.msra.mxu0 %v4349
    %4364 = vmatprep.subr.mxu0 0.0
    %4365 = vmatpush1.msra.mxu0 %v4348
    %4366 = vmatprep.subr.mxu0 0.0
    %4367 = vmatpush1.msra.mxu0 %v4347
    %4368 = vmatprep.subr.mxu0 0.0
    %4369 = vmatpush1.msra.mxu0 %v4346
    %4370 = vmatprep.subr.mxu0 0.0
    %4371 = vmatpush1.msra.mxu0 %v4345
    %4372 = vmatprep.subr.mxu0 0.0
    %4373 = vmatpush1.msra.mxu0 %v4344
    %4374 = vmatprep.subr.mxu0 0.0
    %4375 = vmatpush1.msra.mxu0 %v4343
    %4376 = vmatprep.subr.mxu0 0.0
    %4377 = vmatpush1.msra.mxu0 %v4342
    %4378 = vmatprep.subr.mxu0 0.0
    %4379 = vmatpush1.msra.mxu0 %v4341
    %4380 = vmatprep.subr.mxu0 0.0
    %4381 = vmatpush1.msra.mxu0 %v4340
    %4382 = vmatprep.subr.mxu0 0.0
    %4383 = vmatpush1.msra.mxu0 %v4339
    %4384 = vmatprep.subr.mxu0 0.0
    %4385 = vmatpush1.msra.mxu0 %v4338
    %4386 = vmatprep.subr.mxu0 0.0
    %4387 = vmatpush2.msra.mxu0 0.0
    %4388 = vmatprep.subr.mxu0 0.0
    %4389 = vmatpush2.msra.mxu0 0.0
    %4390 = vmatprep.subr.mxu0 0.0
    %4391 = vmatpush2.msra.mxu0 0.0
    %4392 = vmatprep.subr.mxu0 0.0
    %4393 = vmatpush2.msra.mxu0 0.0
    %4394 = vmatprep.subr.mxu0 0.0
    %4395 = vmatpush2.msra.mxu0 0.0
    %4396 = vmatprep.subr.mxu0 0.0
    %4397 = vmatpush2.msra.mxu0 0.0
    %4398 = vmatprep.subr.mxu0 0.0
    %4399 = vmatpush2.msra.mxu0 0.0
    %4400 = vmatprep.subr.mxu0 0.0
    %4401 = vmatpush2.msra.mxu0 0.0
    %4402 = vmatprep.subr.mxu0 0.0
    %4403 = vmatpush2.msra.mxu0 0.0
    %4404 = vmatprep.subr.mxu0 0.0
    %4405 = vmatpush2.msra.mxu0 0.0
    %4406 = vmatprep.subr.mxu0 0.0
    %4407 = vmatpush2.msra.mxu0 0.0
    %4408 = vmatprep.subr.mxu0 0.0
    %4409 = vmatpush2.msra.mxu0 0.0
    %4410 = vmatprep.subr.mxu0 0.0
    %4411 = vmatpush2.msra.mxu0 0.0
    %4412 = vmatprep.subr.mxu0 0.0
    %4413 = vmatpush2.msra.mxu0 0.0
    %4414 = vmatprep.subr.mxu0 0.0
    %4415 = vmatpush2.msra.mxu0 0.0
    %4416 = vmatprep.subr.mxu0 0.0
    %4417 = vmatpush2.msra.mxu0 0.0
    %4418 = vmatprep.mubr.f32.mxu0 0.0
    %4419 = vmatmul.mubr.f32.gmra.mxu0 %v4211
    %v4420 = vpop.f32.mrf.mxu0
    %v4421 = vadd.f32 0.0, %v4420
    %v4422 = vpop.f32.mrf.mxu0
    %4423 = vmatprep.mubr.f32.mxu0 0.0
    %4424 = vmatmul.mubr.f32.gmra.mxu0 %v4213
    %v4425 = vpop.f32.mrf.mxu0
    %v4426 = vadd.f32 0.0, %v4425
    %v4427 = vpop.f32.mrf.mxu0
    %4428 = vmatprep.mubr.f32.mxu0 0.0
    %4429 = vmatmul.mubr.f32.gmra.mxu0 %v4215
    %v4430 = vpop.f32.mrf.mxu0
    %v4431 = vadd.f32 0.0, %v4430
    %v4432 = vpop.f32.mrf.mxu0
    %4433 = vmatprep.mubr.f32.mxu0 0.0
    %4434 = vmatmul.mubr.f32.gmra.mxu0 %v4217
    %v4435 = vpop.f32.mrf.mxu0
    %v4436 = vadd.f32 0.0, %v4435
    %v4437 = vpop.f32.mrf.mxu0
    %4438 = vdwg.mxu0
    %4439 = vmatprep.subr.mxu0 0.0
    %4440 = vmatpush1.msra.mxu0 %v67
    %4441 = vmatprep.subr.mxu0 0.0
    %4442 = vmatpush1.msra.mxu0 %v66
    %4443 = vmatprep.subr.mxu0 0.0
    %4444 = vmatpush1.msra.mxu0 %v65
    %4445 = vmatprep.subr.mxu0 0.0
    %4446 = vmatpush1.msra.mxu0 %v64
    %4447 = vmatprep.subr.mxu0 0.0
    %4448 = vmatpush1.msra.mxu0 %v63
    %4449 = vmatprep.subr.mxu0 0.0
    %4450 = vmatpush1.msra.mxu0 %v62
    %4451 = vmatprep.subr.mxu0 0.0
    %4452 = vmatpush1.msra.mxu0 %v61
    %4453 = vmatprep.subr.mxu0 0.0
    %4454 = vmatpush1.msra.mxu0 %v60
    %4455 = vmatprep.subr.mxu0 0.0
    %4456 = vmatpush1.msra.mxu0 %v59
    %4457 = vmatprep.subr.mxu0 0.0
    %4458 = vmatpush1.msra.mxu0 %v58
    %4459 = vmatprep.subr.mxu0 0.0
    %4460 = vmatpush1.msra.mxu0 %v57
    %4461 = vmatprep.subr.mxu0 0.0
    %4462 = vmatpush1.msra.mxu0 %v56
    %4463 = vmatprep.subr.mxu0 0.0
    %4464 = vmatpush1.msra.mxu0 %v55
    %4465 = vmatprep.subr.mxu0 0.0
    %4466 = vmatpush1.msra.mxu0 %v54
    %4467 = vmatprep.subr.mxu0 0.0
    %4468 = vmatpush1.msra.mxu0 %v53
    %4469 = vmatprep.subr.mxu0 0.0
    %4470 = vmatpush1.msra.mxu0 %v52
    %4471 = vmatprep.subr.mxu0 0.0
    %4472 = vmatpush2.msra.mxu0 0.0
    %4473 = vmatprep.subr.mxu0 0.0
    %4474 = vmatpush2.msra.mxu0 0.0
    %4475 = vmatprep.subr.mxu0 0.0
    %4476 = vmatpush2.msra.mxu0 0.0
    %4477 = vmatprep.subr.mxu0 0.0
    %4478 = vmatpush2.msra.mxu0 0.0
    %4479 = vmatprep.subr.mxu0 0.0
    %4480 = vmatpush2.msra.mxu0 0.0
    %4481 = vmatprep.subr.mxu0 0.0
    %4482 = vmatpush2.msra.mxu0 0.0
    %4483 = vmatprep.subr.mxu0 0.0
    %4484 = vmatpush2.msra.mxu0 0.0
    %4485 = vmatprep.subr.mxu0 0.0
    %4486 = vmatpush2.msra.mxu0 0.0
    %4487 = vmatprep.subr.mxu0 0.0
    %4488 = vmatpush2.msra.mxu0 0.0
    %4489 = vmatprep.subr.mxu0 0.0
    %4490 = vmatpush2.msra.mxu0 0.0
    %4491 = vmatprep.subr.mxu0 0.0
    %4492 = vmatpush2.msra.mxu0 0.0
    %4493 = vmatprep.subr.mxu0 0.0
    %4494 = vmatpush2.msra.mxu0 0.0
    %4495 = vmatprep.subr.mxu0 0.0
    %4496 = vmatpush2.msra.mxu0 0.0
    %4497 = vmatprep.subr.mxu0 0.0
    %4498 = vmatpush2.msra.mxu0 0.0
    %4499 = vmatprep.subr.mxu0 0.0
    %4500 = vmatpush2.msra.mxu0 0.0
    %4501 = vmatprep.subr.mxu0 0.0
    %4502 = vmatpush2.msra.mxu0 0.0
    %4503 = vmatprep.mubr.f32.mxu0 0.0
    %4504 = vmatmul.mubr.f32.gmra.mxu0 %v4211
    %v4505 = vpop.f32.mrf.mxu0
    %v4506 = vadd.f32 0.0, %v4505
    %v4507 = vpop.f32.mrf.mxu0
    %4508 = vmatprep.mubr.f32.mxu0 0.0
    %4509 = vmatmul.mubr.f32.gmra.mxu0 %v4213
    %v4510 = vpop.f32.mrf.mxu0
    %v4511 = vadd.f32 0.0, %v4510
    %v4512 = vpop.f32.mrf.mxu0
    %4513 = vmatprep.mubr.f32.mxu0 0.0
    %4514 = vmatmul.mubr.f32.gmra.mxu0 %v4215
    %v4515 = vpop.f32.mrf.mxu0
    %v4516 = vadd.f32 0.0, %v4515
    %v4517 = vpop.f32.mrf.mxu0
    %4518 = vmatprep.mubr.f32.mxu0 0.0
    %4519 = vmatmul.mubr.f32.gmra.mxu0 %v4217
    %v4520 = vpop.f32.mrf.mxu0
    %v4521 = vadd.f32 0.0, %v4520
    %v4522 = vpop.f32.mrf.mxu0
    %4523 = vdwg.mxu0
    %v4524 = vrcp.pop %v4506
    %v4525 = vmul.f32 1.0, %v4524
    %v4526 = vrcp.pop %v4511
    %v4527 = vmul.f32 1.0, %v4526
    %v4528 = vrcp.pop %v4516
    %v4529 = vmul.f32 1.0, %v4528
    %v4530 = vrcp.pop %v4521
    %v4531 = vmul.f32 1.0, %v4530
    %v4533 = vsel %vm767, %v4525, 0
    %v4536 = vsel %vm767, %v4527, 0
    %v4539 = vsel %vm767, %v4529, 0
    %v4542 = vsel %vm767, %v4531, 0
    %4544 = vmatprep.subr.mxu0 0.0
    %4545 = vmatpush1.msra.mxu0 0.0
    %4546 = vmatprep.subr.mxu0 0.0
    %4547 = vmatpush1.msra.mxu0 0.0
    %4548 = vmatprep.subr.mxu0 0.0
    %4549 = vmatpush1.msra.mxu0 0.0
    %4550 = vmatprep.subr.mxu0 0.0
    %4551 = vmatpush1.msra.mxu0 0.0
    %4552 = vmatprep.subr.mxu0 0.0
    %4553 = vmatpush1.msra.mxu0 0.0
    %4554 = vmatprep.subr.mxu0 0.0
    %4555 = vmatpush1.msra.mxu0 0.0
    %4556 = vmatprep.subr.mxu0 0.0
    %4557 = vmatpush1.msra.mxu0 0.0
    %4558 = vmatprep.subr.mxu0 0.0
    %4559 = vmatpush1.msra.mxu0 0.0
    %4560 = vmatprep.subr.mxu0 0.0
    %4561 = vmatpush1.msra.mxu0 0.0
    %4562 = vmatprep.subr.mxu0 0.0
    %4563 = vmatpush1.msra.mxu0 0.0
    %4564 = vmatprep.subr.mxu0 0.0
    %4565 = vmatpush1.msra.mxu0 0.0
    %4566 = vmatprep.subr.mxu0 0.0
    %4567 = vmatpush1.msra.mxu0 0.0
    %4568 = vmatprep.subr.mxu0 0.0
    %4569 = vmatpush1.msra.mxu0 0.0
    %4570 = vmatprep.subr.mxu0 0.0
    %4571 = vmatpush1.msra.mxu0 0.0
    %4572 = vmatprep.subr.mxu0 0.0
    %4573 = vmatpush1.msra.mxu0 0.0
    %4574 = vmatprep.subr.mxu0 0.0
    %4575 = vmatpush1.msra.mxu0 %v782
    %4576 = vmatprep.subr.mxu0 0.0
    %4577 = vmatpush2.msra.mxu0 0.0
    %4578 = vmatprep.subr.mxu0 0.0
    %4579 = vmatpush2.msra.mxu0 0.0
    %4580 = vmatprep.subr.mxu0 0.0
    %4581 = vmatpush2.msra.mxu0 0.0
    %4582 = vmatprep.subr.mxu0 0.0
    %4583 = vmatpush2.msra.mxu0 0.0
    %4584 = vmatprep.subr.mxu0 0.0
    %4585 = vmatpush2.msra.mxu0 0.0
    %4586 = vmatprep.subr.mxu0 0.0
    %4587 = vmatpush2.msra.mxu0 0.0
    %4588 = vmatprep.subr.mxu0 0.0
    %4589 = vmatpush2.msra.mxu0 0.0
    %4590 = vmatprep.subr.mxu0 0.0
    %4591 = vmatpush2.msra.mxu0 0.0
    %4592 = vmatprep.subr.mxu0 0.0
    %4593 = vmatpush2.msra.mxu0 0.0
    %4594 = vmatprep.subr.mxu0 0.0
    %4595 = vmatpush2.msra.mxu0 0.0
    %4596 = vmatprep.subr.mxu0 0.0
    %4597 = vmatpush2.msra.mxu0 0.0
    %4598 = vmatprep.subr.mxu0 0.0
    %4599 = vmatpush2.msra.mxu0 0.0
    %4600 = vmatprep.subr.mxu0 0.0
    %4601 = vmatpush2.msra.mxu0 0.0
    %4602 = vmatprep.subr.mxu0 0.0
    %4603 = vmatpush2.msra.mxu0 0.0
    %4604 = vmatprep.subr.mxu0 0.0
    %4605 = vmatpush2.msra.mxu0 0.0
    %4606 = vmatprep.subr.mxu0 0.0
    %4607 = vmatpush2.msra.mxu0 0.0
    %4608 = vmatprep.mubr.f32.mxu0 0.0
    %4609 = vmatmul.mubr.f32.gmra.mxu0 %v4533
    %v4610 = vpop.f32.mrf.mxu0
    %v4611 = vadd.f32 0.0, %v4610
    %v4612 = vpop.f32.mrf.mxu0
    %4613 = vmatprep.mubr.f32.mxu0 0.0
    %4614 = vmatmul.mubr.f32.gmra.mxu0 %v4536
    %v4615 = vpop.f32.mrf.mxu0
    %v4616 = vadd.f32 0.0, %v4615
    %v4617 = vpop.f32.mrf.mxu0
    %4618 = vmatprep.mubr.f32.mxu0 0.0
    %4619 = vmatmul.mubr.f32.gmra.mxu0 %v4539
    %v4620 = vpop.f32.mrf.mxu0
    %v4621 = vadd.f32 0.0, %v4620
    %v4622 = vpop.f32.mrf.mxu0
    %4623 = vmatprep.mubr.f32.mxu0 0.0
    %4624 = vmatmul.mubr.f32.gmra.mxu0 %v4542
    %v4625 = vpop.f32.mrf.mxu0
    %v4626 = vadd.f32 0.0, %v4625
    %v4627 = vpop.f32.mrf.mxu0
    %4628 = vdwg.mxu0
    %v4629 = vmul.f32 %v4421, %v4611
    %v4630 = vmul.f32 %v4426, %v4616
    %v4631 = vmul.f32 %v4431, %v4621
    %v4632 = vmul.f32 %v4436, %v4626
    %v4633 = vadd.f32 %v3881, %v4629
    %v4634 = vadd.f32 %v3882, %v4630
    %v4635 = vadd.f32 %v3883, %v4631
    %v4636 = vadd.f32 %v3884, %v4632
    %v4637 = vld [vmem:[%s6] sm:$0xff]
    %v4638 = vld [vmem:[%s6 + $0x8] sm:$0xff]
    %v4639 = vld [vmem:[%s7] sm:$0x1]
    %v4641 = vlaneseq
    %v4642 = vshrl.u32 %v4641, 7
    %v4643 = vsub.s32 0, %v4642
    %v4644 = vrot.slane %v4639, %v4643
    %v4647 = vsel %vm86, %v4633, 0
    %v4650 = vsel %vm86, %v4634, 0
    %v4653 = vsel %vm86, %v4635, 0
    %v4656 = vsel %vm86, %v4636, 0
    %4658 = vmatprep.subr.mxu0 0.0
    %4659 = vmatpush1.msra.mxu0 0.0
    %4660 = vmatprep.subr.mxu0 0.0
    %4661 = vmatpush1.msra.mxu0 0.0
    %4662 = vmatprep.subr.mxu0 0.0
    %4663 = vmatpush1.msra.mxu0 0.0
    %4664 = vmatprep.subr.mxu0 0.0
    %4665 = vmatpush1.msra.mxu0 0.0
    %4666 = vmatprep.subr.mxu0 0.0
    %4667 = vmatpush1.msra.mxu0 0.0
    %4668 = vmatprep.subr.mxu0 0.0
    %4669 = vmatpush1.msra.mxu0 0.0
    %4670 = vmatprep.subr.mxu0 0.0
    %4671 = vmatpush1.msra.mxu0 0.0
    %4672 = vmatprep.subr.mxu0 0.0
    %4673 = vmatpush1.msra.mxu0 0.0
    %4674 = vmatprep.subr.mxu0 0.0
    %4675 = vmatpush1.msra.mxu0 0.0
    %4676 = vmatprep.subr.mxu0 0.0
    %4677 = vmatpush1.msra.mxu0 0.0
    %4678 = vmatprep.subr.mxu0 0.0
    %4679 = vmatpush1.msra.mxu0 0.0
    %4680 = vmatprep.subr.mxu0 0.0
    %4681 = vmatpush1.msra.mxu0 0.0
    %4682 = vmatprep.subr.mxu0 0.0
    %4683 = vmatpush1.msra.mxu0 0.0
    %4684 = vmatprep.subr.mxu0 0.0
    %4685 = vmatpush1.msra.mxu0 0.0
    %4686 = vmatprep.subr.mxu0 0.0
    %4687 = vmatpush1.msra.mxu0 %v4638
    %4688 = vmatprep.subr.mxu0 0.0
    %4689 = vmatpush1.msra.mxu0 %v4637
    %4690 = vmatprep.subr.mxu0 0.0
    %4691 = vmatpush2.msra.mxu0 0.0
    %4692 = vmatprep.subr.mxu0 0.0
    %4693 = vmatpush2.msra.mxu0 0.0
    %4694 = vmatprep.subr.mxu0 0.0
    %4695 = vmatpush2.msra.mxu0 0.0
    %4696 = vmatprep.subr.mxu0 0.0
    %4697 = vmatpush2.msra.mxu0 0.0
    %4698 = vmatprep.subr.mxu0 0.0
    %4699 = vmatpush2.msra.mxu0 0.0
    %4700 = vmatprep.subr.mxu0 0.0
    %4701 = vmatpush2.msra.mxu0 0.0
    %4702 = vmatprep.subr.mxu0 0.0
    %4703 = vmatpush2.msra.mxu0 0.0
    %4704 = vmatprep.subr.mxu0 0.0
    %4705 = vmatpush2.msra.mxu0 0.0
    %4706 = vmatprep.subr.mxu0 0.0
    %4707 = vmatpush2.msra.mxu0 0.0
    %4708 = vmatprep.subr.mxu0 0.0
    %4709 = vmatpush2.msra.mxu0 0.0
    %4710 = vmatprep.subr.mxu0 0.0
    %4711 = vmatpush2.msra.mxu0 0.0
    %4712 = vmatprep.subr.mxu0 0.0
    %4713 = vmatpush2.msra.mxu0 0.0
    %4714 = vmatprep.subr.mxu0 0.0
    %4715 = vmatpush2.msra.mxu0 0.0
    %4716 = vmatprep.subr.mxu0 0.0
    %4717 = vmatpush2.msra.mxu0 0.0
    %4718 = vmatprep.subr.mxu0 0.0
    %4719 = vmatpush2.msra.mxu0 0.0
    %4720 = vmatprep.subr.mxu0 0.0
    %4721 = vmatpush2.msra.mxu0 0.0
    %4722 = vmatprep.mubr.f32.mxu0 0.0
    %4723 = vmatmul.mubr.f32.gmra.mxu0 %v4647
    %v4724 = vpop.f32.mrf.mxu0
    %v4725 = vadd.f32 %v4644, %v4724
    %v4726 = vpop.f32.mrf.mxu0
    %4727 = vmatprep.mubr.f32.mxu0 0.0
    %4728 = vmatmul.mubr.f32.gmra.mxu0 %v4650
    %v4729 = vpop.f32.mrf.mxu0
    %v4730 = vadd.f32 %v4644, %v4729
    %v4731 = vpop.f32.mrf.mxu0
    %4732 = vmatprep.mubr.f32.mxu0 0.0
    %4733 = vmatmul.mubr.f32.gmra.mxu0 %v4653
    %v4734 = vpop.f32.mrf.mxu0
    %v4735 = vadd.f32 %v4644, %v4734
    %v4736 = vpop.f32.mrf.mxu0
    %4737 = vmatprep.mubr.f32.mxu0 0.0
    %4738 = vmatmul.mubr.f32.gmra.mxu0 %v4656
    %v4739 = vpop.f32.mrf.mxu0
    %v4740 = vadd.f32 %v4644, %v4739
    %v4741 = vpop.f32.mrf.mxu0
    %4742 = vdwg.mxu0
    %4743 = vst [vmem:[#allocation7] sm:$0xff] %v4725
    %4744 = vst [vmem:[#allocation7 + $0x8] sm:$0xff] %v4730
    %4745 = vst [vmem:[#allocation7 + $0x10] sm:$0xff] %v4735
    %4746 = vst [vmem:[#allocation7 + $0x18] sm:$0xff] %v4740
    // Predicated region
    $region38: #{tpu_custom_call.1} parent=1 // pred_check
      _
    $region39: #{tpu_custom_call.1} parent=1 // pred_check_branch
      %4748 = sbr.rel (0) target = $region41
    $region40: #{tpu_custom_call.1} parent=1 // pred_region
      %s4750 = ssub.s32 512, 512
      %4751 = vsyncadd [#allocation6], %s4750
      %s4752 = sshll.u32 [#allocation7], 4
      %s4753 = int_to_ptr.vmem [resolvable:$true] %s4752
      %4758 = dma.vmem_to_hbm [thread:$0]  %s4753, 512, %s8, [#allocation6], 128, 128, 8
    $region41: #{tpu_custom_call.1} parent=1 // pred_fallthru
      _
    // Predicated region
    $region42: #{tpu_custom_call.1} parent=1 // pred_check
      _
    $region43: #{tpu_custom_call.1} parent=1 // pred_check_branch
      %4760 = sbr.rel (0) target = $region45
    $region44: #{tpu_custom_call.1} parent=1 // pred_region
      %4761 = dma.done [#allocation6], 512
    $region45: #{tpu_custom_call.1} parent=1 // pred_fallthru
      _
    %4762 = vsyncpa [#allocation5], 1
    %4763 = vsyncpa [#allocation6], 1

</llo_original>
